<compile_context>
chip_gen: v7x
topology: tpu7x:2x2x1
jax: 0.10.0
libtpu: 0.0.40
codegen_flags: <defaults>
</compile_context>

<pallas_src>
import functools

import jax
import jax.numpy as jnp
from jax.experimental import pallas as pl
from jax.experimental.pallas import tpu as pltpu

EPS = 1e-12  # torch.nn.functional.normalize default eps


def imagemlp_kernel(x_ref, w1_ref, s1_ref, b1_ref, w2_ref, b2_ref, o_ref, xn_ref,
                    *, n_splits, nk_per_split):
    c = pl.program_id(0)          # core-split index (H halves on v7x; size 1 otherwise)
    k = pl.program_id(1)          # hidden-chunk index within this split
    th = w1_ref.shape[1]          # static hidden-chunk width

    @pl.when(k == 0)
    def _init():
        x = x_ref[...]
        nrm = jnp.sqrt(jnp.sum(x * x, axis=1, keepdims=True))
        xn_ref[...] = x / jnp.maximum(nrm, EPS)        # normalize(X, p=2, dim=1)
        o_ref[...] = jnp.zeros_like(o_ref)             # output doubles as accumulator

    # bf16 in reduced-precision modes, f32 in the exact mode.
    compute_dtype = w2_ref.dtype

    # Slice the resident bias / per-channel dequant scale for this hidden chunk.
    start = pl.multiple_of((c * nk_per_split + k) * th, 128)
    b1_c = b1_ref[:, pl.ds(start, th)]
    s1_c = s1_ref[:, pl.ds(start, th)]

    # fc1 chunk: dequant cast rides the VPU, matmul accumulates in f32, then
    # per-output-channel scale + bias + ReLU (Dropout(0.3) is identity in eval).
    w1_c = w1_ref[...].astype(compute_dtype)
    acc1 = jnp.dot(xn_ref[...].astype(compute_dtype), w1_c,
                   preferred_element_type=jnp.float32)
    feat = jnp.maximum(acc1 * s1_c + b1_c, 0.0)

    # Partial contribution of this hidden chunk to `tohash`, accumulated in f32.
    o_ref[...] += jnp.dot(feat.astype(compute_dtype), w2_ref[...],
                          preferred_element_type=jnp.float32)

    if n_splits == 1:
        # Single-split path: finalize (bias + tanh + L2 normalize) in-kernel.
        @pl.when(k == pl.num_programs(1) - 1)
        def _finalize():
            out = jnp.tanh(o_ref[...] + b2_ref[...])
            nrm = jnp.sqrt(jnp.sum(out * out, axis=1, keepdims=True))
            o_ref[...] = out / jnp.maximum(nrm, EPS)   # normalize(out, p=2, dim=1)


def image_mlp_forward(x, w1, b1, w2, b2, *, weights_mode="int8", th=4096,
                      core_split=1, vmem_limit_bytes=32 << 20):
    """x: (B, Din) f32. w1: (Din, H). b1: (H,). w2: (H, L). b2: (L,).

    weights_mode:
      "int8" (default): W1 streamed as int8 with per-output-channel scales,
                        W2/activations bf16, f32 accumulation (fastest).
      "bf16":           W1/W2/activations bf16, f32 accumulation.
      "f32":            exact float32 path.
    core_split: split the H reduction into `core_split` independent partial
      sums along a leading "parallel" grid axis (use 2 on v7x megacore).
    """
    B, Din = x.shape
    H = w1.shape[1]
    L = w2.shape[1]
    S = int(core_split)
    th = min(th, H // S)
    assert H % (th * S) == 0 and th % 128 == 0, \
        "hidden chunk must tile H/core_split and be lane-aligned"
    nk_per = H // (th * S)

    if weights_mode == "int8":
        amax = jnp.max(jnp.abs(w1), axis=0, keepdims=True)          # (1, H)
        s1 = (jnp.maximum(amax, 1e-12) / 127.0).astype(jnp.float32)
        w1_k = jnp.clip(jnp.round(w1 / s1), -127.0, 127.0).astype(jnp.int8)
        w2_k = w2.astype(jnp.bfloat16)
    elif weights_mode == "bf16":
        s1 = jnp.ones((1, H), jnp.float32)
        w1_k = w1.astype(jnp.bfloat16)
        w2_k = w2.astype(jnp.bfloat16)
    elif weights_mode == "f32":
        s1 = jnp.ones((1, H), jnp.float32)
        w1_k = w1.astype(jnp.float32)
        w2_k = w2.astype(jnp.float32)
    else:
        raise ValueError(f"unknown weights_mode: {weights_mode}")

    b1_2d = b1.reshape(1, H).astype(jnp.float32)
    b2_2d = b2.reshape(1, L).astype(jnp.float32)

    kernel = functools.partial(imagemlp_kernel, n_splits=S, nk_per_split=nk_per)

    partial_out = pl.pallas_call(
        kernel,
        out_shape=jax.ShapeDtypeStruct((S, B, L), jnp.float32),
        grid_spec=pltpu.PrefetchScalarGridSpec(
            num_scalar_prefetch=0,
            grid=(S, nk_per),
            in_specs=[
                pl.BlockSpec((B, Din), lambda c, k: (0, 0)),              # x (resident)
                pl.BlockSpec((Din, th), lambda c, k: (0, c * nk_per + k)),  # W1 chunk
                pl.BlockSpec((1, H), lambda c, k: (0, 0)),                # dequant scales (resident)
                pl.BlockSpec((1, H), lambda c, k: (0, 0)),                # b1 (resident)
                pl.BlockSpec((th, L), lambda c, k: (c * nk_per + k, 0)),  # W2 chunk
                pl.BlockSpec((1, L), lambda c, k: (0, 0)),                # b2 (resident)
            ],
            out_specs=pl.BlockSpec((None, B, L), lambda c, k: (c, 0, 0)),
            scratch_shapes=[
                pltpu.VMEM((B, Din), jnp.float32),                        # normalized input
            ],
        ),
        compiler_params=pltpu.CompilerParams(
            dimension_semantics=("parallel", "arbitrary"),
            vmem_limit_bytes=vmem_limit_bytes,
        ),
    )(x, w1_k, s1, b1_2d, w2_k, b2_2d)

    if S == 1:
        return partial_out.reshape(B, L)          # already finalized in-kernel

    # Tiny combine epilogue for the core-split path: (S,B,L) -> (B,L).
    hid = jnp.sum(partial_out, axis=0) + b2_2d
    out = jnp.tanh(hid)
    nrm = jnp.sqrt(jnp.sum(out * out, axis=1, keepdims=True))
    return out / jnp.maximum(nrm, EPS)


def image_mlp_reference(x, w1, b1, w2, b2):
    def l2n(v):
        n = jnp.sqrt(jnp.sum(v * v, axis=1, keepdims=True))
        return v / jnp.maximum(n, EPS)
    xn = l2n(x)
    feat = jnp.maximum(xn @ w1 + b1, 0.0)
    out = jnp.tanh(feat @ w2 + b2)
    return l2n(out)


if __name__ == "__main__":
    # Small but module-consistent shapes: fc1 hidden dim stays 8192 as in __init__.
    B, INPUT_DIM, HIDDEN, HASH_LENS = 8, 256, 8192, 64

    key = jax.random.PRNGKey(0)
    kx, k1, k2, k3, k4 = jax.random.split(key, 5)
    x = jax.random.normal(kx, (B, INPUT_DIM), dtype=jnp.float32)
    # Deterministic synthetic parameters (scaled like nn.Linear's uniform init).
    w1 = jax.random.normal(k1, (INPUT_DIM, HIDDEN), dtype=jnp.float32) * (1.0 / INPUT_DIM ** 0.5)
    b1 = jax.random.normal(k2, (HIDDEN,), dtype=jnp.float32) * (1.0 / INPUT_DIM ** 0.5)
    w2 = jax.random.normal(k3, (HIDDEN, HASH_LENS), dtype=jnp.float32) * (1.0 / HIDDEN ** 0.5)
    b2 = jax.random.normal(k4, (HASH_LENS,), dtype=jnp.float32) * (1.0 / HIDDEN ** 0.5)

    ref = image_mlp_reference(x, w1, b1, w2, b2)

    # Exact f32 path: strict check.
    out_f32 = jax.block_until_ready(
        image_mlp_forward(x, w1, b1, w2, b2, weights_mode="f32"))
    assert out_f32.shape == (B, HASH_LENS)
    assert jnp.allclose(out_f32, ref, atol=2e-5, rtol=2e-5), "mismatch (f32)"

    # f32 path with the core-split reduction (perf win on v7x, correct everywhere).
    out_split = jax.block_until_ready(
        image_mlp_forward(x, w1, b1, w2, b2, weights_mode="f32", core_split=2))
    assert jnp.allclose(out_split, ref, atol=2e-5, rtol=2e-5), "mismatch (f32, core_split=2)"

    # bf16 weight-streaming path: looser tolerance by design.
    out_bf16 = jax.block_until_ready(
        image_mlp_forward(x, w1, b1, w2, b2, weights_mode="bf16"))
    assert jnp.allclose(out_bf16, ref, atol=2e-2, rtol=2e-2), "mismatch (bf16)"

    # Default path: int8 W1 + per-channel dequant, bf16 W2/activations.
    out_int8 = jax.block_until_ready(image_mlp_forward(x, w1, b1, w2, b2))
    assert out_int8.shape == (B, HASH_LENS)
    assert jnp.allclose(out_int8, ref, atol=4e-2, rtol=4e-2), "mismatch (int8)"

    print("KERNEL_OK")
</pallas_src>

<mosaic_0001>
module attributes {stable_mosaic.version = 11 : i64} {
  func.func @imagemlp_kernel(%arg0: i32, %arg1: i32, %arg2: memref<8x256xf32, #tpu.memory_space<vmem>>, %arg3: memref<256x4096xf32, #tpu.memory_space<vmem>>, %arg4: memref<1x8192xf32, #tpu.memory_space<vmem>>, %arg5: memref<1x8192xf32, #tpu.memory_space<vmem>>, %arg6: memref<4096x64xf32, #tpu.memory_space<vmem>>, %arg7: memref<1x64xf32, #tpu.memory_space<vmem>>, %arg8: memref<1x8x64xf32, #tpu.memory_space<vmem>>, %arg9: memref<8x256xf32, #tpu.memory_space<vmem>>) attributes {dimension_semantics = [#tpu.dimension_semantics<parallel>, #tpu.dimension_semantics<arbitrary>], iteration_bounds = array<i64: 1, 2>, scalar_prefetch = 0 : i64, scratch_operands = 1 : i64, tpu.core_type = #tpu.core_type<tc>, window_params = [{pipeline_mode = #tpu.pipeline_mode<synchronous>, transform_indices = @transform_0, window_bounds = array<i64: 8, 256>}, {transform_indices = @transform_1, window_bounds = array<i64: 256, 4096>}, {pipeline_mode = #tpu.pipeline_mode<synchronous>, transform_indices = @transform_2, window_bounds = array<i64: 1, 8192>}, {pipeline_mode = #tpu.pipeline_mode<synchronous>, transform_indices = @transform_3, window_bounds = array<i64: 1, 8192>}, {transform_indices = @transform_4, window_bounds = array<i64: 4096, 64>}, {pipeline_mode = #tpu.pipeline_mode<synchronous>, transform_indices = @transform_5, window_bounds = array<i64: 1, 64>}, {transform_indices = @transform_6, window_bounds = array<i64: 1, 8, 64>}]} {
    %c0_i32 = arith.constant 0 : i32
    %0 = arith.cmpi eq, %arg1, %c0_i32 : i32
    %1 = arith.extui %0 : i1 to i32
    %c0_i32_0 = arith.constant 0 : i32
    %2 = arith.cmpi ne, %1, %c0_i32_0 : i32
    scf.if %2 {
      %c0_17 = arith.constant 0 : index
      %c0_18 = arith.constant 0 : index
      %31 = vector.load %arg2[%c0_17, %c0_18] : memref<8x256xf32, #tpu.memory_space<vmem>>, vector<8x256xf32>
      %32 = arith.mulf %31, %31 : vector<8x256xf32>
      %cst_19 = arith.constant dense<0.000000e+00> : vector<8xf32>
      %33 = vector.multi_reduction <add>, %32, %cst_19 [1] : vector<8x256xf32> to vector<8xf32>
      %34 = vector.shape_cast %33 : vector<8xf32> to vector<8x1xf32>
      %35 = math.sqrt %34 : vector<8x1xf32>
      %cst_20 = arith.constant 9.99999996E-13 : f32
      %36 = vector.broadcast %cst_20 : f32 to vector<8x1xf32>
      %37 = arith.maximumf %35, %36 : vector<8x1xf32>
      %38 = vector.broadcast %37 : vector<8x1xf32> to vector<8x256xf32>
      %39 = arith.divf %31, %38 : vector<8x256xf32>
      %c0_21 = arith.constant 0 : index
      %c0_22 = arith.constant 0 : index
      %40 = vector.load %arg9[%c0_21, %c0_22] : memref<8x256xf32, #tpu.memory_space<vmem>>, vector<8x256xf32>
      tpu.vector_store %arg9[%c0_21, %c0_22], %39 {strides = array<i32>} : memref<8x256xf32, #tpu.memory_space<vmem>>, vector<8x256xf32>,
      %cst_23 = arith.constant 0.000000e+00 : f32
      %41 = vector.broadcast %cst_23 : f32 to vector<8x64xf32>
      %c0_24 = arith.constant 0 : index
      %c0_25 = arith.constant 0 : index
      %c0_26 = arith.constant 0 : index
      %42 = vector.load %arg8[%c0_24, %c0_25, %c0_26] : memref<1x8x64xf32, #tpu.memory_space<vmem>>, vector<1x8x64xf32>
      %43 = vector.shape_cast %42 : vector<1x8x64xf32> to vector<8x64xf32>
      %44 = vector.shape_cast %41 : vector<8x64xf32> to vector<1x8x64xf32>
      tpu.vector_store %arg8[%c0_24, %c0_25, %c0_26], %44 {strides = array<i32>} : memref<1x8x64xf32, #tpu.memory_space<vmem>>, vector<1x8x64xf32>,
    } else {
    }
    %c2_i32 = arith.constant 2 : i32
    %3 = arith.muli %arg0, %c2_i32 : i32
    %4 = arith.addi %3, %arg1 : i32
    %c4096_i32 = arith.constant 4096 : i32
    %5 = arith.muli %4, %c4096_i32 : i32
    %6 = tpu.assume_multiple %5, 128 : i32
    %c0 = arith.constant 0 : index
    %7 = arith.index_cast %6 : i32 to index
    %8 = vector.load %arg5[%c0, %7] : memref<1x8192xf32, #tpu.memory_space<vmem>>, vector<1x4096xf32>
    %c0_1 = arith.constant 0 : index
    %9 = arith.index_cast %6 : i32 to index
    %10 = vector.load %arg4[%c0_1, %9] : memref<1x8192xf32, #tpu.memory_space<vmem>>, vector<1x4096xf32>
    %c0_2 = arith.constant 0 : index
    %c0_3 = arith.constant 0 : index
    %11 = vector.load %arg3[%c0_2, %c0_3] : memref<256x4096xf32, #tpu.memory_space<vmem>>, vector<256x4096xf32>
    %c0_4 = arith.constant 0 : index
    %c0_5 = arith.constant 0 : index
    %12 = vector.load %arg9[%c0_4, %c0_5] : memref<8x256xf32, #tpu.memory_space<vmem>>, vector<8x256xf32>
    %cst = arith.constant dense<0.000000e+00> : vector<8x4096xf32>
    %13 = tpu.matmul %12, %11, %cst {dimension_numbers = #tpu.dot_dimension_numbers<[1], [0], [0], [1], [0, 0, 1, 1], [], []>} : vector<8x256xf32>, vector<256x4096xf32>, vector<8x4096xf32> -> vector<8x4096xf32>
    %14 = vector.broadcast %10 : vector<1x4096xf32> to vector<8x4096xf32>
    %15 = arith.mulf %13, %14 : vector<8x4096xf32>
    %16 = vector.broadcast %8 : vector<1x4096xf32> to vector<8x4096xf32>
    %17 = arith.addf %15, %16 : vector<8x4096xf32>
    %cst_6 = arith.constant 0.000000e+00 : f32
    %18 = vector.broadcast %cst_6 : f32 to vector<8x4096xf32>
    %19 = arith.maximumf %17, %18 : vector<8x4096xf32>
    %c0_7 = arith.constant 0 : index
    %c0_8 = arith.constant 0 : index
    %c0_9 = arith.constant 0 : index
    %20 = vector.load %arg8[%c0_7, %c0_8, %c0_9] : memref<1x8x64xf32, #tpu.memory_space<vmem>>, vector<1x8x64xf32>
    %21 = vector.shape_cast %20 : vector<1x8x64xf32> to vector<8x64xf32>
    %c0_10 = arith.constant 0 : index
    %c0_11 = arith.constant 0 : index
    %22 = vector.load %arg6[%c0_10, %c0_11] : memref<4096x64xf32, #tpu.memory_space<vmem>>, vector<4096x64xf32>
    %cst_12 = arith.constant dense<0.000000e+00> : vector<8x64xf32>
    %23 = tpu.matmul %19, %22, %cst_12 {dimension_numbers = #tpu.dot_dimension_numbers<[1], [0], [0], [1], [0, 0, 1, 1], [], []>} : vector<8x4096xf32>, vector<4096x64xf32>, vector<8x64xf32> -> vector<8x64xf32>
    %24 = arith.addf %21, %23 : vector<8x64xf32>
    %c0_13 = arith.constant 0 : index
    %c0_14 = arith.constant 0 : index
    %c0_15 = arith.constant 0 : index
    %25 = vector.load %arg8[%c0_13, %c0_14, %c0_15] : memref<1x8x64xf32, #tpu.memory_space<vmem>>, vector<1x8x64xf32>
    %26 = vector.shape_cast %25 : vector<1x8x64xf32> to vector<8x64xf32>
    %27 = vector.shape_cast %24 : vector<8x64xf32> to vector<1x8x64xf32>
    tpu.vector_store %arg8[%c0_13, %c0_14, %c0_15], %27 {strides = array<i32>} : memref<1x8x64xf32, #tpu.memory_space<vmem>>, vector<1x8x64xf32>,
    %c1_i32 = arith.constant 1 : i32
    %28 = arith.cmpi eq, %arg1, %c1_i32 : i32
    %29 = arith.extui %28 : i1 to i32
    %c0_i32_16 = arith.constant 0 : i32
    %30 = arith.cmpi ne, %29, %c0_i32_16 : i32
    scf.if %30 {
      %c0_17 = arith.constant 0 : index
      %c0_18 = arith.constant 0 : index
      %c0_19 = arith.constant 0 : index
      %31 = vector.load %arg8[%c0_17, %c0_18, %c0_19] : memref<1x8x64xf32, #tpu.memory_space<vmem>>, vector<1x8x64xf32>
      %32 = vector.shape_cast %31 : vector<1x8x64xf32> to vector<8x64xf32>
      %c0_20 = arith.constant 0 : index
      %c0_21 = arith.constant 0 : index
      %33 = vector.load %arg7[%c0_20, %c0_21] : memref<1x64xf32, #tpu.memory_space<vmem>>, vector<1x64xf32>
      %34 = vector.broadcast %33 : vector<1x64xf32> to vector<8x64xf32>
      %35 = arith.addf %32, %34 : vector<8x64xf32>
      %36 = math.tanh %35 : vector<8x64xf32>
      %37 = arith.mulf %36, %36 : vector<8x64xf32>
      %cst_22 = arith.constant dense<0.000000e+00> : vector<8xf32>
      %38 = vector.multi_reduction <add>, %37, %cst_22 [1] : vector<8x64xf32> to vector<8xf32>
      %39 = vector.shape_cast %38 : vector<8xf32> to vector<8x1xf32>
      %40 = math.sqrt %39 : vector<8x1xf32>
      %cst_23 = arith.constant 9.99999996E-13 : f32
      %41 = vector.broadcast %cst_23 : f32 to vector<8x1xf32>
      %42 = arith.maximumf %40, %41 : vector<8x1xf32>
      %43 = vector.broadcast %42 : vector<8x1xf32> to vector<8x64xf32>
      %44 = arith.divf %36, %43 : vector<8x64xf32>
      %c0_24 = arith.constant 0 : index
      %c0_25 = arith.constant 0 : index
      %c0_26 = arith.constant 0 : index
      %45 = vector.load %arg8[%c0_24, %c0_25, %c0_26] : memref<1x8x64xf32, #tpu.memory_space<vmem>>, vector<1x8x64xf32>
      %46 = vector.shape_cast %45 : vector<1x8x64xf32> to vector<8x64xf32>
      %47 = vector.shape_cast %44 : vector<8x64xf32> to vector<1x8x64xf32>
      tpu.vector_store %arg8[%c0_24, %c0_25, %c0_26], %47 {strides = array<i32>} : memref<1x8x64xf32, #tpu.memory_space<vmem>>, vector<1x8x64xf32>,
    } else {
    }
    return
  }
  func.func @transform_0(%arg0: i32, %arg1: i32) -> (i32, i32) {
    %c0_i32 = arith.constant 0 : i32
    %c0_i32_0 = arith.constant 0 : i32
    %c0_i32_1 = arith.constant 0 : i32
    return %c0_i32, %c0_i32_0 : i32, i32
  }
  func.func @transform_1(%arg0: i32, %arg1: i32) -> (i32, i32) {
    %c2_i32 = arith.constant 2 : i32
    %0 = arith.muli %arg0, %c2_i32 : i32
    %1 = arith.addi %0, %arg1 : i32
    %c0_i32 = arith.constant 0 : i32
    %c0_i32_0 = arith.constant 0 : i32
    return %c0_i32, %1 : i32, i32
  }
  func.func @transform_2(%arg0: i32, %arg1: i32) -> (i32, i32) {
    %c0_i32 = arith.constant 0 : i32
    %c0_i32_0 = arith.constant 0 : i32
    %c0_i32_1 = arith.constant 0 : i32
    return %c0_i32, %c0_i32_0 : i32, i32
  }
  func.func @transform_3(%arg0: i32, %arg1: i32) -> (i32, i32) {
    %c0_i32 = arith.constant 0 : i32
    %c0_i32_0 = arith.constant 0 : i32
    %c0_i32_1 = arith.constant 0 : i32
    return %c0_i32, %c0_i32_0 : i32, i32
  }
  func.func @transform_4(%arg0: i32, %arg1: i32) -> (i32, i32) {
    %c2_i32 = arith.constant 2 : i32
    %0 = arith.muli %arg0, %c2_i32 : i32
    %1 = arith.addi %0, %arg1 : i32
    %c0_i32 = arith.constant 0 : i32
    %c0_i32_0 = arith.constant 0 : i32
    return %1, %c0_i32 : i32, i32
  }
  func.func @transform_5(%arg0: i32, %arg1: i32) -> (i32, i32) {
    %c0_i32 = arith.constant 0 : i32
    %c0_i32_0 = arith.constant 0 : i32
    %c0_i32_1 = arith.constant 0 : i32
    return %c0_i32, %c0_i32_0 : i32, i32
  }
  func.func @transform_6(%arg0: i32, %arg1: i32) -> (i32, i32, i32) {
    %c0_i32 = arith.constant 0 : i32
    %c0_i32_0 = arith.constant 0 : i32
    %c0_i32_1 = arith.constant 0 : i32
    return %arg0, %c0_i32, %c0_i32_0 : i32, i32, i32
  }
}

</mosaic_0001>

<llo_original>
// kernel: tpu_custom_call.1
$region0: #{tpu_custom_call.1}
  #allocation0 [shape = 'u32[]', space=smem, size = 0x4, offset = 0x4, fixed_abs, tag = 'smem constant byte address 0x4 - core index']
  #allocation1 [shape = 'u32[144,128]{1,0:T(1,128)}', space=vmem, size = 0x12000, scoped, tag = 'internal scratch']
  #allocation2 [shape = 'f32[8,256]{1,0:T(8,128)}', space=vmem, size = 0x2000, scoped, tag = 'scratch operand']
  %s0 = inlined_call_operand.vmem [shape: f32[8,256], index: 0, kind: input, shape index: {}]
  %s1 = inlined_call_operand.hbm [shape: f32[256,8192], index: 1, kind: input, shape index: {}]
  %s2 = inlined_call_operand.vmem [shape: f32[1,8192], index: 2, kind: input, shape index: {}]
  %s3 = inlined_call_operand.vmem [shape: f32[1,8192], index: 3, kind: input, shape index: {}]
  %s4 = inlined_call_operand.vmem [shape: f32[8192,64], index: 4, kind: input, shape index: {}]
  %s5 = inlined_call_operand.vmem [shape: f32[1,64], index: 5, kind: input, shape index: {}]
  %s6 = inlined_call_operand.hbm [shape: f32[1,8,64], index: 6, kind: output, shape index: {}]
  %s7 = sld [smem:[#allocation0]]
  $region69: #{tpu_custom_call.1} parent=0
    _
  %s9 = ssub.s32 1, %s7
  %s10 = scalar_select 0, %s9, %s7
  $region1: #{tpu_custom_call.1} parent=0
    #allocation3 [shape = 'u8[8388608]{0}', space=vmem, size = 0x800000, scoped, tag = 'input window, operand 1']
    #allocation4 [shape = 's32[2]{0}', space=sflag, size = 0x8, scoped, tag = 'scoped memory for tpu_custom_call.1']
    #allocation5 [shape = 's32[2]{0}', space=sflag, size = 0x8, scoped, tag = 'scoped memory for tpu_custom_call.1']
    #allocation6 [shape = 'u8[4096]{0}', space=vmem, size = 0x1000, scoped, tag = 'output window, operand 0, single buffered']
    %11 = vsyncpa [#allocation4], 0
    %s12 = scalar_lea.sflag [#allocation4], 1
    %13 = vsyncpa %s12, 0
    %14 = vsyncpa [#allocation5], 0
    loop: start=0, step=1, limit=4
    $region2: #{tpu_custom_call.1} parent=1 // loop_pre_header
      _
    $region3: #{tpu_custom_call.1} parent=1 // loop_header
      %s16 = sphi 0, %s20
      %p17 = scmp.ge.s32.totalorder %s16, 4
      %s23 = sphi 0, %s35
      %s24 = sphi 0, %s31
      %s25 = sphi 0, %s23
      %s26 = sphi 0, %s24
      %s27 = sphi 0, %s25
      %s28 = sphi 0, %s26
      %s36 = sphi 0, %s36
      %s38 = sphi 0, %s36
      %s39 = sphi 0, %s38
      %s53 = sphi 0, %s39
      %s63 = sphi 0, %s65
      %s66 = sphi 0, %s63
      %s67 = sphi 0, %s66
      %s83 = sphi 0, %s67
      %s87 = sphi 0, %s87
      %s89 = sphi 0, %s87
      %s90 = sphi 0, %s89
      %s104 = sphi 0, %s90
      %s108 = sphi 0, %s108
      %s110 = sphi 0, %s108
      %s111 = sphi 0, %s110
      %s125 = sphi 0, %s111
      %s135 = sphi 0, %s137
      %s138 = sphi 0, %s135
      %s139 = sphi 0, %s138
      %s155 = sphi 0, %s139
      %s159 = sphi 0, %s159
      %s161 = sphi 0, %s159
      %s162 = sphi 0, %s161
      %s176 = sphi 0, %s162
      %s182 = sphi 0, %s184
      %s185 = sphi 0, %s182
      %s186 = sphi 0, %s185
      %s202 = sphi 0, %s186
    $region4: #{tpu_custom_call.1} parent=1 // loop_header_branch
      %19 = sbr.rel (%p17) target = $region8
    $region5: #{tpu_custom_call.1} parent=1 // loop_body
      %s21 = ssub.s32 %s16, 1
      %s22 = ssub.s32 %s16, 2
      %s29 = sadd.s32 1, %s24
      %p30 = scmp.ge.s32.totalorder %s29, 2
      %s31 = scalar_select %p30, 0, %s29
      %s32 = sadd.s32 1, %s23
      %s33 = scalar_select %p30, %s32, %s23
      %p34 = scmp.ge.s32.totalorder %s33, 1
      %s35 = scalar_select %p34, 0, %s33
      %s37 = sadd.s32 %s36, 1
      %p40 = scmp.eq.s32.totalorder %s16, 1
      %p41 = scmp.ne.s32.totalorder %s36, %s38
      %p42 = scmp.eq.s32.totalorder %s16, 0
      %p43 = por %p41, %p42
      %p44 = scmp.ne.s32.totalorder %s36, %s38
      %p45 = scmp.eq.s32.totalorder %s21, 1
      %p46 = por %p44, %p45
      %p47 = scmp.ne.s32.totalorder %s38, %s39
      %p48 = scmp.eq.s32.totalorder %s21, 0
      %p49 = por %p47, %p48
      %p50 = scmp.ne.s32.totalorder %s38, %s39
      %p51 = scmp.eq.s32.totalorder %s22, 1
      %p52 = por %p50, %p51
      %p54 = scmp.ne.s32.totalorder %s39, %s53
      %p55 = scmp.eq.s32.totalorder %s22, 0
      %p56 = por %p54, %p55
      %s57 = smul.u32 %s23, 2
      %s58 = sadd.s32 %s57, %s24
      %s59 = smul.u32 %s35, 2
      %s60 = sadd.s32 %s59, %s31
      %s61 = ssub.s32 %s58, %s60
      %p62 = scmp.eq.s32.totalorder %s61, 0
      %s64 = sadd.s32 %s63, 1
      %s65 = scalar_select %p62, %s63, %s64
      %p68 = pneg %p62
      %p69 = scmp.eq.s32.totalorder %s16, 1
      %p70 = por %p68, %p69
      %p71 = scmp.ne.s32.totalorder %s63, %s66
      %p72 = scmp.eq.s32.totalorder %s16, 0
      %p73 = por %p71, %p72
      %p74 = scmp.ne.s32.totalorder %s63, %s66
      %p75 = scmp.eq.s32.totalorder %s21, 1
      %p76 = por %p74, %p75
      %p77 = scmp.ne.s32.totalorder %s66, %s67
      %p78 = scmp.eq.s32.totalorder %s21, 0
      %p79 = por %p77, %p78
      %p80 = scmp.ne.s32.totalorder %s66, %s67
      %p81 = scmp.eq.s32.totalorder %s22, 1
      %p82 = por %p80, %p81
      %p84 = scmp.ne.s32.totalorder %s67, %s83
      %p85 = scmp.eq.s32.totalorder %s22, 0
      %p86 = por %p84, %p85
      %s88 = sadd.s32 %s87, 1
      %p91 = scmp.eq.s32.totalorder %s16, 1
      %p92 = scmp.ne.s32.totalorder %s87, %s89
      %p93 = scmp.eq.s32.totalorder %s16, 0
      %p94 = por %p92, %p93
      %p95 = scmp.ne.s32.totalorder %s87, %s89
      %p96 = scmp.eq.s32.totalorder %s21, 1
      %p97 = por %p95, %p96
      %p98 = scmp.ne.s32.totalorder %s89, %s90
      %p99 = scmp.eq.s32.totalorder %s21, 0
      %p100 = por %p98, %p99
      %p101 = scmp.ne.s32.totalorder %s89, %s90
      %p102 = scmp.eq.s32.totalorder %s22, 1
      %p103 = por %p101, %p102
      %p105 = scmp.ne.s32.totalorder %s90, %s104
      %p106 = scmp.eq.s32.totalorder %s22, 0
      %p107 = por %p105, %p106
      %s109 = sadd.s32 %s108, 1
      %p112 = scmp.eq.s32.totalorder %s16, 1
      %p113 = scmp.ne.s32.totalorder %s108, %s110
      %p114 = scmp.eq.s32.totalorder %s16, 0
      %p115 = por %p113, %p114
      %p116 = scmp.ne.s32.totalorder %s108, %s110
      %p117 = scmp.eq.s32.totalorder %s21, 1
      %p118 = por %p116, %p117
      %p119 = scmp.ne.s32.totalorder %s110, %s111
      %p120 = scmp.eq.s32.totalorder %s21, 0
      %p121 = por %p119, %p120
      %p122 = scmp.ne.s32.totalorder %s110, %s111
      %p123 = scmp.eq.s32.totalorder %s22, 1
      %p124 = por %p122, %p123
      %p126 = scmp.ne.s32.totalorder %s111, %s125
      %p127 = scmp.eq.s32.totalorder %s22, 0
      %p128 = por %p126, %p127
      %s129 = smul.u32 %s23, 2
      %s130 = sadd.s32 %s129, %s24
      %s131 = smul.u32 %s35, 2
      %s132 = sadd.s32 %s131, %s31
      %s133 = ssub.s32 %s130, %s132
      %p134 = scmp.eq.s32.totalorder %s133, 0
      %s136 = sadd.s32 %s135, 1
      %s137 = scalar_select %p134, %s135, %s136
      %p140 = pneg %p134
      %p141 = scmp.eq.s32.totalorder %s16, 1
      %p142 = por %p140, %p141
      %p143 = scmp.ne.s32.totalorder %s135, %s138
      %p144 = scmp.eq.s32.totalorder %s16, 0
      %p145 = por %p143, %p144
      %p146 = scmp.ne.s32.totalorder %s135, %s138
      %p147 = scmp.eq.s32.totalorder %s21, 1
      %p148 = por %p146, %p147
      %p149 = scmp.ne.s32.totalorder %s138, %s139
      %p150 = scmp.eq.s32.totalorder %s21, 0
      %p151 = por %p149, %p150
      %p152 = scmp.ne.s32.totalorder %s138, %s139
      %p153 = scmp.eq.s32.totalorder %s22, 1
      %p154 = por %p152, %p153
      %p156 = scmp.ne.s32.totalorder %s139, %s155
      %p157 = scmp.eq.s32.totalorder %s22, 0
      %p158 = por %p156, %p157
      %s160 = sadd.s32 %s159, 1
      %p163 = scmp.eq.s32.totalorder %s16, 1
      %p164 = scmp.ne.s32.totalorder %s159, %s161
      %p165 = scmp.eq.s32.totalorder %s16, 0
      %p166 = por %p164, %p165
      %p167 = scmp.ne.s32.totalorder %s159, %s161
      %p168 = scmp.eq.s32.totalorder %s21, 1
      %p169 = por %p167, %p168
      %p170 = scmp.ne.s32.totalorder %s161, %s162
      %p171 = scmp.eq.s32.totalorder %s21, 0
      %p172 = por %p170, %p171
      %p173 = scmp.ne.s32.totalorder %s161, %s162
      %p174 = scmp.eq.s32.totalorder %s22, 1
      %p175 = por %p173, %p174
      %p177 = scmp.ne.s32.totalorder %s162, %s176
      %p178 = scmp.eq.s32.totalorder %s22, 0
      %p179 = por %p177, %p178
      %s180 = ssub.s32 %s23, %s35
      %p181 = scmp.eq.s32.totalorder %s180, 0
      %s183 = sadd.s32 %s182, 1
      %s184 = scalar_select %p181, %s182, %s183
      %p187 = pneg %p181
      %p188 = scmp.eq.s32.totalorder %s16, 1
      %p189 = por %p187, %p188
      %p190 = scmp.ne.s32.totalorder %s182, %s185
      %p191 = scmp.eq.s32.totalorder %s16, 0
      %p192 = por %p190, %p191
      %p193 = scmp.ne.s32.totalorder %s182, %s185
      %p194 = scmp.eq.s32.totalorder %s21, 1
      %p195 = por %p193, %p194
      %p196 = scmp.ne.s32.totalorder %s185, %s186
      %p197 = scmp.eq.s32.totalorder %s21, 0
      %p198 = por %p196, %p197
      %p199 = scmp.ne.s32.totalorder %s185, %s186
      %p200 = scmp.eq.s32.totalorder %s22, 1
      %p201 = por %p199, %p200
      %p203 = scmp.ne.s32.totalorder %s186, %s202
      %p204 = scmp.eq.s32.totalorder %s22, 0
      %p205 = por %p203, %p204
      %p206 = scmp.le.s32.totalorder 1, %s16
      %p207 = scmp.lt.s32.totalorder %s16, 3
      %p208 = pnand %p206, %p207
      %p209 = pneg %p208
      // Predicated region
      $region9: #{tpu_custom_call.1} parent=5 // pred_check
        _
      $region10: #{tpu_custom_call.1} parent=5 // pred_check_branch
        %211 = sbr.rel (%p208) target = $region12
      $region11: #{tpu_custom_call.1} parent=5 // pred_region
        %s212 = ssub.s32 %s16, 1
        // Predicated region
        $region13: #{tpu_custom_call.1} parent=11 // pred_check
          %p213 = pneg %p49
        $region14: #{tpu_custom_call.1} parent=11 // pred_check_branch
          %215 = sbr.rel (%p213) target = $region16
        $region15: #{tpu_custom_call.1} parent=11 // pred_region
          _
        $region16: #{tpu_custom_call.1} parent=11 // pred_fallthru
          _
        // Predicated region
        $region17: #{tpu_custom_call.1} parent=11 // pred_check
          %p216 = pneg %p100
        $region18: #{tpu_custom_call.1} parent=11 // pred_check_branch
          %218 = sbr.rel (%p216) target = $region20
        $region19: #{tpu_custom_call.1} parent=11 // pred_region
          _
        $region20: #{tpu_custom_call.1} parent=11 // pred_fallthru
          _
        // Predicated region
        $region21: #{tpu_custom_call.1} parent=11 // pred_check
          %p219 = pneg %p121
        $region22: #{tpu_custom_call.1} parent=11 // pred_check_branch
          %221 = sbr.rel (%p219) target = $region24
        $region23: #{tpu_custom_call.1} parent=11 // pred_region
          _
        $region24: #{tpu_custom_call.1} parent=11 // pred_fallthru
          _
        // Predicated region
        $region25: #{tpu_custom_call.1} parent=11 // pred_check
          %p222 = pneg %p172
        $region26: #{tpu_custom_call.1} parent=11 // pred_check_branch
          %224 = sbr.rel (%p222) target = $region28
        $region27: #{tpu_custom_call.1} parent=11 // pred_region
          _
        $region28: #{tpu_custom_call.1} parent=11 // pred_fallthru
          _
      $region12: #{tpu_custom_call.1} parent=5 // pred_fallthru
        _
      %p225 = scmp.lt.s32.totalorder %s16, 2
      // Predicated region
      $region29: #{tpu_custom_call.1} parent=5 // pred_check
        %p226 = pneg %p225
      $region30: #{tpu_custom_call.1} parent=5 // pred_check_branch
        %228 = sbr.rel (%p226) target = $region32
      $region31: #{tpu_custom_call.1} parent=5 // pred_region
        // Predicated region
        $region33: #{tpu_custom_call.1} parent=31 // pred_check
          %p229 = pneg %p73
        $region34: #{tpu_custom_call.1} parent=31 // pred_check_branch
          %231 = sbr.rel (%p229) target = $region36
        $region35: #{tpu_custom_call.1} parent=31 // pred_region
          %s232 = sand.u32 %s63, 1
          %s233 = scalar_lea.sflag [#allocation4], %s232
          %s234 = sand.u32 %s63, 1
          %s235 = smul.addr %s234, 8192
          %s236 = scalar_lea.vmem [#allocation3], %s235
          %s237 = smul.u32 %s23, 2
          %s238 = sadd.s32 %s237, %s24
          %s239 = smul.u32 32, %s238
          %s241 = ssub.s32 131072, 131072
          %242 = vsyncadd %s233, %s241
          %s243 = smul.addr %s239, 128
          %s244 = scalar_lea.hbm %s1, %s243
          %s245 = sshll.u32 %s236, 4
          %s246 = int_to_ptr.vmem [resolvable:$true] %s245
          %251 = dma.hbm_to_vmem [thread:$0]  %s244, 131072, %s246, %s233, 8192, 4096, 256
        $region36: #{tpu_custom_call.1} parent=31 // pred_fallthru
          _
        // Predicated region
        $region37: #{tpu_custom_call.1} parent=31 // pred_check
          %p252 = pneg %p145
        $region38: #{tpu_custom_call.1} parent=31 // pred_check_branch
          %254 = sbr.rel (%p252) target = $region40
        $region39: #{tpu_custom_call.1} parent=31 // pred_region
          %s255 = smul.u32 %s23, 2
          %s256 = sadd.s32 %s255, %s24
          %s257 = smul.u32 512, %s256
          %p258 = scmp.lt.s32.totalorder %s257, 1023
          %s259 = scalar_select %p258, %s257, 1023
          %s260 = smul.addr %s259, 8
          %s261 = scalar_lea.vmem %s4, %s260
          %s262 = smul.u32 %s23, 2
          %s263 = sadd.s32 %s262, %s24
          %s264 = smul.u32 512, %s263
        $region40: #{tpu_custom_call.1} parent=31 // pred_fallthru
          _
      $region32: #{tpu_custom_call.1} parent=5 // pred_fallthru
        _
      %p265 = scmp.le.s32.totalorder 1, %s16
      %p266 = scmp.lt.s32.totalorder %s16, 3
      %p267 = pnand %p265, %p266
      %p268 = pneg %p267
      // Predicated region
      $region41: #{tpu_custom_call.1} parent=5 // pred_check
        _
      $region42: #{tpu_custom_call.1} parent=5 // pred_check_branch
        %270 = sbr.rel (%p267) target = $region44
      $region43: #{tpu_custom_call.1} parent=5 // pred_region
        %s271 = ssub.s32 %s16, 1
        %s272 = sand.u32 %s66, 1
        %s273 = scalar_lea.sflag [#allocation4], %s272
        %s274 = sand.u32 %s66, 1
        %s275 = smul.addr %s274, 8192
        %s276 = scalar_lea.vmem [#allocation3], %s275
        // Predicated region
        $region45: #{tpu_custom_call.1} parent=43 // pred_check
          %p277 = pneg %p79
        $region46: #{tpu_custom_call.1} parent=43 // pred_check_branch
          %279 = sbr.rel (%p277) target = $region48
        $region47: #{tpu_custom_call.1} parent=43 // pred_region
          %280 = dma.done %s273, 131072
        $region48: #{tpu_custom_call.1} parent=43 // pred_fallthru
          _
        %p281 = pneg %p49
        %p282 = pneg %p46
        %s283 = sand.u32 %s66, 1
        %s284 = scalar_lea.sflag [#allocation4], %s283
        %s285 = sand.u32 %s66, 1
        %s286 = smul.addr %s285, 8192
        %s287 = scalar_lea.vmem [#allocation3], %s286
        %p288 = pneg %p79
        %p289 = pneg %p76
        %p290 = pneg %p100
        %p291 = pneg %p97
        %p292 = pneg %p121
        %p293 = pneg %p118
        %s294 = smul.u32 %s25, 2
        %s295 = sadd.s32 %s294, %s26
        %s296 = smul.u32 512, %s295
        %p297 = scmp.lt.s32.totalorder %s296, 1023
        %s298 = scalar_select %p297, %s296, 1023
        %s299 = smul.addr %s298, 8
        %s300 = scalar_lea.vmem %s4, %s299
        %p301 = pneg %p151
        %p302 = pneg %p148
        %p303 = pneg %p172
        %p304 = pneg %p169
        %p305 = pneg %p198
        %p306 = pneg %p195
        %s307 = smul.u32 %s25, 2
        %s308 = sadd.s32 %s307, %s26
        %s309 = smul.u32 32, %s308
        %s310 = smul.u32 %s25, 2
        %s311 = sadd.s32 %s310, %s26
        %s312 = smul.u32 512, %s311
        %p313 = scmp.lt.s32.totalorder %s312, 1023
        %s314 = scalar_select %p313, %s312, 1023
        %s315 = smul.addr %s314, 8
        %s316 = scalar_lea.vmem %s4, %s315
        %s317 = smul.u32 %s25, 2
        %s318 = sadd.s32 %s317, %s26
        %s319 = smul.u32 512, %s318
        %p320 = scmp.eq.s32.totalorder %s26, 0
        // Predicated region
        $region49: #{tpu_custom_call.1} parent=43 // pred_check
          %p321 = pneg %p320
        $region50: #{tpu_custom_call.1} parent=43 // pred_check_branch
          %323 = sbr.rel (%p321) target = $region52
        $region51: #{tpu_custom_call.1} parent=43 // pred_region
          %v324 = vld [vmem:[%s0] sm:$0xff]
          %v325 = vld [vmem:[%s0 + $0x8] sm:$0xff]
          %v326 = vmul.f32 %v324, %v324
          %v327 = vmul.f32 %v325, %v325
          %v328 = vadd.f32 %v326, %v327
          %329 = vadd.xlane.f32.xlu0 %v328
          %v330 = vpop.xlane.xlu0 %329
          %v331 = vrsqrt.pop %v330
          %v332 = vmul.f32 %v330, %v331
          %vm333 = vcmp.eq.f32.partialorder %v330, inf
          %v334 = vsel %vm333, %v330, %v332
          %vm335 = vcmp.eq.f32.partialorder %v330, 0.0
          %v336 = vand.u32 %v330, 2147483648
          %v337 = vsel %vm335, %v336, %v334
          %v338 = vmax.f32 %v337, 1e-12
          %v339 = vrcp.pop %v338
          %v340 = vmul.f32 %v324, %v339
          %v341 = vmul.f32 %v325, %v339
          %342 = vst [vmem:[#allocation2] sm:$0xff] %v340
          %343 = vst [vmem:[#allocation2 + $0x8] sm:$0xff] %v341
          %vm344 = vcmask 523264
          %345 = vst.msk [vmem:[#allocation6] sm:$0xff] %vm344, 0.0
        $region52: #{tpu_custom_call.1} parent=43 // pred_fallthru
          _
        %s346 = smul.u32 %s25, 2
        %s347 = sadd.s32 %s346, %s26
        %s348 = smul.u32 %s347, 4096
        %s349 = sshra.s32 %s348, 7
        %s350 = sand.u32 %s348, 127
        %s351 = scalar_lea.vmem %s3, %s349
        %v352 = vld [vmem:[%s351] sm:$0xff]
        %v353 = vld [vmem:[%s351 + $0x8] sm:$0xff]
        %v354 = vld [vmem:[%s351 + $0x10] sm:$0xff]
        %v355 = vld [vmem:[%s351 + $0x18] sm:$0xff]
        %s356 = scalar_lea.vmem %s2, %s349
        %v357 = vld [vmem:[%s356] sm:$0xff]
        %v358 = vld [vmem:[%s356 + $0x8] sm:$0xff]
        %v359 = vld [vmem:[%s356 + $0x10] sm:$0xff]
        %v360 = vld [vmem:[%s356 + $0x18] sm:$0xff]
        %v361 = vld [vmem:[%s276] sm:$0xff]
        %v362 = vld [vmem:[%s276 + $0x8] sm:$0xff]
        %v363 = vld [vmem:[%s276 + $0x10] sm:$0xff]
        %v364 = vld [vmem:[%s276 + $0x18] sm:$0xff]
        %v365 = vld [vmem:[%s276 + $0x20] sm:$0xff]
        %v366 = vld [vmem:[%s276 + $0x28] sm:$0xff]
        %v367 = vld [vmem:[%s276 + $0x30] sm:$0xff]
        %v368 = vld [vmem:[%s276 + $0x38] sm:$0xff]
        %v369 = vld [vmem:[%s276 + $0x40] sm:$0xff]
        %v370 = vld [vmem:[%s276 + $0x48] sm:$0xff]
        %v371 = vld [vmem:[%s276 + $0x50] sm:$0xff]
        %v372 = vld [vmem:[%s276 + $0x58] sm:$0xff]
        %v373 = vld [vmem:[%s276 + $0x60] sm:$0xff]
        %v374 = vld [vmem:[%s276 + $0x68] sm:$0xff]
        %v375 = vld [vmem:[%s276 + $0x70] sm:$0xff]
        %v376 = vld [vmem:[%s276 + $0x78] sm:$0xff]
        %v377 = vld [vmem:[%s276 + $0x80] sm:$0xff]
        %v378 = vld [vmem:[%s276 + $0x88] sm:$0xff]
        %v379 = vld [vmem:[%s276 + $0x90] sm:$0xff]
        %v380 = vld [vmem:[%s276 + $0x98] sm:$0xff]
        %v381 = vld [vmem:[%s276 + $0xa0] sm:$0xff]
        %v382 = vld [vmem:[%s276 + $0xa8] sm:$0xff]
        %v383 = vld [vmem:[%s276 + $0xb0] sm:$0xff]
        %v384 = vld [vmem:[%s276 + $0xb8] sm:$0xff]
        %v385 = vld [vmem:[%s276 + $0xc0] sm:$0xff]
        %v386 = vld [vmem:[%s276 + $0xc8] sm:$0xff]
        %v387 = vld [vmem:[%s276 + $0xd0] sm:$0xff]
        %v388 = vld [vmem:[%s276 + $0xd8] sm:$0xff]
        %v389 = vld [vmem:[%s276 + $0xe0] sm:$0xff]
        %v390 = vld [vmem:[%s276 + $0xe8] sm:$0xff]
        %v391 = vld [vmem:[%s276 + $0xf0] sm:$0xff]
        %v392 = vld [vmem:[%s276 + $0xf8] sm:$0xff]
        %v393 = vld [vmem:[%s276 + $0x100] sm:$0xff]
        %v394 = vld [vmem:[%s276 + $0x108] sm:$0xff]
        %v395 = vld [vmem:[%s276 + $0x110] sm:$0xff]
        %v396 = vld [vmem:[%s276 + $0x118] sm:$0xff]
        %v397 = vld [vmem:[%s276 + $0x120] sm:$0xff]
        %v398 = vld [vmem:[%s276 + $0x128] sm:$0xff]
        %v399 = vld [vmem:[%s276 + $0x130] sm:$0xff]
        %v400 = vld [vmem:[%s276 + $0x138] sm:$0xff]
        %v401 = vld [vmem:[%s276 + $0x140] sm:$0xff]
        %v402 = vld [vmem:[%s276 + $0x148] sm:$0xff]
        %v403 = vld [vmem:[%s276 + $0x150] sm:$0xff]
        %v404 = vld [vmem:[%s276 + $0x158] sm:$0xff]
        %v405 = vld [vmem:[%s276 + $0x160] sm:$0xff]
        %v406 = vld [vmem:[%s276 + $0x168] sm:$0xff]
        %v407 = vld [vmem:[%s276 + $0x170] sm:$0xff]
        %v408 = vld [vmem:[%s276 + $0x178] sm:$0xff]
        %v409 = vld [vmem:[%s276 + $0x180] sm:$0xff]
        %v410 = vld [vmem:[%s276 + $0x188] sm:$0xff]
        %v411 = vld [vmem:[%s276 + $0x190] sm:$0xff]
        %v412 = vld [vmem:[%s276 + $0x198] sm:$0xff]
        %v413 = vld [vmem:[%s276 + $0x1a0] sm:$0xff]
        %v414 = vld [vmem:[%s276 + $0x1a8] sm:$0xff]
        %v415 = vld [vmem:[%s276 + $0x1b0] sm:$0xff]
        %v416 = vld [vmem:[%s276 + $0x1b8] sm:$0xff]
        %v417 = vld [vmem:[%s276 + $0x1c0] sm:$0xff]
        %v418 = vld [vmem:[%s276 + $0x1c8] sm:$0xff]
        %v419 = vld [vmem:[%s276 + $0x1d0] sm:$0xff]
        %v420 = vld [vmem:[%s276 + $0x1d8] sm:$0xff]
        %v421 = vld [vmem:[%s276 + $0x1e0] sm:$0xff]
        %v422 = vld [vmem:[%s276 + $0x1e8] sm:$0xff]
        %v423 = vld [vmem:[%s276 + $0x1f0] sm:$0xff]
        %v424 = vld [vmem:[%s276 + $0x1f8] sm:$0xff]
        %v425 = vld [vmem:[%s276 + $0x200] sm:$0xff]
        %v426 = vld [vmem:[%s276 + $0x208] sm:$0xff]
        %v427 = vld [vmem:[%s276 + $0x210] sm:$0xff]
        %v428 = vld [vmem:[%s276 + $0x218] sm:$0xff]
        %v429 = vld [vmem:[%s276 + $0x220] sm:$0xff]
        %v430 = vld [vmem:[%s276 + $0x228] sm:$0xff]
        %v431 = vld [vmem:[%s276 + $0x230] sm:$0xff]
        %v432 = vld [vmem:[%s276 + $0x238] sm:$0xff]
        %v433 = vld [vmem:[%s276 + $0x240] sm:$0xff]
        %v434 = vld [vmem:[%s276 + $0x248] sm:$0xff]
        %v435 = vld [vmem:[%s276 + $0x250] sm:$0xff]
        %v436 = vld [vmem:[%s276 + $0x258] sm:$0xff]
        %v437 = vld [vmem:[%s276 + $0x260] sm:$0xff]
        %v438 = vld [vmem:[%s276 + $0x268] sm:$0xff]
        %v439 = vld [vmem:[%s276 + $0x270] sm:$0xff]
        %v440 = vld [vmem:[%s276 + $0x278] sm:$0xff]
        %v441 = vld [vmem:[%s276 + $0x280] sm:$0xff]
        %v442 = vld [vmem:[%s276 + $0x288] sm:$0xff]
        %v443 = vld [vmem:[%s276 + $0x290] sm:$0xff]
        %v444 = vld [vmem:[%s276 + $0x298] sm:$0xff]
        %v445 = vld [vmem:[%s276 + $0x2a0] sm:$0xff]
        %v446 = vld [vmem:[%s276 + $0x2a8] sm:$0xff]
        %v447 = vld [vmem:[%s276 + $0x2b0] sm:$0xff]
        %v448 = vld [vmem:[%s276 + $0x2b8] sm:$0xff]
        %v449 = vld [vmem:[%s276 + $0x2c0] sm:$0xff]
        %v450 = vld [vmem:[%s276 + $0x2c8] sm:$0xff]
        %v451 = vld [vmem:[%s276 + $0x2d0] sm:$0xff]
        %v452 = vld [vmem:[%s276 + $0x2d8] sm:$0xff]
        %v453 = vld [vmem:[%s276 + $0x2e0] sm:$0xff]
        %v454 = vld [vmem:[%s276 + $0x2e8] sm:$0xff]
        %v455 = vld [vmem:[%s276 + $0x2f0] sm:$0xff]
        %v456 = vld [vmem:[%s276 + $0x2f8] sm:$0xff]
        %v457 = vld [vmem:[%s276 + $0x300] sm:$0xff]
        %v458 = vld [vmem:[%s276 + $0x308] sm:$0xff]
        %v459 = vld [vmem:[%s276 + $0x310] sm:$0xff]
        %v460 = vld [vmem:[%s276 + $0x318] sm:$0xff]
        %v461 = vld [vmem:[%s276 + $0x320] sm:$0xff]
        %v462 = vld [vmem:[%s276 + $0x328] sm:$0xff]
        %v463 = vld [vmem:[%s276 + $0x330] sm:$0xff]
        %v464 = vld [vmem:[%s276 + $0x338] sm:$0xff]
        %v465 = vld [vmem:[%s276 + $0x340] sm:$0xff]
        %v466 = vld [vmem:[%s276 + $0x348] sm:$0xff]
        %v467 = vld [vmem:[%s276 + $0x350] sm:$0xff]
        %v468 = vld [vmem:[%s276 + $0x358] sm:$0xff]
        %v469 = vld [vmem:[%s276 + $0x360] sm:$0xff]
        %v470 = vld [vmem:[%s276 + $0x368] sm:$0xff]
        %v471 = vld [vmem:[%s276 + $0x370] sm:$0xff]
        %v472 = vld [vmem:[%s276 + $0x378] sm:$0xff]
        %v473 = vld [vmem:[%s276 + $0x380] sm:$0xff]
        %v474 = vld [vmem:[%s276 + $0x388] sm:$0xff]
        %v475 = vld [vmem:[%s276 + $0x390] sm:$0xff]
        %v476 = vld [vmem:[%s276 + $0x398] sm:$0xff]
        %v477 = vld [vmem:[%s276 + $0x3a0] sm:$0xff]
        %v478 = vld [vmem:[%s276 + $0x3a8] sm:$0xff]
        %v479 = vld [vmem:[%s276 + $0x3b0] sm:$0xff]
        %v480 = vld [vmem:[%s276 + $0x3b8] sm:$0xff]
        %v481 = vld [vmem:[%s276 + $0x3c0] sm:$0xff]
        %v482 = vld [vmem:[%s276 + $0x3c8] sm:$0xff]
        %v483 = vld [vmem:[%s276 + $0x3d0] sm:$0xff]
        %v484 = vld [vmem:[%s276 + $0x3d8] sm:$0xff]
        %v485 = vld [vmem:[%s276 + $0x3e0] sm:$0xff]
        %v486 = vld [vmem:[%s276 + $0x3e8] sm:$0xff]
        %v487 = vld [vmem:[%s276 + $0x3f0] sm:$0xff]
        %v488 = vld [vmem:[%s276 + $0x3f8] sm:$0xff]
        %v489 = vld [vmem:[%s276 + $0x400] sm:$0xff]
        %v490 = vld [vmem:[%s276 + $0x408] sm:$0xff]
        %v491 = vld [vmem:[%s276 + $0x410] sm:$0xff]
        %v492 = vld [vmem:[%s276 + $0x418] sm:$0xff]
        %v493 = vld [vmem:[%s276 + $0x420] sm:$0xff]
        %v494 = vld [vmem:[%s276 + $0x428] sm:$0xff]
        %v495 = vld [vmem:[%s276 + $0x430] sm:$0xff]
        %v496 = vld [vmem:[%s276 + $0x438] sm:$0xff]
        %v497 = vld [vmem:[%s276 + $0x440] sm:$0xff]
        %v498 = vld [vmem:[%s276 + $0x448] sm:$0xff]
        %v499 = vld [vmem:[%s276 + $0x450] sm:$0xff]
        %v500 = vld [vmem:[%s276 + $0x458] sm:$0xff]
        %v501 = vld [vmem:[%s276 + $0x460] sm:$0xff]
        %v502 = vld [vmem:[%s276 + $0x468] sm:$0xff]
        %v503 = vld [vmem:[%s276 + $0x470] sm:$0xff]
        %v504 = vld [vmem:[%s276 + $0x478] sm:$0xff]
        %v505 = vld [vmem:[%s276 + $0x480] sm:$0xff]
        %v506 = vld [vmem:[%s276 + $0x488] sm:$0xff]
        %v507 = vld [vmem:[%s276 + $0x490] sm:$0xff]
        %v508 = vld [vmem:[%s276 + $0x498] sm:$0xff]
        %v509 = vld [vmem:[%s276 + $0x4a0] sm:$0xff]
        %v510 = vld [vmem:[%s276 + $0x4a8] sm:$0xff]
        %v511 = vld [vmem:[%s276 + $0x4b0] sm:$0xff]
        %v512 = vld [vmem:[%s276 + $0x4b8] sm:$0xff]
        %v513 = vld [vmem:[%s276 + $0x4c0] sm:$0xff]
        %v514 = vld [vmem:[%s276 + $0x4c8] sm:$0xff]
        %v515 = vld [vmem:[%s276 + $0x4d0] sm:$0xff]
        %v516 = vld [vmem:[%s276 + $0x4d8] sm:$0xff]
        %v517 = vld [vmem:[%s276 + $0x4e0] sm:$0xff]
        %v518 = vld [vmem:[%s276 + $0x4e8] sm:$0xff]
        %v519 = vld [vmem:[%s276 + $0x4f0] sm:$0xff]
        %v520 = vld [vmem:[%s276 + $0x4f8] sm:$0xff]
        %v521 = vld [vmem:[%s276 + $0x500] sm:$0xff]
        %v522 = vld [vmem:[%s276 + $0x508] sm:$0xff]
        %v523 = vld [vmem:[%s276 + $0x510] sm:$0xff]
        %v524 = vld [vmem:[%s276 + $0x518] sm:$0xff]
        %v525 = vld [vmem:[%s276 + $0x520] sm:$0xff]
        %v526 = vld [vmem:[%s276 + $0x528] sm:$0xff]
        %v527 = vld [vmem:[%s276 + $0x530] sm:$0xff]
        %v528 = vld [vmem:[%s276 + $0x538] sm:$0xff]
        %v529 = vld [vmem:[%s276 + $0x540] sm:$0xff]
        %v530 = vld [vmem:[%s276 + $0x548] sm:$0xff]
        %v531 = vld [vmem:[%s276 + $0x550] sm:$0xff]
        %v532 = vld [vmem:[%s276 + $0x558] sm:$0xff]
        %v533 = vld [vmem:[%s276 + $0x560] sm:$0xff]
        %v534 = vld [vmem:[%s276 + $0x568] sm:$0xff]
        %v535 = vld [vmem:[%s276 + $0x570] sm:$0xff]
        %v536 = vld [vmem:[%s276 + $0x578] sm:$0xff]
        %v537 = vld [vmem:[%s276 + $0x580] sm:$0xff]
        %v538 = vld [vmem:[%s276 + $0x588] sm:$0xff]
        %v539 = vld [vmem:[%s276 + $0x590] sm:$0xff]
        %v540 = vld [vmem:[%s276 + $0x598] sm:$0xff]
        %v541 = vld [vmem:[%s276 + $0x5a0] sm:$0xff]
        %v542 = vld [vmem:[%s276 + $0x5a8] sm:$0xff]
        %v543 = vld [vmem:[%s276 + $0x5b0] sm:$0xff]
        %v544 = vld [vmem:[%s276 + $0x5b8] sm:$0xff]
        %v545 = vld [vmem:[%s276 + $0x5c0] sm:$0xff]
        %v546 = vld [vmem:[%s276 + $0x5c8] sm:$0xff]
        %v547 = vld [vmem:[%s276 + $0x5d0] sm:$0xff]
        %v548 = vld [vmem:[%s276 + $0x5d8] sm:$0xff]
        %v549 = vld [vmem:[%s276 + $0x5e0] sm:$0xff]
        %v550 = vld [vmem:[%s276 + $0x5e8] sm:$0xff]
        %v551 = vld [vmem:[%s276 + $0x5f0] sm:$0xff]
        %v552 = vld [vmem:[%s276 + $0x5f8] sm:$0xff]
        %v553 = vld [vmem:[%s276 + $0x600] sm:$0xff]
        %v554 = vld [vmem:[%s276 + $0x608] sm:$0xff]
        %v555 = vld [vmem:[%s276 + $0x610] sm:$0xff]
        %v556 = vld [vmem:[%s276 + $0x618] sm:$0xff]
        %v557 = vld [vmem:[%s276 + $0x620] sm:$0xff]
        %v558 = vld [vmem:[%s276 + $0x628] sm:$0xff]
        %v559 = vld [vmem:[%s276 + $0x630] sm:$0xff]
        %v560 = vld [vmem:[%s276 + $0x638] sm:$0xff]
        %v561 = vld [vmem:[%s276 + $0x640] sm:$0xff]
        %v562 = vld [vmem:[%s276 + $0x648] sm:$0xff]
        %v563 = vld [vmem:[%s276 + $0x650] sm:$0xff]
        %v564 = vld [vmem:[%s276 + $0x658] sm:$0xff]
        %v565 = vld [vmem:[%s276 + $0x660] sm:$0xff]
        %v566 = vld [vmem:[%s276 + $0x668] sm:$0xff]
        %v567 = vld [vmem:[%s276 + $0x670] sm:$0xff]
        %v568 = vld [vmem:[%s276 + $0x678] sm:$0xff]
        %v569 = vld [vmem:[%s276 + $0x680] sm:$0xff]
        %v570 = vld [vmem:[%s276 + $0x688] sm:$0xff]
        %v571 = vld [vmem:[%s276 + $0x690] sm:$0xff]
        %v572 = vld [vmem:[%s276 + $0x698] sm:$0xff]
        %v573 = vld [vmem:[%s276 + $0x6a0] sm:$0xff]
        %v574 = vld [vmem:[%s276 + $0x6a8] sm:$0xff]
        %v575 = vld [vmem:[%s276 + $0x6b0] sm:$0xff]
        %v576 = vld [vmem:[%s276 + $0x6b8] sm:$0xff]
        %v577 = vld [vmem:[%s276 + $0x6c0] sm:$0xff]
        %v578 = vld [vmem:[%s276 + $0x6c8] sm:$0xff]
        %v579 = vld [vmem:[%s276 + $0x6d0] sm:$0xff]
        %v580 = vld [vmem:[%s276 + $0x6d8] sm:$0xff]
        %v581 = vld [vmem:[%s276 + $0x6e0] sm:$0xff]
        %v582 = vld [vmem:[%s276 + $0x6e8] sm:$0xff]
        %v583 = vld [vmem:[%s276 + $0x6f0] sm:$0xff]
        %v584 = vld [vmem:[%s276 + $0x6f8] sm:$0xff]
        %v585 = vld [vmem:[%s276 + $0x700] sm:$0xff]
        %v586 = vld [vmem:[%s276 + $0x708] sm:$0xff]
        %v587 = vld [vmem:[%s276 + $0x710] sm:$0xff]
        %v588 = vld [vmem:[%s276 + $0x718] sm:$0xff]
        %v589 = vld [vmem:[%s276 + $0x720] sm:$0xff]
        %v590 = vld [vmem:[%s276 + $0x728] sm:$0xff]
        %v591 = vld [vmem:[%s276 + $0x730] sm:$0xff]
        %v592 = vld [vmem:[%s276 + $0x738] sm:$0xff]
        %v593 = vld [vmem:[%s276 + $0x740] sm:$0xff]
        %v594 = vld [vmem:[%s276 + $0x748] sm:$0xff]
        %v595 = vld [vmem:[%s276 + $0x750] sm:$0xff]
        %v596 = vld [vmem:[%s276 + $0x758] sm:$0xff]
        %v597 = vld [vmem:[%s276 + $0x760] sm:$0xff]
        %v598 = vld [vmem:[%s276 + $0x768] sm:$0xff]
        %v599 = vld [vmem:[%s276 + $0x770] sm:$0xff]
        %v600 = vld [vmem:[%s276 + $0x778] sm:$0xff]
        %v601 = vld [vmem:[%s276 + $0x780] sm:$0xff]
        %v602 = vld [vmem:[%s276 + $0x788] sm:$0xff]
        %v603 = vld [vmem:[%s276 + $0x790] sm:$0xff]
        %v604 = vld [vmem:[%s276 + $0x798] sm:$0xff]
        %v605 = vld [vmem:[%s276 + $0x7a0] sm:$0xff]
        %v606 = vld [vmem:[%s276 + $0x7a8] sm:$0xff]
        %v607 = vld [vmem:[%s276 + $0x7b0] sm:$0xff]
        %v608 = vld [vmem:[%s276 + $0x7b8] sm:$0xff]
        %v609 = vld [vmem:[%s276 + $0x7c0] sm:$0xff]
        %v610 = vld [vmem:[%s276 + $0x7c8] sm:$0xff]
        %v611 = vld [vmem:[%s276 + $0x7d0] sm:$0xff]
        %v612 = vld [vmem:[%s276 + $0x7d8] sm:$0xff]
        %v613 = vld [vmem:[%s276 + $0x7e0] sm:$0xff]
        %v614 = vld [vmem:[%s276 + $0x7e8] sm:$0xff]
        %v615 = vld [vmem:[%s276 + $0x7f0] sm:$0xff]
        %v616 = vld [vmem:[%s276 + $0x7f8] sm:$0xff]
        %v617 = vld [vmem:[%s276 + $0x800] sm:$0xff]
        %v618 = vld [vmem:[%s276 + $0x808] sm:$0xff]
        %v619 = vld [vmem:[%s276 + $0x810] sm:$0xff]
        %v620 = vld [vmem:[%s276 + $0x818] sm:$0xff]
        %v621 = vld [vmem:[%s276 + $0x820] sm:$0xff]
        %v622 = vld [vmem:[%s276 + $0x828] sm:$0xff]
        %v623 = vld [vmem:[%s276 + $0x830] sm:$0xff]
        %v624 = vld [vmem:[%s276 + $0x838] sm:$0xff]
        %v625 = vld [vmem:[%s276 + $0x840] sm:$0xff]
        %v626 = vld [vmem:[%s276 + $0x848] sm:$0xff]
        %v627 = vld [vmem:[%s276 + $0x850] sm:$0xff]
        %v628 = vld [vmem:[%s276 + $0x858] sm:$0xff]
        %v629 = vld [vmem:[%s276 + $0x860] sm:$0xff]
        %v630 = vld [vmem:[%s276 + $0x868] sm:$0xff]
        %v631 = vld [vmem:[%s276 + $0x870] sm:$0xff]
        %v632 = vld [vmem:[%s276 + $0x878] sm:$0xff]
        %v633 = vld [vmem:[%s276 + $0x880] sm:$0xff]
        %v634 = vld [vmem:[%s276 + $0x888] sm:$0xff]
        %v635 = vld [vmem:[%s276 + $0x890] sm:$0xff]
        %v636 = vld [vmem:[%s276 + $0x898] sm:$0xff]
        %v637 = vld [vmem:[%s276 + $0x8a0] sm:$0xff]
        %v638 = vld [vmem:[%s276 + $0x8a8] sm:$0xff]
        %v639 = vld [vmem:[%s276 + $0x8b0] sm:$0xff]
        %v640 = vld [vmem:[%s276 + $0x8b8] sm:$0xff]
        %v641 = vld [vmem:[%s276 + $0x8c0] sm:$0xff]
        %v642 = vld [vmem:[%s276 + $0x8c8] sm:$0xff]
        %v643 = vld [vmem:[%s276 + $0x8d0] sm:$0xff]
        %v644 = vld [vmem:[%s276 + $0x8d8] sm:$0xff]
        %v645 = vld [vmem:[%s276 + $0x8e0] sm:$0xff]
        %v646 = vld [vmem:[%s276 + $0x8e8] sm:$0xff]
        %v647 = vld [vmem:[%s276 + $0x8f0] sm:$0xff]
        %v648 = vld [vmem:[%s276 + $0x8f8] sm:$0xff]
        %v649 = vld [vmem:[%s276 + $0x900] sm:$0xff]
        %v650 = vld [vmem:[%s276 + $0x908] sm:$0xff]
        %v651 = vld [vmem:[%s276 + $0x910] sm:$0xff]
        %v652 = vld [vmem:[%s276 + $0x918] sm:$0xff]
        %v653 = vld [vmem:[%s276 + $0x920] sm:$0xff]
        %v654 = vld [vmem:[%s276 + $0x928] sm:$0xff]
        %v655 = vld [vmem:[%s276 + $0x930] sm:$0xff]
        %v656 = vld [vmem:[%s276 + $0x938] sm:$0xff]
        %v657 = vld [vmem:[%s276 + $0x940] sm:$0xff]
        %v658 = vld [vmem:[%s276 + $0x948] sm:$0xff]
        %v659 = vld [vmem:[%s276 + $0x950] sm:$0xff]
        %v660 = vld [vmem:[%s276 + $0x958] sm:$0xff]
        %v661 = vld [vmem:[%s276 + $0x960] sm:$0xff]
        %v662 = vld [vmem:[%s276 + $0x968] sm:$0xff]
        %v663 = vld [vmem:[%s276 + $0x970] sm:$0xff]
        %v664 = vld [vmem:[%s276 + $0x978] sm:$0xff]
        %v665 = vld [vmem:[%s276 + $0x980] sm:$0xff]
        %v666 = vld [vmem:[%s276 + $0x988] sm:$0xff]
        %v667 = vld [vmem:[%s276 + $0x990] sm:$0xff]
        %v668 = vld [vmem:[%s276 + $0x998] sm:$0xff]
        %v669 = vld [vmem:[%s276 + $0x9a0] sm:$0xff]
        %v670 = vld [vmem:[%s276 + $0x9a8] sm:$0xff]
        %v671 = vld [vmem:[%s276 + $0x9b0] sm:$0xff]
        %v672 = vld [vmem:[%s276 + $0x9b8] sm:$0xff]
        %v673 = vld [vmem:[%s276 + $0x9c0] sm:$0xff]
        %v674 = vld [vmem:[%s276 + $0x9c8] sm:$0xff]
        %v675 = vld [vmem:[%s276 + $0x9d0] sm:$0xff]
        %v676 = vld [vmem:[%s276 + $0x9d8] sm:$0xff]
        %v677 = vld [vmem:[%s276 + $0x9e0] sm:$0xff]
        %v678 = vld [vmem:[%s276 + $0x9e8] sm:$0xff]
        %v679 = vld [vmem:[%s276 + $0x9f0] sm:$0xff]
        %v680 = vld [vmem:[%s276 + $0x9f8] sm:$0xff]
        %v681 = vld [vmem:[%s276 + $0xa00] sm:$0xff]
        %v682 = vld [vmem:[%s276 + $0xa08] sm:$0xff]
        %v683 = vld [vmem:[%s276 + $0xa10] sm:$0xff]
        %v684 = vld [vmem:[%s276 + $0xa18] sm:$0xff]
        %v685 = vld [vmem:[%s276 + $0xa20] sm:$0xff]
        %v686 = vld [vmem:[%s276 + $0xa28] sm:$0xff]
        %v687 = vld [vmem:[%s276 + $0xa30] sm:$0xff]
        %v688 = vld [vmem:[%s276 + $0xa38] sm:$0xff]
        %v689 = vld [vmem:[%s276 + $0xa40] sm:$0xff]
        %v690 = vld [vmem:[%s276 + $0xa48] sm:$0xff]
        %v691 = vld [vmem:[%s276 + $0xa50] sm:$0xff]
        %v692 = vld [vmem:[%s276 + $0xa58] sm:$0xff]
        %v693 = vld [vmem:[%s276 + $0xa60] sm:$0xff]
        %v694 = vld [vmem:[%s276 + $0xa68] sm:$0xff]
        %v695 = vld [vmem:[%s276 + $0xa70] sm:$0xff]
        %v696 = vld [vmem:[%s276 + $0xa78] sm:$0xff]
        %v697 = vld [vmem:[%s276 + $0xa80] sm:$0xff]
        %v698 = vld [vmem:[%s276 + $0xa88] sm:$0xff]
        %v699 = vld [vmem:[%s276 + $0xa90] sm:$0xff]
        %v700 = vld [vmem:[%s276 + $0xa98] sm:$0xff]
        %v701 = vld [vmem:[%s276 + $0xaa0] sm:$0xff]
        %v702 = vld [vmem:[%s276 + $0xaa8] sm:$0xff]
        %v703 = vld [vmem:[%s276 + $0xab0] sm:$0xff]
        %v704 = vld [vmem:[%s276 + $0xab8] sm:$0xff]
        %v705 = vld [vmem:[%s276 + $0xac0] sm:$0xff]
        %v706 = vld [vmem:[%s276 + $0xac8] sm:$0xff]
        %v707 = vld [vmem:[%s276 + $0xad0] sm:$0xff]
        %v708 = vld [vmem:[%s276 + $0xad8] sm:$0xff]
        %v709 = vld [vmem:[%s276 + $0xae0] sm:$0xff]
        %v710 = vld [vmem:[%s276 + $0xae8] sm:$0xff]
        %v711 = vld [vmem:[%s276 + $0xaf0] sm:$0xff]
        %v712 = vld [vmem:[%s276 + $0xaf8] sm:$0xff]
        %v713 = vld [vmem:[%s276 + $0xb00] sm:$0xff]
        %v714 = vld [vmem:[%s276 + $0xb08] sm:$0xff]
        %v715 = vld [vmem:[%s276 + $0xb10] sm:$0xff]
        %v716 = vld [vmem:[%s276 + $0xb18] sm:$0xff]
        %v717 = vld [vmem:[%s276 + $0xb20] sm:$0xff]
        %v718 = vld [vmem:[%s276 + $0xb28] sm:$0xff]
        %v719 = vld [vmem:[%s276 + $0xb30] sm:$0xff]
        %v720 = vld [vmem:[%s276 + $0xb38] sm:$0xff]
        %v721 = vld [vmem:[%s276 + $0xb40] sm:$0xff]
        %v722 = vld [vmem:[%s276 + $0xb48] sm:$0xff]
        %v723 = vld [vmem:[%s276 + $0xb50] sm:$0xff]
        %v724 = vld [vmem:[%s276 + $0xb58] sm:$0xff]
        %v725 = vld [vmem:[%s276 + $0xb60] sm:$0xff]
        %v726 = vld [vmem:[%s276 + $0xb68] sm:$0xff]
        %v727 = vld [vmem:[%s276 + $0xb70] sm:$0xff]
        %v728 = vld [vmem:[%s276 + $0xb78] sm:$0xff]
        %v729 = vld [vmem:[%s276 + $0xb80] sm:$0xff]
        %v730 = vld [vmem:[%s276 + $0xb88] sm:$0xff]
        %v731 = vld [vmem:[%s276 + $0xb90] sm:$0xff]
        %v732 = vld [vmem:[%s276 + $0xb98] sm:$0xff]
        %v733 = vld [vmem:[%s276 + $0xba0] sm:$0xff]
        %v734 = vld [vmem:[%s276 + $0xba8] sm:$0xff]
        %v735 = vld [vmem:[%s276 + $0xbb0] sm:$0xff]
        %v736 = vld [vmem:[%s276 + $0xbb8] sm:$0xff]
        %v737 = vld [vmem:[%s276 + $0xbc0] sm:$0xff]
        %v738 = vld [vmem:[%s276 + $0xbc8] sm:$0xff]
        %v739 = vld [vmem:[%s276 + $0xbd0] sm:$0xff]
        %v740 = vld [vmem:[%s276 + $0xbd8] sm:$0xff]
        %v741 = vld [vmem:[%s276 + $0xbe0] sm:$0xff]
        %v742 = vld [vmem:[%s276 + $0xbe8] sm:$0xff]
        %v743 = vld [vmem:[%s276 + $0xbf0] sm:$0xff]
        %v744 = vld [vmem:[%s276 + $0xbf8] sm:$0xff]
        %v745 = vld [vmem:[%s276 + $0xc00] sm:$0xff]
        %v746 = vld [vmem:[%s276 + $0xc08] sm:$0xff]
        %v747 = vld [vmem:[%s276 + $0xc10] sm:$0xff]
        %v748 = vld [vmem:[%s276 + $0xc18] sm:$0xff]
        %v749 = vld [vmem:[%s276 + $0xc20] sm:$0xff]
        %v750 = vld [vmem:[%s276 + $0xc28] sm:$0xff]
        %v751 = vld [vmem:[%s276 + $0xc30] sm:$0xff]
        %v752 = vld [vmem:[%s276 + $0xc38] sm:$0xff]
        %v753 = vld [vmem:[%s276 + $0xc40] sm:$0xff]
        %v754 = vld [vmem:[%s276 + $0xc48] sm:$0xff]
        %v755 = vld [vmem:[%s276 + $0xc50] sm:$0xff]
        %v756 = vld [vmem:[%s276 + $0xc58] sm:$0xff]
        %v757 = vld [vmem:[%s276 + $0xc60] sm:$0xff]
        %v758 = vld [vmem:[%s276 + $0xc68] sm:$0xff]
        %v759 = vld [vmem:[%s276 + $0xc70] sm:$0xff]
        %v760 = vld [vmem:[%s276 + $0xc78] sm:$0xff]
        %v761 = vld [vmem:[%s276 + $0xc80] sm:$0xff]
        %v762 = vld [vmem:[%s276 + $0xc88] sm:$0xff]
        %v763 = vld [vmem:[%s276 + $0xc90] sm:$0xff]
        %v764 = vld [vmem:[%s276 + $0xc98] sm:$0xff]
        %v765 = vld [vmem:[%s276 + $0xca0] sm:$0xff]
        %v766 = vld [vmem:[%s276 + $0xca8] sm:$0xff]
        %v767 = vld [vmem:[%s276 + $0xcb0] sm:$0xff]
        %v768 = vld [vmem:[%s276 + $0xcb8] sm:$0xff]
        %v769 = vld [vmem:[%s276 + $0xcc0] sm:$0xff]
        %v770 = vld [vmem:[%s276 + $0xcc8] sm:$0xff]
        %v771 = vld [vmem:[%s276 + $0xcd0] sm:$0xff]
        %v772 = vld [vmem:[%s276 + $0xcd8] sm:$0xff]
        %v773 = vld [vmem:[%s276 + $0xce0] sm:$0xff]
        %v774 = vld [vmem:[%s276 + $0xce8] sm:$0xff]
        %v775 = vld [vmem:[%s276 + $0xcf0] sm:$0xff]
        %v776 = vld [vmem:[%s276 + $0xcf8] sm:$0xff]
        %v777 = vld [vmem:[%s276 + $0xd00] sm:$0xff]
        %v778 = vld [vmem:[%s276 + $0xd08] sm:$0xff]
        %v779 = vld [vmem:[%s276 + $0xd10] sm:$0xff]
        %v780 = vld [vmem:[%s276 + $0xd18] sm:$0xff]
        %v781 = vld [vmem:[%s276 + $0xd20] sm:$0xff]
        %v782 = vld [vmem:[%s276 + $0xd28] sm:$0xff]
        %v783 = vld [vmem:[%s276 + $0xd30] sm:$0xff]
        %v784 = vld [vmem:[%s276 + $0xd38] sm:$0xff]
        %v785 = vld [vmem:[%s276 + $0xd40] sm:$0xff]
        %v786 = vld [vmem:[%s276 + $0xd48] sm:$0xff]
        %v787 = vld [vmem:[%s276 + $0xd50] sm:$0xff]
        %v788 = vld [vmem:[%s276 + $0xd58] sm:$0xff]
        %v789 = vld [vmem:[%s276 + $0xd60] sm:$0xff]
        %v790 = vld [vmem:[%s276 + $0xd68] sm:$0xff]
        %v791 = vld [vmem:[%s276 + $0xd70] sm:$0xff]
        %v792 = vld [vmem:[%s276 + $0xd78] sm:$0xff]
        %v793 = vld [vmem:[%s276 + $0xd80] sm:$0xff]
        %v794 = vld [vmem:[%s276 + $0xd88] sm:$0xff]
        %v795 = vld [vmem:[%s276 + $0xd90] sm:$0xff]
        %v796 = vld [vmem:[%s276 + $0xd98] sm:$0xff]
        %v797 = vld [vmem:[%s276 + $0xda0] sm:$0xff]
        %v798 = vld [vmem:[%s276 + $0xda8] sm:$0xff]
        %v799 = vld [vmem:[%s276 + $0xdb0] sm:$0xff]
        %v800 = vld [vmem:[%s276 + $0xdb8] sm:$0xff]
        %v801 = vld [vmem:[%s276 + $0xdc0] sm:$0xff]
        %v802 = vld [vmem:[%s276 + $0xdc8] sm:$0xff]
        %v803 = vld [vmem:[%s276 + $0xdd0] sm:$0xff]
        %v804 = vld [vmem:[%s276 + $0xdd8] sm:$0xff]
        %v805 = vld [vmem:[%s276 + $0xde0] sm:$0xff]
        %v806 = vld [vmem:[%s276 + $0xde8] sm:$0xff]
        %v807 = vld [vmem:[%s276 + $0xdf0] sm:$0xff]
        %v808 = vld [vmem:[%s276 + $0xdf8] sm:$0xff]
        %v809 = vld [vmem:[%s276 + $0xe00] sm:$0xff]
        %v810 = vld [vmem:[%s276 + $0xe08] sm:$0xff]
        %v811 = vld [vmem:[%s276 + $0xe10] sm:$0xff]
        %v812 = vld [vmem:[%s276 + $0xe18] sm:$0xff]
        %v813 = vld [vmem:[%s276 + $0xe20] sm:$0xff]
        %v814 = vld [vmem:[%s276 + $0xe28] sm:$0xff]
        %v815 = vld [vmem:[%s276 + $0xe30] sm:$0xff]
        %v816 = vld [vmem:[%s276 + $0xe38] sm:$0xff]
        %v817 = vld [vmem:[%s276 + $0xe40] sm:$0xff]
        %v818 = vld [vmem:[%s276 + $0xe48] sm:$0xff]
        %v819 = vld [vmem:[%s276 + $0xe50] sm:$0xff]
        %v820 = vld [vmem:[%s276 + $0xe58] sm:$0xff]
        %v821 = vld [vmem:[%s276 + $0xe60] sm:$0xff]
        %v822 = vld [vmem:[%s276 + $0xe68] sm:$0xff]
        %v823 = vld [vmem:[%s276 + $0xe70] sm:$0xff]
        %v824 = vld [vmem:[%s276 + $0xe78] sm:$0xff]
        %v825 = vld [vmem:[%s276 + $0xe80] sm:$0xff]
        %v826 = vld [vmem:[%s276 + $0xe88] sm:$0xff]
        %v827 = vld [vmem:[%s276 + $0xe90] sm:$0xff]
        %v828 = vld [vmem:[%s276 + $0xe98] sm:$0xff]
        %v829 = vld [vmem:[%s276 + $0xea0] sm:$0xff]
        %v830 = vld [vmem:[%s276 + $0xea8] sm:$0xff]
        %v831 = vld [vmem:[%s276 + $0xeb0] sm:$0xff]
        %v832 = vld [vmem:[%s276 + $0xeb8] sm:$0xff]
        %v833 = vld [vmem:[%s276 + $0xec0] sm:$0xff]
        %v834 = vld [vmem:[%s276 + $0xec8] sm:$0xff]
        %v835 = vld [vmem:[%s276 + $0xed0] sm:$0xff]
        %v836 = vld [vmem:[%s276 + $0xed8] sm:$0xff]
        %v837 = vld [vmem:[%s276 + $0xee0] sm:$0xff]
        %v838 = vld [vmem:[%s276 + $0xee8] sm:$0xff]
        %v839 = vld [vmem:[%s276 + $0xef0] sm:$0xff]
        %v840 = vld [vmem:[%s276 + $0xef8] sm:$0xff]
        %v841 = vld [vmem:[%s276 + $0xf00] sm:$0xff]
        %v842 = vld [vmem:[%s276 + $0xf08] sm:$0xff]
        %v843 = vld [vmem:[%s276 + $0xf10] sm:$0xff]
        %v844 = vld [vmem:[%s276 + $0xf18] sm:$0xff]
        %v845 = vld [vmem:[%s276 + $0xf20] sm:$0xff]
        %v846 = vld [vmem:[%s276 + $0xf28] sm:$0xff]
        %v847 = vld [vmem:[%s276 + $0xf30] sm:$0xff]
        %v848 = vld [vmem:[%s276 + $0xf38] sm:$0xff]
        %v849 = vld [vmem:[%s276 + $0xf40] sm:$0xff]
        %v850 = vld [vmem:[%s276 + $0xf48] sm:$0xff]
        %v851 = vld [vmem:[%s276 + $0xf50] sm:$0xff]
        %v852 = vld [vmem:[%s276 + $0xf58] sm:$0xff]
        %v853 = vld [vmem:[%s276 + $0xf60] sm:$0xff]
        %v854 = vld [vmem:[%s276 + $0xf68] sm:$0xff]
        %v855 = vld [vmem:[%s276 + $0xf70] sm:$0xff]
        %v856 = vld [vmem:[%s276 + $0xf78] sm:$0xff]
        %v857 = vld [vmem:[%s276 + $0xf80] sm:$0xff]
        %v858 = vld [vmem:[%s276 + $0xf88] sm:$0xff]
        %v859 = vld [vmem:[%s276 + $0xf90] sm:$0xff]
        %v860 = vld [vmem:[%s276 + $0xf98] sm:$0xff]
        %v861 = vld [vmem:[%s276 + $0xfa0] sm:$0xff]
        %v862 = vld [vmem:[%s276 + $0xfa8] sm:$0xff]
        %v863 = vld [vmem:[%s276 + $0xfb0] sm:$0xff]
        %v864 = vld [vmem:[%s276 + $0xfb8] sm:$0xff]
        %v865 = vld [vmem:[%s276 + $0xfc0] sm:$0xff]
        %v866 = vld [vmem:[%s276 + $0xfc8] sm:$0xff]
        %v867 = vld [vmem:[%s276 + $0xfd0] sm:$0xff]
        %v868 = vld [vmem:[%s276 + $0xfd8] sm:$0xff]
        %v869 = vld [vmem:[%s276 + $0xfe0] sm:$0xff]
        %v870 = vld [vmem:[%s276 + $0xfe8] sm:$0xff]
        %v871 = vld [vmem:[%s276 + $0xff0] sm:$0xff]
        %v872 = vld [vmem:[%s276 + $0xff8] sm:$0xff]
        %v873 = vld [vmem:[%s276 + $0x1000] sm:$0xff]
        %v874 = vld [vmem:[%s276 + $0x1008] sm:$0xff]
        %v875 = vld [vmem:[%s276 + $0x1010] sm:$0xff]
        %v876 = vld [vmem:[%s276 + $0x1018] sm:$0xff]
        %v877 = vld [vmem:[%s276 + $0x1020] sm:$0xff]
        %v878 = vld [vmem:[%s276 + $0x1028] sm:$0xff]
        %v879 = vld [vmem:[%s276 + $0x1030] sm:$0xff]
        %v880 = vld [vmem:[%s276 + $0x1038] sm:$0xff]
        %v881 = vld [vmem:[%s276 + $0x1040] sm:$0xff]
        %v882 = vld [vmem:[%s276 + $0x1048] sm:$0xff]
        %v883 = vld [vmem:[%s276 + $0x1050] sm:$0xff]
        %v884 = vld [vmem:[%s276 + $0x1058] sm:$0xff]
        %v885 = vld [vmem:[%s276 + $0x1060] sm:$0xff]
        %v886 = vld [vmem:[%s276 + $0x1068] sm:$0xff]
        %v887 = vld [vmem:[%s276 + $0x1070] sm:$0xff]
        %v888 = vld [vmem:[%s276 + $0x1078] sm:$0xff]
        %v889 = vld [vmem:[%s276 + $0x1080] sm:$0xff]
        %v890 = vld [vmem:[%s276 + $0x1088] sm:$0xff]
        %v891 = vld [vmem:[%s276 + $0x1090] sm:$0xff]
        %v892 = vld [vmem:[%s276 + $0x1098] sm:$0xff]
        %v893 = vld [vmem:[%s276 + $0x10a0] sm:$0xff]
        %v894 = vld [vmem:[%s276 + $0x10a8] sm:$0xff]
        %v895 = vld [vmem:[%s276 + $0x10b0] sm:$0xff]
        %v896 = vld [vmem:[%s276 + $0x10b8] sm:$0xff]
        %v897 = vld [vmem:[%s276 + $0x10c0] sm:$0xff]
        %v898 = vld [vmem:[%s276 + $0x10c8] sm:$0xff]
        %v899 = vld [vmem:[%s276 + $0x10d0] sm:$0xff]
        %v900 = vld [vmem:[%s276 + $0x10d8] sm:$0xff]
        %v901 = vld [vmem:[%s276 + $0x10e0] sm:$0xff]
        %v902 = vld [vmem:[%s276 + $0x10e8] sm:$0xff]
        %v903 = vld [vmem:[%s276 + $0x10f0] sm:$0xff]
        %v904 = vld [vmem:[%s276 + $0x10f8] sm:$0xff]
        %v905 = vld [vmem:[%s276 + $0x1100] sm:$0xff]
        %v906 = vld [vmem:[%s276 + $0x1108] sm:$0xff]
        %v907 = vld [vmem:[%s276 + $0x1110] sm:$0xff]
        %v908 = vld [vmem:[%s276 + $0x1118] sm:$0xff]
        %v909 = vld [vmem:[%s276 + $0x1120] sm:$0xff]
        %v910 = vld [vmem:[%s276 + $0x1128] sm:$0xff]
        %v911 = vld [vmem:[%s276 + $0x1130] sm:$0xff]
        %v912 = vld [vmem:[%s276 + $0x1138] sm:$0xff]
        %v913 = vld [vmem:[%s276 + $0x1140] sm:$0xff]
        %v914 = vld [vmem:[%s276 + $0x1148] sm:$0xff]
        %v915 = vld [vmem:[%s276 + $0x1150] sm:$0xff]
        %v916 = vld [vmem:[%s276 + $0x1158] sm:$0xff]
        %v917 = vld [vmem:[%s276 + $0x1160] sm:$0xff]
        %v918 = vld [vmem:[%s276 + $0x1168] sm:$0xff]
        %v919 = vld [vmem:[%s276 + $0x1170] sm:$0xff]
        %v920 = vld [vmem:[%s276 + $0x1178] sm:$0xff]
        %v921 = vld [vmem:[%s276 + $0x1180] sm:$0xff]
        %v922 = vld [vmem:[%s276 + $0x1188] sm:$0xff]
        %v923 = vld [vmem:[%s276 + $0x1190] sm:$0xff]
        %v924 = vld [vmem:[%s276 + $0x1198] sm:$0xff]
        %v925 = vld [vmem:[%s276 + $0x11a0] sm:$0xff]
        %v926 = vld [vmem:[%s276 + $0x11a8] sm:$0xff]
        %v927 = vld [vmem:[%s276 + $0x11b0] sm:$0xff]
        %v928 = vld [vmem:[%s276 + $0x11b8] sm:$0xff]
        %v929 = vld [vmem:[%s276 + $0x11c0] sm:$0xff]
        %v930 = vld [vmem:[%s276 + $0x11c8] sm:$0xff]
        %v931 = vld [vmem:[%s276 + $0x11d0] sm:$0xff]
        %v932 = vld [vmem:[%s276 + $0x11d8] sm:$0xff]
        %v933 = vld [vmem:[%s276 + $0x11e0] sm:$0xff]
        %v934 = vld [vmem:[%s276 + $0x11e8] sm:$0xff]
        %v935 = vld [vmem:[%s276 + $0x11f0] sm:$0xff]
        %v936 = vld [vmem:[%s276 + $0x11f8] sm:$0xff]
        %v937 = vld [vmem:[%s276 + $0x1200] sm:$0xff]
        %v938 = vld [vmem:[%s276 + $0x1208] sm:$0xff]
        %v939 = vld [vmem:[%s276 + $0x1210] sm:$0xff]
        %v940 = vld [vmem:[%s276 + $0x1218] sm:$0xff]
        %v941 = vld [vmem:[%s276 + $0x1220] sm:$0xff]
        %v942 = vld [vmem:[%s276 + $0x1228] sm:$0xff]
        %v943 = vld [vmem:[%s276 + $0x1230] sm:$0xff]
        %v944 = vld [vmem:[%s276 + $0x1238] sm:$0xff]
        %v945 = vld [vmem:[%s276 + $0x1240] sm:$0xff]
        %v946 = vld [vmem:[%s276 + $0x1248] sm:$0xff]
        %v947 = vld [vmem:[%s276 + $0x1250] sm:$0xff]
        %v948 = vld [vmem:[%s276 + $0x1258] sm:$0xff]
        %v949 = vld [vmem:[%s276 + $0x1260] sm:$0xff]
        %v950 = vld [vmem:[%s276 + $0x1268] sm:$0xff]
        %v951 = vld [vmem:[%s276 + $0x1270] sm:$0xff]
        %v952 = vld [vmem:[%s276 + $0x1278] sm:$0xff]
        %v953 = vld [vmem:[%s276 + $0x1280] sm:$0xff]
        %v954 = vld [vmem:[%s276 + $0x1288] sm:$0xff]
        %v955 = vld [vmem:[%s276 + $0x1290] sm:$0xff]
        %v956 = vld [vmem:[%s276 + $0x1298] sm:$0xff]
        %v957 = vld [vmem:[%s276 + $0x12a0] sm:$0xff]
        %v958 = vld [vmem:[%s276 + $0x12a8] sm:$0xff]
        %v959 = vld [vmem:[%s276 + $0x12b0] sm:$0xff]
        %v960 = vld [vmem:[%s276 + $0x12b8] sm:$0xff]
        %v961 = vld [vmem:[%s276 + $0x12c0] sm:$0xff]
        %v962 = vld [vmem:[%s276 + $0x12c8] sm:$0xff]
        %v963 = vld [vmem:[%s276 + $0x12d0] sm:$0xff]
        %v964 = vld [vmem:[%s276 + $0x12d8] sm:$0xff]
        %v965 = vld [vmem:[%s276 + $0x12e0] sm:$0xff]
        %v966 = vld [vmem:[%s276 + $0x12e8] sm:$0xff]
        %v967 = vld [vmem:[%s276 + $0x12f0] sm:$0xff]
        %v968 = vld [vmem:[%s276 + $0x12f8] sm:$0xff]
        %v969 = vld [vmem:[%s276 + $0x1300] sm:$0xff]
        %v970 = vld [vmem:[%s276 + $0x1308] sm:$0xff]
        %v971 = vld [vmem:[%s276 + $0x1310] sm:$0xff]
        %v972 = vld [vmem:[%s276 + $0x1318] sm:$0xff]
        %v973 = vld [vmem:[%s276 + $0x1320] sm:$0xff]
        %v974 = vld [vmem:[%s276 + $0x1328] sm:$0xff]
        %v975 = vld [vmem:[%s276 + $0x1330] sm:$0xff]
        %v976 = vld [vmem:[%s276 + $0x1338] sm:$0xff]
        %v977 = vld [vmem:[%s276 + $0x1340] sm:$0xff]
        %v978 = vld [vmem:[%s276 + $0x1348] sm:$0xff]
        %v979 = vld [vmem:[%s276 + $0x1350] sm:$0xff]
        %v980 = vld [vmem:[%s276 + $0x1358] sm:$0xff]
        %v981 = vld [vmem:[%s276 + $0x1360] sm:$0xff]
        %v982 = vld [vmem:[%s276 + $0x1368] sm:$0xff]
        %v983 = vld [vmem:[%s276 + $0x1370] sm:$0xff]
        %v984 = vld [vmem:[%s276 + $0x1378] sm:$0xff]
        %v985 = vld [vmem:[%s276 + $0x1380] sm:$0xff]
        %v986 = vld [vmem:[%s276 + $0x1388] sm:$0xff]
        %v987 = vld [vmem:[%s276 + $0x1390] sm:$0xff]
        %v988 = vld [vmem:[%s276 + $0x1398] sm:$0xff]
        %v989 = vld [vmem:[%s276 + $0x13a0] sm:$0xff]
        %v990 = vld [vmem:[%s276 + $0x13a8] sm:$0xff]
        %v991 = vld [vmem:[%s276 + $0x13b0] sm:$0xff]
        %v992 = vld [vmem:[%s276 + $0x13b8] sm:$0xff]
        %v993 = vld [vmem:[%s276 + $0x13c0] sm:$0xff]
        %v994 = vld [vmem:[%s276 + $0x13c8] sm:$0xff]
        %v995 = vld [vmem:[%s276 + $0x13d0] sm:$0xff]
        %v996 = vld [vmem:[%s276 + $0x13d8] sm:$0xff]
        %v997 = vld [vmem:[%s276 + $0x13e0] sm:$0xff]
        %v998 = vld [vmem:[%s276 + $0x13e8] sm:$0xff]
        %v999 = vld [vmem:[%s276 + $0x13f0] sm:$0xff]
        %v1000 = vld [vmem:[%s276 + $0x13f8] sm:$0xff]
        %v1001 = vld [vmem:[%s276 + $0x1400] sm:$0xff]
        %v1002 = vld [vmem:[%s276 + $0x1408] sm:$0xff]
        %v1003 = vld [vmem:[%s276 + $0x1410] sm:$0xff]
        %v1004 = vld [vmem:[%s276 + $0x1418] sm:$0xff]
        %v1005 = vld [vmem:[%s276 + $0x1420] sm:$0xff]
        %v1006 = vld [vmem:[%s276 + $0x1428] sm:$0xff]
        %v1007 = vld [vmem:[%s276 + $0x1430] sm:$0xff]
        %v1008 = vld [vmem:[%s276 + $0x1438] sm:$0xff]
        %v1009 = vld [vmem:[%s276 + $0x1440] sm:$0xff]
        %v1010 = vld [vmem:[%s276 + $0x1448] sm:$0xff]
        %v1011 = vld [vmem:[%s276 + $0x1450] sm:$0xff]
        %v1012 = vld [vmem:[%s276 + $0x1458] sm:$0xff]
        %v1013 = vld [vmem:[%s276 + $0x1460] sm:$0xff]
        %v1014 = vld [vmem:[%s276 + $0x1468] sm:$0xff]
        %v1015 = vld [vmem:[%s276 + $0x1470] sm:$0xff]
        %v1016 = vld [vmem:[%s276 + $0x1478] sm:$0xff]
        %v1017 = vld [vmem:[%s276 + $0x1480] sm:$0xff]
        %v1018 = vld [vmem:[%s276 + $0x1488] sm:$0xff]
        %v1019 = vld [vmem:[%s276 + $0x1490] sm:$0xff]
        %v1020 = vld [vmem:[%s276 + $0x1498] sm:$0xff]
        %v1021 = vld [vmem:[%s276 + $0x14a0] sm:$0xff]
        %v1022 = vld [vmem:[%s276 + $0x14a8] sm:$0xff]
        %v1023 = vld [vmem:[%s276 + $0x14b0] sm:$0xff]
        %v1024 = vld [vmem:[%s276 + $0x14b8] sm:$0xff]
        %v1025 = vld [vmem:[%s276 + $0x14c0] sm:$0xff]
        %v1026 = vld [vmem:[%s276 + $0x14c8] sm:$0xff]
        %v1027 = vld [vmem:[%s276 + $0x14d0] sm:$0xff]
        %v1028 = vld [vmem:[%s276 + $0x14d8] sm:$0xff]
        %v1029 = vld [vmem:[%s276 + $0x14e0] sm:$0xff]
        %v1030 = vld [vmem:[%s276 + $0x14e8] sm:$0xff]
        %v1031 = vld [vmem:[%s276 + $0x14f0] sm:$0xff]
        %v1032 = vld [vmem:[%s276 + $0x14f8] sm:$0xff]
        %v1033 = vld [vmem:[%s276 + $0x1500] sm:$0xff]
        %v1034 = vld [vmem:[%s276 + $0x1508] sm:$0xff]
        %v1035 = vld [vmem:[%s276 + $0x1510] sm:$0xff]
        %v1036 = vld [vmem:[%s276 + $0x1518] sm:$0xff]
        %v1037 = vld [vmem:[%s276 + $0x1520] sm:$0xff]
        %v1038 = vld [vmem:[%s276 + $0x1528] sm:$0xff]
        %v1039 = vld [vmem:[%s276 + $0x1530] sm:$0xff]
        %v1040 = vld [vmem:[%s276 + $0x1538] sm:$0xff]
        %v1041 = vld [vmem:[%s276 + $0x1540] sm:$0xff]
        %v1042 = vld [vmem:[%s276 + $0x1548] sm:$0xff]
        %v1043 = vld [vmem:[%s276 + $0x1550] sm:$0xff]
        %v1044 = vld [vmem:[%s276 + $0x1558] sm:$0xff]
        %v1045 = vld [vmem:[%s276 + $0x1560] sm:$0xff]
        %v1046 = vld [vmem:[%s276 + $0x1568] sm:$0xff]
        %v1047 = vld [vmem:[%s276 + $0x1570] sm:$0xff]
        %v1048 = vld [vmem:[%s276 + $0x1578] sm:$0xff]
        %v1049 = vld [vmem:[%s276 + $0x1580] sm:$0xff]
        %v1050 = vld [vmem:[%s276 + $0x1588] sm:$0xff]
        %v1051 = vld [vmem:[%s276 + $0x1590] sm:$0xff]
        %v1052 = vld [vmem:[%s276 + $0x1598] sm:$0xff]
        %v1053 = vld [vmem:[%s276 + $0x15a0] sm:$0xff]
        %v1054 = vld [vmem:[%s276 + $0x15a8] sm:$0xff]
        %v1055 = vld [vmem:[%s276 + $0x15b0] sm:$0xff]
        %v1056 = vld [vmem:[%s276 + $0x15b8] sm:$0xff]
        %v1057 = vld [vmem:[%s276 + $0x15c0] sm:$0xff]
        %v1058 = vld [vmem:[%s276 + $0x15c8] sm:$0xff]
        %v1059 = vld [vmem:[%s276 + $0x15d0] sm:$0xff]
        %v1060 = vld [vmem:[%s276 + $0x15d8] sm:$0xff]
        %v1061 = vld [vmem:[%s276 + $0x15e0] sm:$0xff]
        %v1062 = vld [vmem:[%s276 + $0x15e8] sm:$0xff]
        %v1063 = vld [vmem:[%s276 + $0x15f0] sm:$0xff]
        %v1064 = vld [vmem:[%s276 + $0x15f8] sm:$0xff]
        %v1065 = vld [vmem:[%s276 + $0x1600] sm:$0xff]
        %v1066 = vld [vmem:[%s276 + $0x1608] sm:$0xff]
        %v1067 = vld [vmem:[%s276 + $0x1610] sm:$0xff]
        %v1068 = vld [vmem:[%s276 + $0x1618] sm:$0xff]
        %v1069 = vld [vmem:[%s276 + $0x1620] sm:$0xff]
        %v1070 = vld [vmem:[%s276 + $0x1628] sm:$0xff]
        %v1071 = vld [vmem:[%s276 + $0x1630] sm:$0xff]
        %v1072 = vld [vmem:[%s276 + $0x1638] sm:$0xff]
        %v1073 = vld [vmem:[%s276 + $0x1640] sm:$0xff]
        %v1074 = vld [vmem:[%s276 + $0x1648] sm:$0xff]
        %v1075 = vld [vmem:[%s276 + $0x1650] sm:$0xff]
        %v1076 = vld [vmem:[%s276 + $0x1658] sm:$0xff]
        %v1077 = vld [vmem:[%s276 + $0x1660] sm:$0xff]
        %v1078 = vld [vmem:[%s276 + $0x1668] sm:$0xff]
        %v1079 = vld [vmem:[%s276 + $0x1670] sm:$0xff]
        %v1080 = vld [vmem:[%s276 + $0x1678] sm:$0xff]
        %v1081 = vld [vmem:[%s276 + $0x1680] sm:$0xff]
        %v1082 = vld [vmem:[%s276 + $0x1688] sm:$0xff]
        %v1083 = vld [vmem:[%s276 + $0x1690] sm:$0xff]
        %v1084 = vld [vmem:[%s276 + $0x1698] sm:$0xff]
        %v1085 = vld [vmem:[%s276 + $0x16a0] sm:$0xff]
        %v1086 = vld [vmem:[%s276 + $0x16a8] sm:$0xff]
        %v1087 = vld [vmem:[%s276 + $0x16b0] sm:$0xff]
        %v1088 = vld [vmem:[%s276 + $0x16b8] sm:$0xff]
        %v1089 = vld [vmem:[%s276 + $0x16c0] sm:$0xff]
        %v1090 = vld [vmem:[%s276 + $0x16c8] sm:$0xff]
        %v1091 = vld [vmem:[%s276 + $0x16d0] sm:$0xff]
        %v1092 = vld [vmem:[%s276 + $0x16d8] sm:$0xff]
        %v1093 = vld [vmem:[%s276 + $0x16e0] sm:$0xff]
        %v1094 = vld [vmem:[%s276 + $0x16e8] sm:$0xff]
        %v1095 = vld [vmem:[%s276 + $0x16f0] sm:$0xff]
        %v1096 = vld [vmem:[%s276 + $0x16f8] sm:$0xff]
        %v1097 = vld [vmem:[%s276 + $0x1700] sm:$0xff]
        %v1098 = vld [vmem:[%s276 + $0x1708] sm:$0xff]
        %v1099 = vld [vmem:[%s276 + $0x1710] sm:$0xff]
        %v1100 = vld [vmem:[%s276 + $0x1718] sm:$0xff]
        %v1101 = vld [vmem:[%s276 + $0x1720] sm:$0xff]
        %v1102 = vld [vmem:[%s276 + $0x1728] sm:$0xff]
        %v1103 = vld [vmem:[%s276 + $0x1730] sm:$0xff]
        %v1104 = vld [vmem:[%s276 + $0x1738] sm:$0xff]
        %v1105 = vld [vmem:[%s276 + $0x1740] sm:$0xff]
        %v1106 = vld [vmem:[%s276 + $0x1748] sm:$0xff]
        %v1107 = vld [vmem:[%s276 + $0x1750] sm:$0xff]
        %v1108 = vld [vmem:[%s276 + $0x1758] sm:$0xff]
        %v1109 = vld [vmem:[%s276 + $0x1760] sm:$0xff]
        %v1110 = vld [vmem:[%s276 + $0x1768] sm:$0xff]
        %v1111 = vld [vmem:[%s276 + $0x1770] sm:$0xff]
        %v1112 = vld [vmem:[%s276 + $0x1778] sm:$0xff]
        %v1113 = vld [vmem:[%s276 + $0x1780] sm:$0xff]
        %v1114 = vld [vmem:[%s276 + $0x1788] sm:$0xff]
        %v1115 = vld [vmem:[%s276 + $0x1790] sm:$0xff]
        %v1116 = vld [vmem:[%s276 + $0x1798] sm:$0xff]
        %v1117 = vld [vmem:[%s276 + $0x17a0] sm:$0xff]
        %v1118 = vld [vmem:[%s276 + $0x17a8] sm:$0xff]
        %v1119 = vld [vmem:[%s276 + $0x17b0] sm:$0xff]
        %v1120 = vld [vmem:[%s276 + $0x17b8] sm:$0xff]
        %v1121 = vld [vmem:[%s276 + $0x17c0] sm:$0xff]
        %v1122 = vld [vmem:[%s276 + $0x17c8] sm:$0xff]
        %v1123 = vld [vmem:[%s276 + $0x17d0] sm:$0xff]
        %v1124 = vld [vmem:[%s276 + $0x17d8] sm:$0xff]
        %v1125 = vld [vmem:[%s276 + $0x17e0] sm:$0xff]
        %v1126 = vld [vmem:[%s276 + $0x17e8] sm:$0xff]
        %v1127 = vld [vmem:[%s276 + $0x17f0] sm:$0xff]
        %v1128 = vld [vmem:[%s276 + $0x17f8] sm:$0xff]
        %v1129 = vld [vmem:[%s276 + $0x1800] sm:$0xff]
        %v1130 = vld [vmem:[%s276 + $0x1808] sm:$0xff]
        %v1131 = vld [vmem:[%s276 + $0x1810] sm:$0xff]
        %v1132 = vld [vmem:[%s276 + $0x1818] sm:$0xff]
        %v1133 = vld [vmem:[%s276 + $0x1820] sm:$0xff]
        %v1134 = vld [vmem:[%s276 + $0x1828] sm:$0xff]
        %v1135 = vld [vmem:[%s276 + $0x1830] sm:$0xff]
        %v1136 = vld [vmem:[%s276 + $0x1838] sm:$0xff]
        %v1137 = vld [vmem:[%s276 + $0x1840] sm:$0xff]
        %v1138 = vld [vmem:[%s276 + $0x1848] sm:$0xff]
        %v1139 = vld [vmem:[%s276 + $0x1850] sm:$0xff]
        %v1140 = vld [vmem:[%s276 + $0x1858] sm:$0xff]
        %v1141 = vld [vmem:[%s276 + $0x1860] sm:$0xff]
        %v1142 = vld [vmem:[%s276 + $0x1868] sm:$0xff]
        %v1143 = vld [vmem:[%s276 + $0x1870] sm:$0xff]
        %v1144 = vld [vmem:[%s276 + $0x1878] sm:$0xff]
        %v1145 = vld [vmem:[%s276 + $0x1880] sm:$0xff]
        %v1146 = vld [vmem:[%s276 + $0x1888] sm:$0xff]
        %v1147 = vld [vmem:[%s276 + $0x1890] sm:$0xff]
        %v1148 = vld [vmem:[%s276 + $0x1898] sm:$0xff]
        %v1149 = vld [vmem:[%s276 + $0x18a0] sm:$0xff]
        %v1150 = vld [vmem:[%s276 + $0x18a8] sm:$0xff]
        %v1151 = vld [vmem:[%s276 + $0x18b0] sm:$0xff]
        %v1152 = vld [vmem:[%s276 + $0x18b8] sm:$0xff]
        %v1153 = vld [vmem:[%s276 + $0x18c0] sm:$0xff]
        %v1154 = vld [vmem:[%s276 + $0x18c8] sm:$0xff]
        %v1155 = vld [vmem:[%s276 + $0x18d0] sm:$0xff]
        %v1156 = vld [vmem:[%s276 + $0x18d8] sm:$0xff]
        %v1157 = vld [vmem:[%s276 + $0x18e0] sm:$0xff]
        %v1158 = vld [vmem:[%s276 + $0x18e8] sm:$0xff]
        %v1159 = vld [vmem:[%s276 + $0x18f0] sm:$0xff]
        %v1160 = vld [vmem:[%s276 + $0x18f8] sm:$0xff]
        %v1161 = vld [vmem:[%s276 + $0x1900] sm:$0xff]
        %v1162 = vld [vmem:[%s276 + $0x1908] sm:$0xff]
        %v1163 = vld [vmem:[%s276 + $0x1910] sm:$0xff]
        %v1164 = vld [vmem:[%s276 + $0x1918] sm:$0xff]
        %v1165 = vld [vmem:[%s276 + $0x1920] sm:$0xff]
        %v1166 = vld [vmem:[%s276 + $0x1928] sm:$0xff]
        %v1167 = vld [vmem:[%s276 + $0x1930] sm:$0xff]
        %v1168 = vld [vmem:[%s276 + $0x1938] sm:$0xff]
        %v1169 = vld [vmem:[%s276 + $0x1940] sm:$0xff]
        %v1170 = vld [vmem:[%s276 + $0x1948] sm:$0xff]
        %v1171 = vld [vmem:[%s276 + $0x1950] sm:$0xff]
        %v1172 = vld [vmem:[%s276 + $0x1958] sm:$0xff]
        %v1173 = vld [vmem:[%s276 + $0x1960] sm:$0xff]
        %v1174 = vld [vmem:[%s276 + $0x1968] sm:$0xff]
        %v1175 = vld [vmem:[%s276 + $0x1970] sm:$0xff]
        %v1176 = vld [vmem:[%s276 + $0x1978] sm:$0xff]
        %v1177 = vld [vmem:[%s276 + $0x1980] sm:$0xff]
        %v1178 = vld [vmem:[%s276 + $0x1988] sm:$0xff]
        %v1179 = vld [vmem:[%s276 + $0x1990] sm:$0xff]
        %v1180 = vld [vmem:[%s276 + $0x1998] sm:$0xff]
        %v1181 = vld [vmem:[%s276 + $0x19a0] sm:$0xff]
        %v1182 = vld [vmem:[%s276 + $0x19a8] sm:$0xff]
        %v1183 = vld [vmem:[%s276 + $0x19b0] sm:$0xff]
        %v1184 = vld [vmem:[%s276 + $0x19b8] sm:$0xff]
        %v1185 = vld [vmem:[%s276 + $0x19c0] sm:$0xff]
        %v1186 = vld [vmem:[%s276 + $0x19c8] sm:$0xff]
        %v1187 = vld [vmem:[%s276 + $0x19d0] sm:$0xff]
        %v1188 = vld [vmem:[%s276 + $0x19d8] sm:$0xff]
        %v1189 = vld [vmem:[%s276 + $0x19e0] sm:$0xff]
        %v1190 = vld [vmem:[%s276 + $0x19e8] sm:$0xff]
        %v1191 = vld [vmem:[%s276 + $0x19f0] sm:$0xff]
        %v1192 = vld [vmem:[%s276 + $0x19f8] sm:$0xff]
        %v1193 = vld [vmem:[%s276 + $0x1a00] sm:$0xff]
        %v1194 = vld [vmem:[%s276 + $0x1a08] sm:$0xff]
        %v1195 = vld [vmem:[%s276 + $0x1a10] sm:$0xff]
        %v1196 = vld [vmem:[%s276 + $0x1a18] sm:$0xff]
        %v1197 = vld [vmem:[%s276 + $0x1a20] sm:$0xff]
        %v1198 = vld [vmem:[%s276 + $0x1a28] sm:$0xff]
        %v1199 = vld [vmem:[%s276 + $0x1a30] sm:$0xff]
        %v1200 = vld [vmem:[%s276 + $0x1a38] sm:$0xff]
        %v1201 = vld [vmem:[%s276 + $0x1a40] sm:$0xff]
        %v1202 = vld [vmem:[%s276 + $0x1a48] sm:$0xff]
        %v1203 = vld [vmem:[%s276 + $0x1a50] sm:$0xff]
        %v1204 = vld [vmem:[%s276 + $0x1a58] sm:$0xff]
        %v1205 = vld [vmem:[%s276 + $0x1a60] sm:$0xff]
        %v1206 = vld [vmem:[%s276 + $0x1a68] sm:$0xff]
        %v1207 = vld [vmem:[%s276 + $0x1a70] sm:$0xff]
        %v1208 = vld [vmem:[%s276 + $0x1a78] sm:$0xff]
        %v1209 = vld [vmem:[%s276 + $0x1a80] sm:$0xff]
        %v1210 = vld [vmem:[%s276 + $0x1a88] sm:$0xff]
        %v1211 = vld [vmem:[%s276 + $0x1a90] sm:$0xff]
        %v1212 = vld [vmem:[%s276 + $0x1a98] sm:$0xff]
        %v1213 = vld [vmem:[%s276 + $0x1aa0] sm:$0xff]
        %v1214 = vld [vmem:[%s276 + $0x1aa8] sm:$0xff]
        %v1215 = vld [vmem:[%s276 + $0x1ab0] sm:$0xff]
        %v1216 = vld [vmem:[%s276 + $0x1ab8] sm:$0xff]
        %v1217 = vld [vmem:[%s276 + $0x1ac0] sm:$0xff]
        %v1218 = vld [vmem:[%s276 + $0x1ac8] sm:$0xff]
        %v1219 = vld [vmem:[%s276 + $0x1ad0] sm:$0xff]
        %v1220 = vld [vmem:[%s276 + $0x1ad8] sm:$0xff]
        %v1221 = vld [vmem:[%s276 + $0x1ae0] sm:$0xff]
        %v1222 = vld [vmem:[%s276 + $0x1ae8] sm:$0xff]
        %v1223 = vld [vmem:[%s276 + $0x1af0] sm:$0xff]
        %v1224 = vld [vmem:[%s276 + $0x1af8] sm:$0xff]
        %v1225 = vld [vmem:[%s276 + $0x1b00] sm:$0xff]
        %v1226 = vld [vmem:[%s276 + $0x1b08] sm:$0xff]
        %v1227 = vld [vmem:[%s276 + $0x1b10] sm:$0xff]
        %v1228 = vld [vmem:[%s276 + $0x1b18] sm:$0xff]
        %v1229 = vld [vmem:[%s276 + $0x1b20] sm:$0xff]
        %v1230 = vld [vmem:[%s276 + $0x1b28] sm:$0xff]
        %v1231 = vld [vmem:[%s276 + $0x1b30] sm:$0xff]
        %v1232 = vld [vmem:[%s276 + $0x1b38] sm:$0xff]
        %v1233 = vld [vmem:[%s276 + $0x1b40] sm:$0xff]
        %v1234 = vld [vmem:[%s276 + $0x1b48] sm:$0xff]
        %v1235 = vld [vmem:[%s276 + $0x1b50] sm:$0xff]
        %v1236 = vld [vmem:[%s276 + $0x1b58] sm:$0xff]
        %v1237 = vld [vmem:[%s276 + $0x1b60] sm:$0xff]
        %v1238 = vld [vmem:[%s276 + $0x1b68] sm:$0xff]
        %v1239 = vld [vmem:[%s276 + $0x1b70] sm:$0xff]
        %v1240 = vld [vmem:[%s276 + $0x1b78] sm:$0xff]
        %v1241 = vld [vmem:[%s276 + $0x1b80] sm:$0xff]
        %v1242 = vld [vmem:[%s276 + $0x1b88] sm:$0xff]
        %v1243 = vld [vmem:[%s276 + $0x1b90] sm:$0xff]
        %v1244 = vld [vmem:[%s276 + $0x1b98] sm:$0xff]
        %v1245 = vld [vmem:[%s276 + $0x1ba0] sm:$0xff]
        %v1246 = vld [vmem:[%s276 + $0x1ba8] sm:$0xff]
        %v1247 = vld [vmem:[%s276 + $0x1bb0] sm:$0xff]
        %v1248 = vld [vmem:[%s276 + $0x1bb8] sm:$0xff]
        %v1249 = vld [vmem:[%s276 + $0x1bc0] sm:$0xff]
        %v1250 = vld [vmem:[%s276 + $0x1bc8] sm:$0xff]
        %v1251 = vld [vmem:[%s276 + $0x1bd0] sm:$0xff]
        %v1252 = vld [vmem:[%s276 + $0x1bd8] sm:$0xff]
        %v1253 = vld [vmem:[%s276 + $0x1be0] sm:$0xff]
        %v1254 = vld [vmem:[%s276 + $0x1be8] sm:$0xff]
        %v1255 = vld [vmem:[%s276 + $0x1bf0] sm:$0xff]
        %v1256 = vld [vmem:[%s276 + $0x1bf8] sm:$0xff]
        %v1257 = vld [vmem:[%s276 + $0x1c00] sm:$0xff]
        %v1258 = vld [vmem:[%s276 + $0x1c08] sm:$0xff]
        %v1259 = vld [vmem:[%s276 + $0x1c10] sm:$0xff]
        %v1260 = vld [vmem:[%s276 + $0x1c18] sm:$0xff]
        %v1261 = vld [vmem:[%s276 + $0x1c20] sm:$0xff]
        %v1262 = vld [vmem:[%s276 + $0x1c28] sm:$0xff]
        %v1263 = vld [vmem:[%s276 + $0x1c30] sm:$0xff]
        %v1264 = vld [vmem:[%s276 + $0x1c38] sm:$0xff]
        %v1265 = vld [vmem:[%s276 + $0x1c40] sm:$0xff]
        %v1266 = vld [vmem:[%s276 + $0x1c48] sm:$0xff]
        %v1267 = vld [vmem:[%s276 + $0x1c50] sm:$0xff]
        %v1268 = vld [vmem:[%s276 + $0x1c58] sm:$0xff]
        %v1269 = vld [vmem:[%s276 + $0x1c60] sm:$0xff]
        %v1270 = vld [vmem:[%s276 + $0x1c68] sm:$0xff]
        %v1271 = vld [vmem:[%s276 + $0x1c70] sm:$0xff]
        %v1272 = vld [vmem:[%s276 + $0x1c78] sm:$0xff]
        %v1273 = vld [vmem:[%s276 + $0x1c80] sm:$0xff]
        %v1274 = vld [vmem:[%s276 + $0x1c88] sm:$0xff]
        %v1275 = vld [vmem:[%s276 + $0x1c90] sm:$0xff]
        %v1276 = vld [vmem:[%s276 + $0x1c98] sm:$0xff]
        %v1277 = vld [vmem:[%s276 + $0x1ca0] sm:$0xff]
        %v1278 = vld [vmem:[%s276 + $0x1ca8] sm:$0xff]
        %v1279 = vld [vmem:[%s276 + $0x1cb0] sm:$0xff]
        %v1280 = vld [vmem:[%s276 + $0x1cb8] sm:$0xff]
        %v1281 = vld [vmem:[%s276 + $0x1cc0] sm:$0xff]
        %v1282 = vld [vmem:[%s276 + $0x1cc8] sm:$0xff]
        %v1283 = vld [vmem:[%s276 + $0x1cd0] sm:$0xff]
        %v1284 = vld [vmem:[%s276 + $0x1cd8] sm:$0xff]
        %v1285 = vld [vmem:[%s276 + $0x1ce0] sm:$0xff]
        %v1286 = vld [vmem:[%s276 + $0x1ce8] sm:$0xff]
        %v1287 = vld [vmem:[%s276 + $0x1cf0] sm:$0xff]
        %v1288 = vld [vmem:[%s276 + $0x1cf8] sm:$0xff]
        %v1289 = vld [vmem:[%s276 + $0x1d00] sm:$0xff]
        %v1290 = vld [vmem:[%s276 + $0x1d08] sm:$0xff]
        %v1291 = vld [vmem:[%s276 + $0x1d10] sm:$0xff]
        %v1292 = vld [vmem:[%s276 + $0x1d18] sm:$0xff]
        %v1293 = vld [vmem:[%s276 + $0x1d20] sm:$0xff]
        %v1294 = vld [vmem:[%s276 + $0x1d28] sm:$0xff]
        %v1295 = vld [vmem:[%s276 + $0x1d30] sm:$0xff]
        %v1296 = vld [vmem:[%s276 + $0x1d38] sm:$0xff]
        %v1297 = vld [vmem:[%s276 + $0x1d40] sm:$0xff]
        %v1298 = vld [vmem:[%s276 + $0x1d48] sm:$0xff]
        %v1299 = vld [vmem:[%s276 + $0x1d50] sm:$0xff]
        %v1300 = vld [vmem:[%s276 + $0x1d58] sm:$0xff]
        %v1301 = vld [vmem:[%s276 + $0x1d60] sm:$0xff]
        %v1302 = vld [vmem:[%s276 + $0x1d68] sm:$0xff]
        %v1303 = vld [vmem:[%s276 + $0x1d70] sm:$0xff]
        %v1304 = vld [vmem:[%s276 + $0x1d78] sm:$0xff]
        %v1305 = vld [vmem:[%s276 + $0x1d80] sm:$0xff]
        %v1306 = vld [vmem:[%s276 + $0x1d88] sm:$0xff]
        %v1307 = vld [vmem:[%s276 + $0x1d90] sm:$0xff]
        %v1308 = vld [vmem:[%s276 + $0x1d98] sm:$0xff]
        %v1309 = vld [vmem:[%s276 + $0x1da0] sm:$0xff]
        %v1310 = vld [vmem:[%s276 + $0x1da8] sm:$0xff]
        %v1311 = vld [vmem:[%s276 + $0x1db0] sm:$0xff]
        %v1312 = vld [vmem:[%s276 + $0x1db8] sm:$0xff]
        %v1313 = vld [vmem:[%s276 + $0x1dc0] sm:$0xff]
        %v1314 = vld [vmem:[%s276 + $0x1dc8] sm:$0xff]
        %v1315 = vld [vmem:[%s276 + $0x1dd0] sm:$0xff]
        %v1316 = vld [vmem:[%s276 + $0x1dd8] sm:$0xff]
        %v1317 = vld [vmem:[%s276 + $0x1de0] sm:$0xff]
        %v1318 = vld [vmem:[%s276 + $0x1de8] sm:$0xff]
        %v1319 = vld [vmem:[%s276 + $0x1df0] sm:$0xff]
        %v1320 = vld [vmem:[%s276 + $0x1df8] sm:$0xff]
        %v1321 = vld [vmem:[%s276 + $0x1e00] sm:$0xff]
        %v1322 = vld [vmem:[%s276 + $0x1e08] sm:$0xff]
        %v1323 = vld [vmem:[%s276 + $0x1e10] sm:$0xff]
        %v1324 = vld [vmem:[%s276 + $0x1e18] sm:$0xff]
        %v1325 = vld [vmem:[%s276 + $0x1e20] sm:$0xff]
        %v1326 = vld [vmem:[%s276 + $0x1e28] sm:$0xff]
        %v1327 = vld [vmem:[%s276 + $0x1e30] sm:$0xff]
        %v1328 = vld [vmem:[%s276 + $0x1e38] sm:$0xff]
        %v1329 = vld [vmem:[%s276 + $0x1e40] sm:$0xff]
        %v1330 = vld [vmem:[%s276 + $0x1e48] sm:$0xff]
        %v1331 = vld [vmem:[%s276 + $0x1e50] sm:$0xff]
        %v1332 = vld [vmem:[%s276 + $0x1e58] sm:$0xff]
        %v1333 = vld [vmem:[%s276 + $0x1e60] sm:$0xff]
        %v1334 = vld [vmem:[%s276 + $0x1e68] sm:$0xff]
        %v1335 = vld [vmem:[%s276 + $0x1e70] sm:$0xff]
        %v1336 = vld [vmem:[%s276 + $0x1e78] sm:$0xff]
        %v1337 = vld [vmem:[%s276 + $0x1e80] sm:$0xff]
        %v1338 = vld [vmem:[%s276 + $0x1e88] sm:$0xff]
        %v1339 = vld [vmem:[%s276 + $0x1e90] sm:$0xff]
        %v1340 = vld [vmem:[%s276 + $0x1e98] sm:$0xff]
        %v1341 = vld [vmem:[%s276 + $0x1ea0] sm:$0xff]
        %v1342 = vld [vmem:[%s276 + $0x1ea8] sm:$0xff]
        %v1343 = vld [vmem:[%s276 + $0x1eb0] sm:$0xff]
        %v1344 = vld [vmem:[%s276 + $0x1eb8] sm:$0xff]
        %v1345 = vld [vmem:[%s276 + $0x1ec0] sm:$0xff]
        %v1346 = vld [vmem:[%s276 + $0x1ec8] sm:$0xff]
        %v1347 = vld [vmem:[%s276 + $0x1ed0] sm:$0xff]
        %v1348 = vld [vmem:[%s276 + $0x1ed8] sm:$0xff]
        %v1349 = vld [vmem:[%s276 + $0x1ee0] sm:$0xff]
        %v1350 = vld [vmem:[%s276 + $0x1ee8] sm:$0xff]
        %v1351 = vld [vmem:[%s276 + $0x1ef0] sm:$0xff]
        %v1352 = vld [vmem:[%s276 + $0x1ef8] sm:$0xff]
        %v1353 = vld [vmem:[%s276 + $0x1f00] sm:$0xff]
        %v1354 = vld [vmem:[%s276 + $0x1f08] sm:$0xff]
        %v1355 = vld [vmem:[%s276 + $0x1f10] sm:$0xff]
        %v1356 = vld [vmem:[%s276 + $0x1f18] sm:$0xff]
        %v1357 = vld [vmem:[%s276 + $0x1f20] sm:$0xff]
        %v1358 = vld [vmem:[%s276 + $0x1f28] sm:$0xff]
        %v1359 = vld [vmem:[%s276 + $0x1f30] sm:$0xff]
        %v1360 = vld [vmem:[%s276 + $0x1f38] sm:$0xff]
        %v1361 = vld [vmem:[%s276 + $0x1f40] sm:$0xff]
        %v1362 = vld [vmem:[%s276 + $0x1f48] sm:$0xff]
        %v1363 = vld [vmem:[%s276 + $0x1f50] sm:$0xff]
        %v1364 = vld [vmem:[%s276 + $0x1f58] sm:$0xff]
        %v1365 = vld [vmem:[%s276 + $0x1f60] sm:$0xff]
        %v1366 = vld [vmem:[%s276 + $0x1f68] sm:$0xff]
        %v1367 = vld [vmem:[%s276 + $0x1f70] sm:$0xff]
        %v1368 = vld [vmem:[%s276 + $0x1f78] sm:$0xff]
        %v1369 = vld [vmem:[%s276 + $0x1f80] sm:$0xff]
        %v1370 = vld [vmem:[%s276 + $0x1f88] sm:$0xff]
        %v1371 = vld [vmem:[%s276 + $0x1f90] sm:$0xff]
        %v1372 = vld [vmem:[%s276 + $0x1f98] sm:$0xff]
        %v1373 = vld [vmem:[%s276 + $0x1fa0] sm:$0xff]
        %v1374 = vld [vmem:[%s276 + $0x1fa8] sm:$0xff]
        %v1375 = vld [vmem:[%s276 + $0x1fb0] sm:$0xff]
        %v1376 = vld [vmem:[%s276 + $0x1fb8] sm:$0xff]
        %v1377 = vld [vmem:[%s276 + $0x1fc0] sm:$0xff]
        %v1378 = vld [vmem:[%s276 + $0x1fc8] sm:$0xff]
        %v1379 = vld [vmem:[%s276 + $0x1fd0] sm:$0xff]
        %v1380 = vld [vmem:[%s276 + $0x1fd8] sm:$0xff]
        %v1381 = vld [vmem:[%s276 + $0x1fe0] sm:$0xff]
        %v1382 = vld [vmem:[%s276 + $0x1fe8] sm:$0xff]
        %v1383 = vld [vmem:[%s276 + $0x1ff0] sm:$0xff]
        %v1384 = vld [vmem:[%s276 + $0x1ff8] sm:$0xff]
        %v1385 = vld [vmem:[#allocation2] sm:$0xff]
        %v1386 = vld [vmem:[#allocation2 + $0x8] sm:$0xff]
        %1387 = vmatprep.subr.mxu0 %v362
        %1388 = vmatpush1.msra.mxu0 %v361
        %1389 = vmatprep.subr.mxu0 %v394
        %1390 = vmatpush1.msra.mxu0 %v393
        %1391 = vmatprep.subr.mxu0 %v426
        %1392 = vmatpush1.msra.mxu0 %v425
        %1393 = vmatprep.subr.mxu0 %v458
        %1394 = vmatpush1.msra.mxu0 %v457
        %1395 = vmatprep.subr.mxu0 %v490
        %1396 = vmatpush1.msra.mxu0 %v489
        %1397 = vmatprep.subr.mxu0 %v522
        %1398 = vmatpush1.msra.mxu0 %v521
        %1399 = vmatprep.subr.mxu0 %v554
        %1400 = vmatpush1.msra.mxu0 %v553
        %1401 = vmatprep.subr.mxu0 %v586
        %1402 = vmatpush1.msra.mxu0 %v585
        %1403 = vmatprep.subr.mxu0 %v618
        %1404 = vmatpush1.msra.mxu0 %v617
        %1405 = vmatprep.subr.mxu0 %v650
        %1406 = vmatpush1.msra.mxu0 %v649
        %1407 = vmatprep.subr.mxu0 %v682
        %1408 = vmatpush1.msra.mxu0 %v681
        %1409 = vmatprep.subr.mxu0 %v714
        %1410 = vmatpush1.msra.mxu0 %v713
        %1411 = vmatprep.subr.mxu0 %v746
        %1412 = vmatpush1.msra.mxu0 %v745
        %1413 = vmatprep.subr.mxu0 %v778
        %1414 = vmatpush1.msra.mxu0 %v777
        %1415 = vmatprep.subr.mxu0 %v810
        %1416 = vmatpush1.msra.mxu0 %v809
        %1417 = vmatprep.subr.mxu0 %v842
        %1418 = vmatpush1.msra.mxu0 %v841
        %1419 = vmatprep.subr.mxu0 %v874
        %1420 = vmatpush1.msra.mxu0 %v873
        %1421 = vmatprep.subr.mxu0 %v906
        %1422 = vmatpush1.msra.mxu0 %v905
        %1423 = vmatprep.subr.mxu0 %v938
        %1424 = vmatpush1.msra.mxu0 %v937
        %1425 = vmatprep.subr.mxu0 %v970
        %1426 = vmatpush1.msra.mxu0 %v969
        %1427 = vmatprep.subr.mxu0 %v1002
        %1428 = vmatpush1.msra.mxu0 %v1001
        %1429 = vmatprep.subr.mxu0 %v1034
        %1430 = vmatpush1.msra.mxu0 %v1033
        %1431 = vmatprep.subr.mxu0 %v1066
        %1432 = vmatpush1.msra.mxu0 %v1065
        %1433 = vmatprep.subr.mxu0 %v1098
        %1434 = vmatpush1.msra.mxu0 %v1097
        %1435 = vmatprep.subr.mxu0 %v1130
        %1436 = vmatpush1.msra.mxu0 %v1129
        %1437 = vmatprep.subr.mxu0 %v1162
        %1438 = vmatpush1.msra.mxu0 %v1161
        %1439 = vmatprep.subr.mxu0 %v1194
        %1440 = vmatpush1.msra.mxu0 %v1193
        %1441 = vmatprep.subr.mxu0 %v1226
        %1442 = vmatpush1.msra.mxu0 %v1225
        %1443 = vmatprep.subr.mxu0 %v1258
        %1444 = vmatpush1.msra.mxu0 %v1257
        %1445 = vmatprep.subr.mxu0 %v1290
        %1446 = vmatpush1.msra.mxu0 %v1289
        %1447 = vmatprep.subr.mxu0 %v1322
        %1448 = vmatpush1.msra.mxu0 %v1321
        %1449 = vmatprep.subr.mxu0 %v1354
        %1450 = vmatpush1.msra.mxu0 %v1353
        %1451 = vmatprep.mubr.f32.mxu0 %v1386
        %1452 = vmatmul.mubr.f32.gmra.mrb[0].mxu0 %v1385
        %v1453 = vpop.f32.mrb[0].mxu0
        %v1454 = vadd.f32 0.0, %v1453
        %v1455 = vpop.f32.mrb[0].mxu0
        %v1456 = vadd.f32 0.0, %v1455
        %1457 = vdwg.mxu0
        %1458 = vmatprep.subr.mxu0 %v364
        %1459 = vmatpush1.msra.mxu0 %v363
        %1460 = vmatprep.subr.mxu0 %v396
        %1461 = vmatpush1.msra.mxu0 %v395
        %1462 = vmatprep.subr.mxu0 %v428
        %1463 = vmatpush1.msra.mxu0 %v427
        %1464 = vmatprep.subr.mxu0 %v460
        %1465 = vmatpush1.msra.mxu0 %v459
        %1466 = vmatprep.subr.mxu0 %v492
        %1467 = vmatpush1.msra.mxu0 %v491
        %1468 = vmatprep.subr.mxu0 %v524
        %1469 = vmatpush1.msra.mxu0 %v523
        %1470 = vmatprep.subr.mxu0 %v556
        %1471 = vmatpush1.msra.mxu0 %v555
        %1472 = vmatprep.subr.mxu0 %v588
        %1473 = vmatpush1.msra.mxu0 %v587
        %1474 = vmatprep.subr.mxu0 %v620
        %1475 = vmatpush1.msra.mxu0 %v619
        %1476 = vmatprep.subr.mxu0 %v652
        %1477 = vmatpush1.msra.mxu0 %v651
        %1478 = vmatprep.subr.mxu0 %v684
        %1479 = vmatpush1.msra.mxu0 %v683
        %1480 = vmatprep.subr.mxu0 %v716
        %1481 = vmatpush1.msra.mxu0 %v715
        %1482 = vmatprep.subr.mxu0 %v748
        %1483 = vmatpush1.msra.mxu0 %v747
        %1484 = vmatprep.subr.mxu0 %v780
        %1485 = vmatpush1.msra.mxu0 %v779
        %1486 = vmatprep.subr.mxu0 %v812
        %1487 = vmatpush1.msra.mxu0 %v811
        %1488 = vmatprep.subr.mxu0 %v844
        %1489 = vmatpush1.msra.mxu0 %v843
        %1490 = vmatprep.subr.mxu0 %v876
        %1491 = vmatpush1.msra.mxu0 %v875
        %1492 = vmatprep.subr.mxu0 %v908
        %1493 = vmatpush1.msra.mxu0 %v907
        %1494 = vmatprep.subr.mxu0 %v940
        %1495 = vmatpush1.msra.mxu0 %v939
        %1496 = vmatprep.subr.mxu0 %v972
        %1497 = vmatpush1.msra.mxu0 %v971
        %1498 = vmatprep.subr.mxu0 %v1004
        %1499 = vmatpush1.msra.mxu0 %v1003
        %1500 = vmatprep.subr.mxu0 %v1036
        %1501 = vmatpush1.msra.mxu0 %v1035
        %1502 = vmatprep.subr.mxu0 %v1068
        %1503 = vmatpush1.msra.mxu0 %v1067
        %1504 = vmatprep.subr.mxu0 %v1100
        %1505 = vmatpush1.msra.mxu0 %v1099
        %1506 = vmatprep.subr.mxu0 %v1132
        %1507 = vmatpush1.msra.mxu0 %v1131
        %1508 = vmatprep.subr.mxu0 %v1164
        %1509 = vmatpush1.msra.mxu0 %v1163
        %1510 = vmatprep.subr.mxu0 %v1196
        %1511 = vmatpush1.msra.mxu0 %v1195
        %1512 = vmatprep.subr.mxu0 %v1228
        %1513 = vmatpush1.msra.mxu0 %v1227
        %1514 = vmatprep.subr.mxu0 %v1260
        %1515 = vmatpush1.msra.mxu0 %v1259
        %1516 = vmatprep.subr.mxu0 %v1292
        %1517 = vmatpush1.msra.mxu0 %v1291
        %1518 = vmatprep.subr.mxu0 %v1324
        %1519 = vmatpush1.msra.mxu0 %v1323
        %1520 = vmatprep.subr.mxu0 %v1356
        %1521 = vmatpush1.msra.mxu0 %v1355
        %1522 = vmatprep.mubr.f32.mxu0 %v1386
        %1523 = vmatmul.mubr.f32.gmra.mrb[0].mxu0 %v1385
        %v1524 = vpop.f32.mrb[0].mxu0
        %v1525 = vadd.f32 0.0, %v1524
        %v1526 = vpop.f32.mrb[0].mxu0
        %v1527 = vadd.f32 0.0, %v1526
        %1528 = vdwg.mxu0
        %1529 = vmatprep.subr.mxu0 %v366
        %1530 = vmatpush1.msra.mxu0 %v365
        %1531 = vmatprep.subr.mxu0 %v398
        %1532 = vmatpush1.msra.mxu0 %v397
        %1533 = vmatprep.subr.mxu0 %v430
        %1534 = vmatpush1.msra.mxu0 %v429
        %1535 = vmatprep.subr.mxu0 %v462
        %1536 = vmatpush1.msra.mxu0 %v461
        %1537 = vmatprep.subr.mxu0 %v494
        %1538 = vmatpush1.msra.mxu0 %v493
        %1539 = vmatprep.subr.mxu0 %v526
        %1540 = vmatpush1.msra.mxu0 %v525
        %1541 = vmatprep.subr.mxu0 %v558
        %1542 = vmatpush1.msra.mxu0 %v557
        %1543 = vmatprep.subr.mxu0 %v590
        %1544 = vmatpush1.msra.mxu0 %v589
        %1545 = vmatprep.subr.mxu0 %v622
        %1546 = vmatpush1.msra.mxu0 %v621
        %1547 = vmatprep.subr.mxu0 %v654
        %1548 = vmatpush1.msra.mxu0 %v653
        %1549 = vmatprep.subr.mxu0 %v686
        %1550 = vmatpush1.msra.mxu0 %v685
        %1551 = vmatprep.subr.mxu0 %v718
        %1552 = vmatpush1.msra.mxu0 %v717
        %1553 = vmatprep.subr.mxu0 %v750
        %1554 = vmatpush1.msra.mxu0 %v749
        %1555 = vmatprep.subr.mxu0 %v782
        %1556 = vmatpush1.msra.mxu0 %v781
        %1557 = vmatprep.subr.mxu0 %v814
        %1558 = vmatpush1.msra.mxu0 %v813
        %1559 = vmatprep.subr.mxu0 %v846
        %1560 = vmatpush1.msra.mxu0 %v845
        %1561 = vmatprep.subr.mxu0 %v878
        %1562 = vmatpush1.msra.mxu0 %v877
        %1563 = vmatprep.subr.mxu0 %v910
        %1564 = vmatpush1.msra.mxu0 %v909
        %1565 = vmatprep.subr.mxu0 %v942
        %1566 = vmatpush1.msra.mxu0 %v941
        %1567 = vmatprep.subr.mxu0 %v974
        %1568 = vmatpush1.msra.mxu0 %v973
        %1569 = vmatprep.subr.mxu0 %v1006
        %1570 = vmatpush1.msra.mxu0 %v1005
        %1571 = vmatprep.subr.mxu0 %v1038
        %1572 = vmatpush1.msra.mxu0 %v1037
        %1573 = vmatprep.subr.mxu0 %v1070
        %1574 = vmatpush1.msra.mxu0 %v1069
        %1575 = vmatprep.subr.mxu0 %v1102
        %1576 = vmatpush1.msra.mxu0 %v1101
        %1577 = vmatprep.subr.mxu0 %v1134
        %1578 = vmatpush1.msra.mxu0 %v1133
        %1579 = vmatprep.subr.mxu0 %v1166
        %1580 = vmatpush1.msra.mxu0 %v1165
        %1581 = vmatprep.subr.mxu0 %v1198
        %1582 = vmatpush1.msra.mxu0 %v1197
        %1583 = vmatprep.subr.mxu0 %v1230
        %1584 = vmatpush1.msra.mxu0 %v1229
        %1585 = vmatprep.subr.mxu0 %v1262
        %1586 = vmatpush1.msra.mxu0 %v1261
        %1587 = vmatprep.subr.mxu0 %v1294
        %1588 = vmatpush1.msra.mxu0 %v1293
        %1589 = vmatprep.subr.mxu0 %v1326
        %1590 = vmatpush1.msra.mxu0 %v1325
        %1591 = vmatprep.subr.mxu0 %v1358
        %1592 = vmatpush1.msra.mxu0 %v1357
        %1593 = vmatprep.mubr.f32.mxu0 %v1386
        %1594 = vmatmul.mubr.f32.gmra.mrb[0].mxu0 %v1385
        %v1595 = vpop.f32.mrb[0].mxu0
        %v1596 = vadd.f32 0.0, %v1595
        %v1597 = vpop.f32.mrb[0].mxu0
        %v1598 = vadd.f32 0.0, %v1597
        %1599 = vdwg.mxu0
        %1600 = vmatprep.subr.mxu0 %v368
        %1601 = vmatpush1.msra.mxu0 %v367
        %1602 = vmatprep.subr.mxu0 %v400
        %1603 = vmatpush1.msra.mxu0 %v399
        %1604 = vmatprep.subr.mxu0 %v432
        %1605 = vmatpush1.msra.mxu0 %v431
        %1606 = vmatprep.subr.mxu0 %v464
        %1607 = vmatpush1.msra.mxu0 %v463
        %1608 = vmatprep.subr.mxu0 %v496
        %1609 = vmatpush1.msra.mxu0 %v495
        %1610 = vmatprep.subr.mxu0 %v528
        %1611 = vmatpush1.msra.mxu0 %v527
        %1612 = vmatprep.subr.mxu0 %v560
        %1613 = vmatpush1.msra.mxu0 %v559
        %1614 = vmatprep.subr.mxu0 %v592
        %1615 = vmatpush1.msra.mxu0 %v591
        %1616 = vmatprep.subr.mxu0 %v624
        %1617 = vmatpush1.msra.mxu0 %v623
        %1618 = vmatprep.subr.mxu0 %v656
        %1619 = vmatpush1.msra.mxu0 %v655
        %1620 = vmatprep.subr.mxu0 %v688
        %1621 = vmatpush1.msra.mxu0 %v687
        %1622 = vmatprep.subr.mxu0 %v720
        %1623 = vmatpush1.msra.mxu0 %v719
        %1624 = vmatprep.subr.mxu0 %v752
        %1625 = vmatpush1.msra.mxu0 %v751
        %1626 = vmatprep.subr.mxu0 %v784
        %1627 = vmatpush1.msra.mxu0 %v783
        %1628 = vmatprep.subr.mxu0 %v816
        %1629 = vmatpush1.msra.mxu0 %v815
        %1630 = vmatprep.subr.mxu0 %v848
        %1631 = vmatpush1.msra.mxu0 %v847
        %1632 = vmatprep.subr.mxu0 %v880
        %1633 = vmatpush1.msra.mxu0 %v879
        %1634 = vmatprep.subr.mxu0 %v912
        %1635 = vmatpush1.msra.mxu0 %v911
        %1636 = vmatprep.subr.mxu0 %v944
        %1637 = vmatpush1.msra.mxu0 %v943
        %1638 = vmatprep.subr.mxu0 %v976
        %1639 = vmatpush1.msra.mxu0 %v975
        %1640 = vmatprep.subr.mxu0 %v1008
        %1641 = vmatpush1.msra.mxu0 %v1007
        %1642 = vmatprep.subr.mxu0 %v1040
        %1643 = vmatpush1.msra.mxu0 %v1039
        %1644 = vmatprep.subr.mxu0 %v1072
        %1645 = vmatpush1.msra.mxu0 %v1071
        %1646 = vmatprep.subr.mxu0 %v1104
        %1647 = vmatpush1.msra.mxu0 %v1103
        %1648 = vmatprep.subr.mxu0 %v1136
        %1649 = vmatpush1.msra.mxu0 %v1135
        %1650 = vmatprep.subr.mxu0 %v1168
        %1651 = vmatpush1.msra.mxu0 %v1167
        %1652 = vmatprep.subr.mxu0 %v1200
        %1653 = vmatpush1.msra.mxu0 %v1199
        %1654 = vmatprep.subr.mxu0 %v1232
        %1655 = vmatpush1.msra.mxu0 %v1231
        %1656 = vmatprep.subr.mxu0 %v1264
        %1657 = vmatpush1.msra.mxu0 %v1263
        %1658 = vmatprep.subr.mxu0 %v1296
        %1659 = vmatpush1.msra.mxu0 %v1295
        %1660 = vmatprep.subr.mxu0 %v1328
        %1661 = vmatpush1.msra.mxu0 %v1327
        %1662 = vmatprep.subr.mxu0 %v1360
        %1663 = vmatpush1.msra.mxu0 %v1359
        %1664 = vmatprep.mubr.f32.mxu0 %v1386
        %1665 = vmatmul.mubr.f32.gmra.mrb[0].mxu0 %v1385
        %v1666 = vpop.f32.mrb[0].mxu0
        %v1667 = vadd.f32 0.0, %v1666
        %v1668 = vpop.f32.mrb[0].mxu0
        %v1669 = vadd.f32 0.0, %v1668
        %1670 = vdwg.mxu0
        %1671 = vmatprep.subr.mxu0 %v370
        %1672 = vmatpush1.msra.mxu0 %v369
        %1673 = vmatprep.subr.mxu0 %v402
        %1674 = vmatpush1.msra.mxu0 %v401
        %1675 = vmatprep.subr.mxu0 %v434
        %1676 = vmatpush1.msra.mxu0 %v433
        %1677 = vmatprep.subr.mxu0 %v466
        %1678 = vmatpush1.msra.mxu0 %v465
        %1679 = vmatprep.subr.mxu0 %v498
        %1680 = vmatpush1.msra.mxu0 %v497
        %1681 = vmatprep.subr.mxu0 %v530
        %1682 = vmatpush1.msra.mxu0 %v529
        %1683 = vmatprep.subr.mxu0 %v562
        %1684 = vmatpush1.msra.mxu0 %v561
        %1685 = vmatprep.subr.mxu0 %v594
        %1686 = vmatpush1.msra.mxu0 %v593
        %1687 = vmatprep.subr.mxu0 %v626
        %1688 = vmatpush1.msra.mxu0 %v625
        %1689 = vmatprep.subr.mxu0 %v658
        %1690 = vmatpush1.msra.mxu0 %v657
        %1691 = vmatprep.subr.mxu0 %v690
        %1692 = vmatpush1.msra.mxu0 %v689
        %1693 = vmatprep.subr.mxu0 %v722
        %1694 = vmatpush1.msra.mxu0 %v721
        %1695 = vmatprep.subr.mxu0 %v754
        %1696 = vmatpush1.msra.mxu0 %v753
        %1697 = vmatprep.subr.mxu0 %v786
        %1698 = vmatpush1.msra.mxu0 %v785
        %1699 = vmatprep.subr.mxu0 %v818
        %1700 = vmatpush1.msra.mxu0 %v817
        %1701 = vmatprep.subr.mxu0 %v850
        %1702 = vmatpush1.msra.mxu0 %v849
        %1703 = vmatprep.subr.mxu0 %v882
        %1704 = vmatpush1.msra.mxu0 %v881
        %1705 = vmatprep.subr.mxu0 %v914
        %1706 = vmatpush1.msra.mxu0 %v913
        %1707 = vmatprep.subr.mxu0 %v946
        %1708 = vmatpush1.msra.mxu0 %v945
        %1709 = vmatprep.subr.mxu0 %v978
        %1710 = vmatpush1.msra.mxu0 %v977
        %1711 = vmatprep.subr.mxu0 %v1010
        %1712 = vmatpush1.msra.mxu0 %v1009
        %1713 = vmatprep.subr.mxu0 %v1042
        %1714 = vmatpush1.msra.mxu0 %v1041
        %1715 = vmatprep.subr.mxu0 %v1074
        %1716 = vmatpush1.msra.mxu0 %v1073
        %1717 = vmatprep.subr.mxu0 %v1106
        %1718 = vmatpush1.msra.mxu0 %v1105
        %1719 = vmatprep.subr.mxu0 %v1138
        %1720 = vmatpush1.msra.mxu0 %v1137
        %1721 = vmatprep.subr.mxu0 %v1170
        %1722 = vmatpush1.msra.mxu0 %v1169
        %1723 = vmatprep.subr.mxu0 %v1202
        %1724 = vmatpush1.msra.mxu0 %v1201
        %1725 = vmatprep.subr.mxu0 %v1234
        %1726 = vmatpush1.msra.mxu0 %v1233
        %1727 = vmatprep.subr.mxu0 %v1266
        %1728 = vmatpush1.msra.mxu0 %v1265
        %1729 = vmatprep.subr.mxu0 %v1298
        %1730 = vmatpush1.msra.mxu0 %v1297
        %1731 = vmatprep.subr.mxu0 %v1330
        %1732 = vmatpush1.msra.mxu0 %v1329
        %1733 = vmatprep.subr.mxu0 %v1362
        %1734 = vmatpush1.msra.mxu0 %v1361
        %1735 = vmatprep.mubr.f32.mxu0 %v1386
        %1736 = vmatmul.mubr.f32.gmra.mrb[0].mxu0 %v1385
        %v1737 = vpop.f32.mrb[0].mxu0
        %v1738 = vadd.f32 0.0, %v1737
        %v1739 = vpop.f32.mrb[0].mxu0
        %v1740 = vadd.f32 0.0, %v1739
        %1741 = vdwg.mxu0
        %1742 = vmatprep.subr.mxu0 %v372
        %1743 = vmatpush1.msra.mxu0 %v371
        %1744 = vmatprep.subr.mxu0 %v404
        %1745 = vmatpush1.msra.mxu0 %v403
        %1746 = vmatprep.subr.mxu0 %v436
        %1747 = vmatpush1.msra.mxu0 %v435
        %1748 = vmatprep.subr.mxu0 %v468
        %1749 = vmatpush1.msra.mxu0 %v467
        %1750 = vmatprep.subr.mxu0 %v500
        %1751 = vmatpush1.msra.mxu0 %v499
        %1752 = vmatprep.subr.mxu0 %v532
        %1753 = vmatpush1.msra.mxu0 %v531
        %1754 = vmatprep.subr.mxu0 %v564
        %1755 = vmatpush1.msra.mxu0 %v563
        %1756 = vmatprep.subr.mxu0 %v596
        %1757 = vmatpush1.msra.mxu0 %v595
        %1758 = vmatprep.subr.mxu0 %v628
        %1759 = vmatpush1.msra.mxu0 %v627
        %1760 = vmatprep.subr.mxu0 %v660
        %1761 = vmatpush1.msra.mxu0 %v659
        %1762 = vmatprep.subr.mxu0 %v692
        %1763 = vmatpush1.msra.mxu0 %v691
        %1764 = vmatprep.subr.mxu0 %v724
        %1765 = vmatpush1.msra.mxu0 %v723
        %1766 = vmatprep.subr.mxu0 %v756
        %1767 = vmatpush1.msra.mxu0 %v755
        %1768 = vmatprep.subr.mxu0 %v788
        %1769 = vmatpush1.msra.mxu0 %v787
        %1770 = vmatprep.subr.mxu0 %v820
        %1771 = vmatpush1.msra.mxu0 %v819
        %1772 = vmatprep.subr.mxu0 %v852
        %1773 = vmatpush1.msra.mxu0 %v851
        %1774 = vmatprep.subr.mxu0 %v884
        %1775 = vmatpush1.msra.mxu0 %v883
        %1776 = vmatprep.subr.mxu0 %v916
        %1777 = vmatpush1.msra.mxu0 %v915
        %1778 = vmatprep.subr.mxu0 %v948
        %1779 = vmatpush1.msra.mxu0 %v947
        %1780 = vmatprep.subr.mxu0 %v980
        %1781 = vmatpush1.msra.mxu0 %v979
        %1782 = vmatprep.subr.mxu0 %v1012
        %1783 = vmatpush1.msra.mxu0 %v1011
        %1784 = vmatprep.subr.mxu0 %v1044
        %1785 = vmatpush1.msra.mxu0 %v1043
        %1786 = vmatprep.subr.mxu0 %v1076
        %1787 = vmatpush1.msra.mxu0 %v1075
        %1788 = vmatprep.subr.mxu0 %v1108
        %1789 = vmatpush1.msra.mxu0 %v1107
        %1790 = vmatprep.subr.mxu0 %v1140
        %1791 = vmatpush1.msra.mxu0 %v1139
        %1792 = vmatprep.subr.mxu0 %v1172
        %1793 = vmatpush1.msra.mxu0 %v1171
        %1794 = vmatprep.subr.mxu0 %v1204
        %1795 = vmatpush1.msra.mxu0 %v1203
        %1796 = vmatprep.subr.mxu0 %v1236
        %1797 = vmatpush1.msra.mxu0 %v1235
        %1798 = vmatprep.subr.mxu0 %v1268
        %1799 = vmatpush1.msra.mxu0 %v1267
        %1800 = vmatprep.subr.mxu0 %v1300
        %1801 = vmatpush1.msra.mxu0 %v1299
        %1802 = vmatprep.subr.mxu0 %v1332
        %1803 = vmatpush1.msra.mxu0 %v1331
        %1804 = vmatprep.subr.mxu0 %v1364
        %1805 = vmatpush1.msra.mxu0 %v1363
        %1806 = vmatprep.mubr.f32.mxu0 %v1386
        %1807 = vmatmul.mubr.f32.gmra.mrb[0].mxu0 %v1385
        %v1808 = vpop.f32.mrb[0].mxu0
        %v1809 = vadd.f32 0.0, %v1808
        %v1810 = vpop.f32.mrb[0].mxu0
        %v1811 = vadd.f32 0.0, %v1810
        %1812 = vdwg.mxu0
        %1813 = vmatprep.subr.mxu0 %v374
        %1814 = vmatpush1.msra.mxu0 %v373
        %1815 = vmatprep.subr.mxu0 %v406
        %1816 = vmatpush1.msra.mxu0 %v405
        %1817 = vmatprep.subr.mxu0 %v438
        %1818 = vmatpush1.msra.mxu0 %v437
        %1819 = vmatprep.subr.mxu0 %v470
        %1820 = vmatpush1.msra.mxu0 %v469
        %1821 = vmatprep.subr.mxu0 %v502
        %1822 = vmatpush1.msra.mxu0 %v501
        %1823 = vmatprep.subr.mxu0 %v534
        %1824 = vmatpush1.msra.mxu0 %v533
        %1825 = vmatprep.subr.mxu0 %v566
        %1826 = vmatpush1.msra.mxu0 %v565
        %1827 = vmatprep.subr.mxu0 %v598
        %1828 = vmatpush1.msra.mxu0 %v597
        %1829 = vmatprep.subr.mxu0 %v630
        %1830 = vmatpush1.msra.mxu0 %v629
        %1831 = vmatprep.subr.mxu0 %v662
        %1832 = vmatpush1.msra.mxu0 %v661
        %1833 = vmatprep.subr.mxu0 %v694
        %1834 = vmatpush1.msra.mxu0 %v693
        %1835 = vmatprep.subr.mxu0 %v726
        %1836 = vmatpush1.msra.mxu0 %v725
        %1837 = vmatprep.subr.mxu0 %v758
        %1838 = vmatpush1.msra.mxu0 %v757
        %1839 = vmatprep.subr.mxu0 %v790
        %1840 = vmatpush1.msra.mxu0 %v789
        %1841 = vmatprep.subr.mxu0 %v822
        %1842 = vmatpush1.msra.mxu0 %v821
        %1843 = vmatprep.subr.mxu0 %v854
        %1844 = vmatpush1.msra.mxu0 %v853
        %1845 = vmatprep.subr.mxu0 %v886
        %1846 = vmatpush1.msra.mxu0 %v885
        %1847 = vmatprep.subr.mxu0 %v918
        %1848 = vmatpush1.msra.mxu0 %v917
        %1849 = vmatprep.subr.mxu0 %v950
        %1850 = vmatpush1.msra.mxu0 %v949
        %1851 = vmatprep.subr.mxu0 %v982
        %1852 = vmatpush1.msra.mxu0 %v981
        %1853 = vmatprep.subr.mxu0 %v1014
        %1854 = vmatpush1.msra.mxu0 %v1013
        %1855 = vmatprep.subr.mxu0 %v1046
        %1856 = vmatpush1.msra.mxu0 %v1045
        %1857 = vmatprep.subr.mxu0 %v1078
        %1858 = vmatpush1.msra.mxu0 %v1077
        %1859 = vmatprep.subr.mxu0 %v1110
        %1860 = vmatpush1.msra.mxu0 %v1109
        %1861 = vmatprep.subr.mxu0 %v1142
        %1862 = vmatpush1.msra.mxu0 %v1141
        %1863 = vmatprep.subr.mxu0 %v1174
        %1864 = vmatpush1.msra.mxu0 %v1173
        %1865 = vmatprep.subr.mxu0 %v1206
        %1866 = vmatpush1.msra.mxu0 %v1205
        %1867 = vmatprep.subr.mxu0 %v1238
        %1868 = vmatpush1.msra.mxu0 %v1237
        %1869 = vmatprep.subr.mxu0 %v1270
        %1870 = vmatpush1.msra.mxu0 %v1269
        %1871 = vmatprep.subr.mxu0 %v1302
        %1872 = vmatpush1.msra.mxu0 %v1301
        %1873 = vmatprep.subr.mxu0 %v1334
        %1874 = vmatpush1.msra.mxu0 %v1333
        %1875 = vmatprep.subr.mxu0 %v1366
        %1876 = vmatpush1.msra.mxu0 %v1365
        %1877 = vmatprep.mubr.f32.mxu0 %v1386
        %1878 = vmatmul.mubr.f32.gmra.mrb[0].mxu0 %v1385
        %v1879 = vpop.f32.mrb[0].mxu0
        %v1880 = vadd.f32 0.0, %v1879
        %v1881 = vpop.f32.mrb[0].mxu0
        %v1882 = vadd.f32 0.0, %v1881
        %1883 = vdwg.mxu0
        %1884 = vmatprep.subr.mxu0 %v376
        %1885 = vmatpush1.msra.mxu0 %v375
        %1886 = vmatprep.subr.mxu0 %v408
        %1887 = vmatpush1.msra.mxu0 %v407
        %1888 = vmatprep.subr.mxu0 %v440
        %1889 = vmatpush1.msra.mxu0 %v439
        %1890 = vmatprep.subr.mxu0 %v472
        %1891 = vmatpush1.msra.mxu0 %v471
        %1892 = vmatprep.subr.mxu0 %v504
        %1893 = vmatpush1.msra.mxu0 %v503
        %1894 = vmatprep.subr.mxu0 %v536
        %1895 = vmatpush1.msra.mxu0 %v535
        %1896 = vmatprep.subr.mxu0 %v568
        %1897 = vmatpush1.msra.mxu0 %v567
        %1898 = vmatprep.subr.mxu0 %v600
        %1899 = vmatpush1.msra.mxu0 %v599
        %1900 = vmatprep.subr.mxu0 %v632
        %1901 = vmatpush1.msra.mxu0 %v631
        %1902 = vmatprep.subr.mxu0 %v664
        %1903 = vmatpush1.msra.mxu0 %v663
        %1904 = vmatprep.subr.mxu0 %v696
        %1905 = vmatpush1.msra.mxu0 %v695
        %1906 = vmatprep.subr.mxu0 %v728
        %1907 = vmatpush1.msra.mxu0 %v727
        %1908 = vmatprep.subr.mxu0 %v760
        %1909 = vmatpush1.msra.mxu0 %v759
        %1910 = vmatprep.subr.mxu0 %v792
        %1911 = vmatpush1.msra.mxu0 %v791
        %1912 = vmatprep.subr.mxu0 %v824
        %1913 = vmatpush1.msra.mxu0 %v823
        %1914 = vmatprep.subr.mxu0 %v856
        %1915 = vmatpush1.msra.mxu0 %v855
        %1916 = vmatprep.subr.mxu0 %v888
        %1917 = vmatpush1.msra.mxu0 %v887
        %1918 = vmatprep.subr.mxu0 %v920
        %1919 = vmatpush1.msra.mxu0 %v919
        %1920 = vmatprep.subr.mxu0 %v952
        %1921 = vmatpush1.msra.mxu0 %v951
        %1922 = vmatprep.subr.mxu0 %v984
        %1923 = vmatpush1.msra.mxu0 %v983
        %1924 = vmatprep.subr.mxu0 %v1016
        %1925 = vmatpush1.msra.mxu0 %v1015
        %1926 = vmatprep.subr.mxu0 %v1048
        %1927 = vmatpush1.msra.mxu0 %v1047
        %1928 = vmatprep.subr.mxu0 %v1080
        %1929 = vmatpush1.msra.mxu0 %v1079
        %1930 = vmatprep.subr.mxu0 %v1112
        %1931 = vmatpush1.msra.mxu0 %v1111
        %1932 = vmatprep.subr.mxu0 %v1144
        %1933 = vmatpush1.msra.mxu0 %v1143
        %1934 = vmatprep.subr.mxu0 %v1176
        %1935 = vmatpush1.msra.mxu0 %v1175
        %1936 = vmatprep.subr.mxu0 %v1208
        %1937 = vmatpush1.msra.mxu0 %v1207
        %1938 = vmatprep.subr.mxu0 %v1240
        %1939 = vmatpush1.msra.mxu0 %v1239
        %1940 = vmatprep.subr.mxu0 %v1272
        %1941 = vmatpush1.msra.mxu0 %v1271
        %1942 = vmatprep.subr.mxu0 %v1304
        %1943 = vmatpush1.msra.mxu0 %v1303
        %1944 = vmatprep.subr.mxu0 %v1336
        %1945 = vmatpush1.msra.mxu0 %v1335
        %1946 = vmatprep.subr.mxu0 %v1368
        %1947 = vmatpush1.msra.mxu0 %v1367
        %1948 = vmatprep.mubr.f32.mxu0 %v1386
        %1949 = vmatmul.mubr.f32.gmra.mrb[0].mxu0 %v1385
        %v1950 = vpop.f32.mrb[0].mxu0
        %v1951 = vadd.f32 0.0, %v1950
        %v1952 = vpop.f32.mrb[0].mxu0
        %v1953 = vadd.f32 0.0, %v1952
        %1954 = vdwg.mxu0
        %1955 = vmatprep.subr.mxu0 %v378
        %1956 = vmatpush1.msra.mxu0 %v377
        %1957 = vmatprep.subr.mxu0 %v410
        %1958 = vmatpush1.msra.mxu0 %v409
        %1959 = vmatprep.subr.mxu0 %v442
        %1960 = vmatpush1.msra.mxu0 %v441
        %1961 = vmatprep.subr.mxu0 %v474
        %1962 = vmatpush1.msra.mxu0 %v473
        %1963 = vmatprep.subr.mxu0 %v506
        %1964 = vmatpush1.msra.mxu0 %v505
        %1965 = vmatprep.subr.mxu0 %v538
        %1966 = vmatpush1.msra.mxu0 %v537
        %1967 = vmatprep.subr.mxu0 %v570
        %1968 = vmatpush1.msra.mxu0 %v569
        %1969 = vmatprep.subr.mxu0 %v602
        %1970 = vmatpush1.msra.mxu0 %v601
        %1971 = vmatprep.subr.mxu0 %v634
        %1972 = vmatpush1.msra.mxu0 %v633
        %1973 = vmatprep.subr.mxu0 %v666
        %1974 = vmatpush1.msra.mxu0 %v665
        %1975 = vmatprep.subr.mxu0 %v698
        %1976 = vmatpush1.msra.mxu0 %v697
        %1977 = vmatprep.subr.mxu0 %v730
        %1978 = vmatpush1.msra.mxu0 %v729
        %1979 = vmatprep.subr.mxu0 %v762
        %1980 = vmatpush1.msra.mxu0 %v761
        %1981 = vmatprep.subr.mxu0 %v794
        %1982 = vmatpush1.msra.mxu0 %v793
        %1983 = vmatprep.subr.mxu0 %v826
        %1984 = vmatpush1.msra.mxu0 %v825
        %1985 = vmatprep.subr.mxu0 %v858
        %1986 = vmatpush1.msra.mxu0 %v857
        %1987 = vmatprep.subr.mxu0 %v890
        %1988 = vmatpush1.msra.mxu0 %v889
        %1989 = vmatprep.subr.mxu0 %v922
        %1990 = vmatpush1.msra.mxu0 %v921
        %1991 = vmatprep.subr.mxu0 %v954
        %1992 = vmatpush1.msra.mxu0 %v953
        %1993 = vmatprep.subr.mxu0 %v986
        %1994 = vmatpush1.msra.mxu0 %v985
        %1995 = vmatprep.subr.mxu0 %v1018
        %1996 = vmatpush1.msra.mxu0 %v1017
        %1997 = vmatprep.subr.mxu0 %v1050
        %1998 = vmatpush1.msra.mxu0 %v1049
        %1999 = vmatprep.subr.mxu0 %v1082
        %2000 = vmatpush1.msra.mxu0 %v1081
        %2001 = vmatprep.subr.mxu0 %v1114
        %2002 = vmatpush1.msra.mxu0 %v1113
        %2003 = vmatprep.subr.mxu0 %v1146
        %2004 = vmatpush1.msra.mxu0 %v1145
        %2005 = vmatprep.subr.mxu0 %v1178
        %2006 = vmatpush1.msra.mxu0 %v1177
        %2007 = vmatprep.subr.mxu0 %v1210
        %2008 = vmatpush1.msra.mxu0 %v1209
        %2009 = vmatprep.subr.mxu0 %v1242
        %2010 = vmatpush1.msra.mxu0 %v1241
        %2011 = vmatprep.subr.mxu0 %v1274
        %2012 = vmatpush1.msra.mxu0 %v1273
        %2013 = vmatprep.subr.mxu0 %v1306
        %2014 = vmatpush1.msra.mxu0 %v1305
        %2015 = vmatprep.subr.mxu0 %v1338
        %2016 = vmatpush1.msra.mxu0 %v1337
        %2017 = vmatprep.subr.mxu0 %v1370
        %2018 = vmatpush1.msra.mxu0 %v1369
        %2019 = vmatprep.mubr.f32.mxu0 %v1386
        %2020 = vmatmul.mubr.f32.gmra.mrb[0].mxu0 %v1385
        %v2021 = vpop.f32.mrb[0].mxu0
        %v2022 = vadd.f32 0.0, %v2021
        %v2023 = vpop.f32.mrb[0].mxu0
        %v2024 = vadd.f32 0.0, %v2023
        %2025 = vdwg.mxu0
        %2026 = vmatprep.subr.mxu0 %v380
        %2027 = vmatpush1.msra.mxu0 %v379
        %2028 = vmatprep.subr.mxu0 %v412
        %2029 = vmatpush1.msra.mxu0 %v411
        %2030 = vmatprep.subr.mxu0 %v444
        %2031 = vmatpush1.msra.mxu0 %v443
        %2032 = vmatprep.subr.mxu0 %v476
        %2033 = vmatpush1.msra.mxu0 %v475
        %2034 = vmatprep.subr.mxu0 %v508
        %2035 = vmatpush1.msra.mxu0 %v507
        %2036 = vmatprep.subr.mxu0 %v540
        %2037 = vmatpush1.msra.mxu0 %v539
        %2038 = vmatprep.subr.mxu0 %v572
        %2039 = vmatpush1.msra.mxu0 %v571
        %2040 = vmatprep.subr.mxu0 %v604
        %2041 = vmatpush1.msra.mxu0 %v603
        %2042 = vmatprep.subr.mxu0 %v636
        %2043 = vmatpush1.msra.mxu0 %v635
        %2044 = vmatprep.subr.mxu0 %v668
        %2045 = vmatpush1.msra.mxu0 %v667
        %2046 = vmatprep.subr.mxu0 %v700
        %2047 = vmatpush1.msra.mxu0 %v699
        %2048 = vmatprep.subr.mxu0 %v732
        %2049 = vmatpush1.msra.mxu0 %v731
        %2050 = vmatprep.subr.mxu0 %v764
        %2051 = vmatpush1.msra.mxu0 %v763
        %2052 = vmatprep.subr.mxu0 %v796
        %2053 = vmatpush1.msra.mxu0 %v795
        %2054 = vmatprep.subr.mxu0 %v828
        %2055 = vmatpush1.msra.mxu0 %v827
        %2056 = vmatprep.subr.mxu0 %v860
        %2057 = vmatpush1.msra.mxu0 %v859
        %2058 = vmatprep.subr.mxu0 %v892
        %2059 = vmatpush1.msra.mxu0 %v891
        %2060 = vmatprep.subr.mxu0 %v924
        %2061 = vmatpush1.msra.mxu0 %v923
        %2062 = vmatprep.subr.mxu0 %v956
        %2063 = vmatpush1.msra.mxu0 %v955
        %2064 = vmatprep.subr.mxu0 %v988
        %2065 = vmatpush1.msra.mxu0 %v987
        %2066 = vmatprep.subr.mxu0 %v1020
        %2067 = vmatpush1.msra.mxu0 %v1019
        %2068 = vmatprep.subr.mxu0 %v1052
        %2069 = vmatpush1.msra.mxu0 %v1051
        %2070 = vmatprep.subr.mxu0 %v1084
        %2071 = vmatpush1.msra.mxu0 %v1083
        %2072 = vmatprep.subr.mxu0 %v1116
        %2073 = vmatpush1.msra.mxu0 %v1115
        %2074 = vmatprep.subr.mxu0 %v1148
        %2075 = vmatpush1.msra.mxu0 %v1147
        %2076 = vmatprep.subr.mxu0 %v1180
        %2077 = vmatpush1.msra.mxu0 %v1179
        %2078 = vmatprep.subr.mxu0 %v1212
        %2079 = vmatpush1.msra.mxu0 %v1211
        %2080 = vmatprep.subr.mxu0 %v1244
        %2081 = vmatpush1.msra.mxu0 %v1243
        %2082 = vmatprep.subr.mxu0 %v1276
        %2083 = vmatpush1.msra.mxu0 %v1275
        %2084 = vmatprep.subr.mxu0 %v1308
        %2085 = vmatpush1.msra.mxu0 %v1307
        %2086 = vmatprep.subr.mxu0 %v1340
        %2087 = vmatpush1.msra.mxu0 %v1339
        %2088 = vmatprep.subr.mxu0 %v1372
        %2089 = vmatpush1.msra.mxu0 %v1371
        %2090 = vmatprep.mubr.f32.mxu0 %v1386
        %2091 = vmatmul.mubr.f32.gmra.mrb[0].mxu0 %v1385
        %v2092 = vpop.f32.mrb[0].mxu0
        %v2093 = vadd.f32 0.0, %v2092
        %v2094 = vpop.f32.mrb[0].mxu0
        %v2095 = vadd.f32 0.0, %v2094
        %2096 = vdwg.mxu0
        %2097 = vmatprep.subr.mxu0 %v382
        %2098 = vmatpush1.msra.mxu0 %v381
        %2099 = vmatprep.subr.mxu0 %v414
        %2100 = vmatpush1.msra.mxu0 %v413
        %2101 = vmatprep.subr.mxu0 %v446
        %2102 = vmatpush1.msra.mxu0 %v445
        %2103 = vmatprep.subr.mxu0 %v478
        %2104 = vmatpush1.msra.mxu0 %v477
        %2105 = vmatprep.subr.mxu0 %v510
        %2106 = vmatpush1.msra.mxu0 %v509
        %2107 = vmatprep.subr.mxu0 %v542
        %2108 = vmatpush1.msra.mxu0 %v541
        %2109 = vmatprep.subr.mxu0 %v574
        %2110 = vmatpush1.msra.mxu0 %v573
        %2111 = vmatprep.subr.mxu0 %v606
        %2112 = vmatpush1.msra.mxu0 %v605
        %2113 = vmatprep.subr.mxu0 %v638
        %2114 = vmatpush1.msra.mxu0 %v637
        %2115 = vmatprep.subr.mxu0 %v670
        %2116 = vmatpush1.msra.mxu0 %v669
        %2117 = vmatprep.subr.mxu0 %v702
        %2118 = vmatpush1.msra.mxu0 %v701
        %2119 = vmatprep.subr.mxu0 %v734
        %2120 = vmatpush1.msra.mxu0 %v733
        %2121 = vmatprep.subr.mxu0 %v766
        %2122 = vmatpush1.msra.mxu0 %v765
        %2123 = vmatprep.subr.mxu0 %v798
        %2124 = vmatpush1.msra.mxu0 %v797
        %2125 = vmatprep.subr.mxu0 %v830
        %2126 = vmatpush1.msra.mxu0 %v829
        %2127 = vmatprep.subr.mxu0 %v862
        %2128 = vmatpush1.msra.mxu0 %v861
        %2129 = vmatprep.subr.mxu0 %v894
        %2130 = vmatpush1.msra.mxu0 %v893
        %2131 = vmatprep.subr.mxu0 %v926
        %2132 = vmatpush1.msra.mxu0 %v925
        %2133 = vmatprep.subr.mxu0 %v958
        %2134 = vmatpush1.msra.mxu0 %v957
        %2135 = vmatprep.subr.mxu0 %v990
        %2136 = vmatpush1.msra.mxu0 %v989
        %2137 = vmatprep.subr.mxu0 %v1022
        %2138 = vmatpush1.msra.mxu0 %v1021
        %2139 = vmatprep.subr.mxu0 %v1054
        %2140 = vmatpush1.msra.mxu0 %v1053
        %2141 = vmatprep.subr.mxu0 %v1086
        %2142 = vmatpush1.msra.mxu0 %v1085
        %2143 = vmatprep.subr.mxu0 %v1118
        %2144 = vmatpush1.msra.mxu0 %v1117
        %2145 = vmatprep.subr.mxu0 %v1150
        %2146 = vmatpush1.msra.mxu0 %v1149
        %2147 = vmatprep.subr.mxu0 %v1182
        %2148 = vmatpush1.msra.mxu0 %v1181
        %2149 = vmatprep.subr.mxu0 %v1214
        %2150 = vmatpush1.msra.mxu0 %v1213
        %2151 = vmatprep.subr.mxu0 %v1246
        %2152 = vmatpush1.msra.mxu0 %v1245
        %2153 = vmatprep.subr.mxu0 %v1278
        %2154 = vmatpush1.msra.mxu0 %v1277
        %2155 = vmatprep.subr.mxu0 %v1310
        %2156 = vmatpush1.msra.mxu0 %v1309
        %2157 = vmatprep.subr.mxu0 %v1342
        %2158 = vmatpush1.msra.mxu0 %v1341
        %2159 = vmatprep.subr.mxu0 %v1374
        %2160 = vmatpush1.msra.mxu0 %v1373
        %2161 = vmatprep.mubr.f32.mxu0 %v1386
        %2162 = vmatmul.mubr.f32.gmra.mrb[0].mxu0 %v1385
        %v2163 = vpop.f32.mrb[0].mxu0
        %v2164 = vadd.f32 0.0, %v2163
        %v2165 = vpop.f32.mrb[0].mxu0
        %v2166 = vadd.f32 0.0, %v2165
        %2167 = vdwg.mxu0
        %2168 = vmatprep.subr.mxu0 %v384
        %2169 = vmatpush1.msra.mxu0 %v383
        %2170 = vmatprep.subr.mxu0 %v416
        %2171 = vmatpush1.msra.mxu0 %v415
        %2172 = vmatprep.subr.mxu0 %v448
        %2173 = vmatpush1.msra.mxu0 %v447
        %2174 = vmatprep.subr.mxu0 %v480
        %2175 = vmatpush1.msra.mxu0 %v479
        %2176 = vmatprep.subr.mxu0 %v512
        %2177 = vmatpush1.msra.mxu0 %v511
        %2178 = vmatprep.subr.mxu0 %v544
        %2179 = vmatpush1.msra.mxu0 %v543
        %2180 = vmatprep.subr.mxu0 %v576
        %2181 = vmatpush1.msra.mxu0 %v575
        %2182 = vmatprep.subr.mxu0 %v608
        %2183 = vmatpush1.msra.mxu0 %v607
        %2184 = vmatprep.subr.mxu0 %v640
        %2185 = vmatpush1.msra.mxu0 %v639
        %2186 = vmatprep.subr.mxu0 %v672
        %2187 = vmatpush1.msra.mxu0 %v671
        %2188 = vmatprep.subr.mxu0 %v704
        %2189 = vmatpush1.msra.mxu0 %v703
        %2190 = vmatprep.subr.mxu0 %v736
        %2191 = vmatpush1.msra.mxu0 %v735
        %2192 = vmatprep.subr.mxu0 %v768
        %2193 = vmatpush1.msra.mxu0 %v767
        %2194 = vmatprep.subr.mxu0 %v800
        %2195 = vmatpush1.msra.mxu0 %v799
        %2196 = vmatprep.subr.mxu0 %v832
        %2197 = vmatpush1.msra.mxu0 %v831
        %2198 = vmatprep.subr.mxu0 %v864
        %2199 = vmatpush1.msra.mxu0 %v863
        %2200 = vmatprep.subr.mxu0 %v896
        %2201 = vmatpush1.msra.mxu0 %v895
        %2202 = vmatprep.subr.mxu0 %v928
        %2203 = vmatpush1.msra.mxu0 %v927
        %2204 = vmatprep.subr.mxu0 %v960
        %2205 = vmatpush1.msra.mxu0 %v959
        %2206 = vmatprep.subr.mxu0 %v992
        %2207 = vmatpush1.msra.mxu0 %v991
        %2208 = vmatprep.subr.mxu0 %v1024
        %2209 = vmatpush1.msra.mxu0 %v1023
        %2210 = vmatprep.subr.mxu0 %v1056
        %2211 = vmatpush1.msra.mxu0 %v1055
        %2212 = vmatprep.subr.mxu0 %v1088
        %2213 = vmatpush1.msra.mxu0 %v1087
        %2214 = vmatprep.subr.mxu0 %v1120
        %2215 = vmatpush1.msra.mxu0 %v1119
        %2216 = vmatprep.subr.mxu0 %v1152
        %2217 = vmatpush1.msra.mxu0 %v1151
        %2218 = vmatprep.subr.mxu0 %v1184
        %2219 = vmatpush1.msra.mxu0 %v1183
        %2220 = vmatprep.subr.mxu0 %v1216
        %2221 = vmatpush1.msra.mxu0 %v1215
        %2222 = vmatprep.subr.mxu0 %v1248
        %2223 = vmatpush1.msra.mxu0 %v1247
        %2224 = vmatprep.subr.mxu0 %v1280
        %2225 = vmatpush1.msra.mxu0 %v1279
        %2226 = vmatprep.subr.mxu0 %v1312
        %2227 = vmatpush1.msra.mxu0 %v1311
        %2228 = vmatprep.subr.mxu0 %v1344
        %2229 = vmatpush1.msra.mxu0 %v1343
        %2230 = vmatprep.subr.mxu0 %v1376
        %2231 = vmatpush1.msra.mxu0 %v1375
        %2232 = vmatprep.mubr.f32.mxu0 %v1386
        %2233 = vmatmul.mubr.f32.gmra.mrb[0].mxu0 %v1385
        %v2234 = vpop.f32.mrb[0].mxu0
        %v2235 = vadd.f32 0.0, %v2234
        %v2236 = vpop.f32.mrb[0].mxu0
        %v2237 = vadd.f32 0.0, %v2236
        %2238 = vdwg.mxu0
        %2239 = vmatprep.subr.mxu0 %v386
        %2240 = vmatpush1.msra.mxu0 %v385
        %2241 = vmatprep.subr.mxu0 %v418
        %2242 = vmatpush1.msra.mxu0 %v417
        %2243 = vmatprep.subr.mxu0 %v450
        %2244 = vmatpush1.msra.mxu0 %v449
        %2245 = vmatprep.subr.mxu0 %v482
        %2246 = vmatpush1.msra.mxu0 %v481
        %2247 = vmatprep.subr.mxu0 %v514
        %2248 = vmatpush1.msra.mxu0 %v513
        %2249 = vmatprep.subr.mxu0 %v546
        %2250 = vmatpush1.msra.mxu0 %v545
        %2251 = vmatprep.subr.mxu0 %v578
        %2252 = vmatpush1.msra.mxu0 %v577
        %2253 = vmatprep.subr.mxu0 %v610
        %2254 = vmatpush1.msra.mxu0 %v609
        %2255 = vmatprep.subr.mxu0 %v642
        %2256 = vmatpush1.msra.mxu0 %v641
        %2257 = vmatprep.subr.mxu0 %v674
        %2258 = vmatpush1.msra.mxu0 %v673
        %2259 = vmatprep.subr.mxu0 %v706
        %2260 = vmatpush1.msra.mxu0 %v705
        %2261 = vmatprep.subr.mxu0 %v738
        %2262 = vmatpush1.msra.mxu0 %v737
        %2263 = vmatprep.subr.mxu0 %v770
        %2264 = vmatpush1.msra.mxu0 %v769
        %2265 = vmatprep.subr.mxu0 %v802
        %2266 = vmatpush1.msra.mxu0 %v801
        %2267 = vmatprep.subr.mxu0 %v834
        %2268 = vmatpush1.msra.mxu0 %v833
        %2269 = vmatprep.subr.mxu0 %v866
        %2270 = vmatpush1.msra.mxu0 %v865
        %2271 = vmatprep.subr.mxu0 %v898
        %2272 = vmatpush1.msra.mxu0 %v897
        %2273 = vmatprep.subr.mxu0 %v930
        %2274 = vmatpush1.msra.mxu0 %v929
        %2275 = vmatprep.subr.mxu0 %v962
        %2276 = vmatpush1.msra.mxu0 %v961
        %2277 = vmatprep.subr.mxu0 %v994
        %2278 = vmatpush1.msra.mxu0 %v993
        %2279 = vmatprep.subr.mxu0 %v1026
        %2280 = vmatpush1.msra.mxu0 %v1025
        %2281 = vmatprep.subr.mxu0 %v1058
        %2282 = vmatpush1.msra.mxu0 %v1057
        %2283 = vmatprep.subr.mxu0 %v1090
        %2284 = vmatpush1.msra.mxu0 %v1089
        %2285 = vmatprep.subr.mxu0 %v1122
        %2286 = vmatpush1.msra.mxu0 %v1121
        %2287 = vmatprep.subr.mxu0 %v1154
        %2288 = vmatpush1.msra.mxu0 %v1153
        %2289 = vmatprep.subr.mxu0 %v1186
        %2290 = vmatpush1.msra.mxu0 %v1185
        %2291 = vmatprep.subr.mxu0 %v1218
        %2292 = vmatpush1.msra.mxu0 %v1217
        %2293 = vmatprep.subr.mxu0 %v1250
        %2294 = vmatpush1.msra.mxu0 %v1249
        %2295 = vmatprep.subr.mxu0 %v1282
        %2296 = vmatpush1.msra.mxu0 %v1281
        %2297 = vmatprep.subr.mxu0 %v1314
        %2298 = vmatpush1.msra.mxu0 %v1313
        %2299 = vmatprep.subr.mxu0 %v1346
        %2300 = vmatpush1.msra.mxu0 %v1345
        %2301 = vmatprep.subr.mxu0 %v1378
        %2302 = vmatpush1.msra.mxu0 %v1377
        %2303 = vmatprep.mubr.f32.mxu0 %v1386
        %2304 = vmatmul.mubr.f32.gmra.mrb[0].mxu0 %v1385
        %v2305 = vpop.f32.mrb[0].mxu0
        %v2306 = vadd.f32 0.0, %v2305
        %v2307 = vpop.f32.mrb[0].mxu0
        %v2308 = vadd.f32 0.0, %v2307
        %2309 = vdwg.mxu0
        %2310 = vmatprep.subr.mxu0 %v388
        %2311 = vmatpush1.msra.mxu0 %v387
        %2312 = vmatprep.subr.mxu0 %v420
        %2313 = vmatpush1.msra.mxu0 %v419
        %2314 = vmatprep.subr.mxu0 %v452
        %2315 = vmatpush1.msra.mxu0 %v451
        %2316 = vmatprep.subr.mxu0 %v484
        %2317 = vmatpush1.msra.mxu0 %v483
        %2318 = vmatprep.subr.mxu0 %v516
        %2319 = vmatpush1.msra.mxu0 %v515
        %2320 = vmatprep.subr.mxu0 %v548
        %2321 = vmatpush1.msra.mxu0 %v547
        %2322 = vmatprep.subr.mxu0 %v580
        %2323 = vmatpush1.msra.mxu0 %v579
        %2324 = vmatprep.subr.mxu0 %v612
        %2325 = vmatpush1.msra.mxu0 %v611
        %2326 = vmatprep.subr.mxu0 %v644
        %2327 = vmatpush1.msra.mxu0 %v643
        %2328 = vmatprep.subr.mxu0 %v676
        %2329 = vmatpush1.msra.mxu0 %v675
        %2330 = vmatprep.subr.mxu0 %v708
        %2331 = vmatpush1.msra.mxu0 %v707
        %2332 = vmatprep.subr.mxu0 %v740
        %2333 = vmatpush1.msra.mxu0 %v739
        %2334 = vmatprep.subr.mxu0 %v772
        %2335 = vmatpush1.msra.mxu0 %v771
        %2336 = vmatprep.subr.mxu0 %v804
        %2337 = vmatpush1.msra.mxu0 %v803
        %2338 = vmatprep.subr.mxu0 %v836
        %2339 = vmatpush1.msra.mxu0 %v835
        %2340 = vmatprep.subr.mxu0 %v868
        %2341 = vmatpush1.msra.mxu0 %v867
        %2342 = vmatprep.subr.mxu0 %v900
        %2343 = vmatpush1.msra.mxu0 %v899
        %2344 = vmatprep.subr.mxu0 %v932
        %2345 = vmatpush1.msra.mxu0 %v931
        %2346 = vmatprep.subr.mxu0 %v964
        %2347 = vmatpush1.msra.mxu0 %v963
        %2348 = vmatprep.subr.mxu0 %v996
        %2349 = vmatpush1.msra.mxu0 %v995
        %2350 = vmatprep.subr.mxu0 %v1028
        %2351 = vmatpush1.msra.mxu0 %v1027
        %2352 = vmatprep.subr.mxu0 %v1060
        %2353 = vmatpush1.msra.mxu0 %v1059
        %2354 = vmatprep.subr.mxu0 %v1092
        %2355 = vmatpush1.msra.mxu0 %v1091
        %2356 = vmatprep.subr.mxu0 %v1124
        %2357 = vmatpush1.msra.mxu0 %v1123
        %2358 = vmatprep.subr.mxu0 %v1156
        %2359 = vmatpush1.msra.mxu0 %v1155
        %2360 = vmatprep.subr.mxu0 %v1188
        %2361 = vmatpush1.msra.mxu0 %v1187
        %2362 = vmatprep.subr.mxu0 %v1220
        %2363 = vmatpush1.msra.mxu0 %v1219
        %2364 = vmatprep.subr.mxu0 %v1252
        %2365 = vmatpush1.msra.mxu0 %v1251
        %2366 = vmatprep.subr.mxu0 %v1284
        %2367 = vmatpush1.msra.mxu0 %v1283
        %2368 = vmatprep.subr.mxu0 %v1316
        %2369 = vmatpush1.msra.mxu0 %v1315
        %2370 = vmatprep.subr.mxu0 %v1348
        %2371 = vmatpush1.msra.mxu0 %v1347
        %2372 = vmatprep.subr.mxu0 %v1380
        %2373 = vmatpush1.msra.mxu0 %v1379
        %2374 = vmatprep.mubr.f32.mxu0 %v1386
        %2375 = vmatmul.mubr.f32.gmra.mrb[0].mxu0 %v1385
        %v2376 = vpop.f32.mrb[0].mxu0
        %v2377 = vadd.f32 0.0, %v2376
        %v2378 = vpop.f32.mrb[0].mxu0
        %v2379 = vadd.f32 0.0, %v2378
        %2380 = vdwg.mxu0
        %2381 = vmatprep.subr.mxu0 %v390
        %2382 = vmatpush1.msra.mxu0 %v389
        %2383 = vmatprep.subr.mxu0 %v422
        %2384 = vmatpush1.msra.mxu0 %v421
        %2385 = vmatprep.subr.mxu0 %v454
        %2386 = vmatpush1.msra.mxu0 %v453
        %2387 = vmatprep.subr.mxu0 %v486
        %2388 = vmatpush1.msra.mxu0 %v485
        %2389 = vmatprep.subr.mxu0 %v518
        %2390 = vmatpush1.msra.mxu0 %v517
        %2391 = vmatprep.subr.mxu0 %v550
        %2392 = vmatpush1.msra.mxu0 %v549
        %2393 = vmatprep.subr.mxu0 %v582
        %2394 = vmatpush1.msra.mxu0 %v581
        %2395 = vmatprep.subr.mxu0 %v614
        %2396 = vmatpush1.msra.mxu0 %v613
        %2397 = vmatprep.subr.mxu0 %v646
        %2398 = vmatpush1.msra.mxu0 %v645
        %2399 = vmatprep.subr.mxu0 %v678
        %2400 = vmatpush1.msra.mxu0 %v677
        %2401 = vmatprep.subr.mxu0 %v710
        %2402 = vmatpush1.msra.mxu0 %v709
        %2403 = vmatprep.subr.mxu0 %v742
        %2404 = vmatpush1.msra.mxu0 %v741
        %2405 = vmatprep.subr.mxu0 %v774
        %2406 = vmatpush1.msra.mxu0 %v773
        %2407 = vmatprep.subr.mxu0 %v806
        %2408 = vmatpush1.msra.mxu0 %v805
        %2409 = vmatprep.subr.mxu0 %v838
        %2410 = vmatpush1.msra.mxu0 %v837
        %2411 = vmatprep.subr.mxu0 %v870
        %2412 = vmatpush1.msra.mxu0 %v869
        %2413 = vmatprep.subr.mxu0 %v902
        %2414 = vmatpush1.msra.mxu0 %v901
        %2415 = vmatprep.subr.mxu0 %v934
        %2416 = vmatpush1.msra.mxu0 %v933
        %2417 = vmatprep.subr.mxu0 %v966
        %2418 = vmatpush1.msra.mxu0 %v965
        %2419 = vmatprep.subr.mxu0 %v998
        %2420 = vmatpush1.msra.mxu0 %v997
        %2421 = vmatprep.subr.mxu0 %v1030
        %2422 = vmatpush1.msra.mxu0 %v1029
        %2423 = vmatprep.subr.mxu0 %v1062
        %2424 = vmatpush1.msra.mxu0 %v1061
        %2425 = vmatprep.subr.mxu0 %v1094
        %2426 = vmatpush1.msra.mxu0 %v1093
        %2427 = vmatprep.subr.mxu0 %v1126
        %2428 = vmatpush1.msra.mxu0 %v1125
        %2429 = vmatprep.subr.mxu0 %v1158
        %2430 = vmatpush1.msra.mxu0 %v1157
        %2431 = vmatprep.subr.mxu0 %v1190
        %2432 = vmatpush1.msra.mxu0 %v1189
        %2433 = vmatprep.subr.mxu0 %v1222
        %2434 = vmatpush1.msra.mxu0 %v1221
        %2435 = vmatprep.subr.mxu0 %v1254
        %2436 = vmatpush1.msra.mxu0 %v1253
        %2437 = vmatprep.subr.mxu0 %v1286
        %2438 = vmatpush1.msra.mxu0 %v1285
        %2439 = vmatprep.subr.mxu0 %v1318
        %2440 = vmatpush1.msra.mxu0 %v1317
        %2441 = vmatprep.subr.mxu0 %v1350
        %2442 = vmatpush1.msra.mxu0 %v1349
        %2443 = vmatprep.subr.mxu0 %v1382
        %2444 = vmatpush1.msra.mxu0 %v1381
        %2445 = vmatprep.mubr.f32.mxu0 %v1386
        %2446 = vmatmul.mubr.f32.gmra.mrb[0].mxu0 %v1385
        %v2447 = vpop.f32.mrb[0].mxu0
        %v2448 = vadd.f32 0.0, %v2447
        %v2449 = vpop.f32.mrb[0].mxu0
        %v2450 = vadd.f32 0.0, %v2449
        %2451 = vdwg.mxu0
        %2452 = vmatprep.subr.mxu0 %v392
        %2453 = vmatpush1.msra.mxu0 %v391
        %2454 = vmatprep.subr.mxu0 %v424
        %2455 = vmatpush1.msra.mxu0 %v423
        %2456 = vmatprep.subr.mxu0 %v456
        %2457 = vmatpush1.msra.mxu0 %v455
        %2458 = vmatprep.subr.mxu0 %v488
        %2459 = vmatpush1.msra.mxu0 %v487
        %2460 = vmatprep.subr.mxu0 %v520
        %2461 = vmatpush1.msra.mxu0 %v519
        %2462 = vmatprep.subr.mxu0 %v552
        %2463 = vmatpush1.msra.mxu0 %v551
        %2464 = vmatprep.subr.mxu0 %v584
        %2465 = vmatpush1.msra.mxu0 %v583
        %2466 = vmatprep.subr.mxu0 %v616
        %2467 = vmatpush1.msra.mxu0 %v615
        %2468 = vmatprep.subr.mxu0 %v648
        %2469 = vmatpush1.msra.mxu0 %v647
        %2470 = vmatprep.subr.mxu0 %v680
        %2471 = vmatpush1.msra.mxu0 %v679
        %2472 = vmatprep.subr.mxu0 %v712
        %2473 = vmatpush1.msra.mxu0 %v711
        %2474 = vmatprep.subr.mxu0 %v744
        %2475 = vmatpush1.msra.mxu0 %v743
        %2476 = vmatprep.subr.mxu0 %v776
        %2477 = vmatpush1.msra.mxu0 %v775
        %2478 = vmatprep.subr.mxu0 %v808
        %2479 = vmatpush1.msra.mxu0 %v807
        %2480 = vmatprep.subr.mxu0 %v840
        %2481 = vmatpush1.msra.mxu0 %v839
        %2482 = vmatprep.subr.mxu0 %v872
        %2483 = vmatpush1.msra.mxu0 %v871
        %2484 = vmatprep.subr.mxu0 %v904
        %2485 = vmatpush1.msra.mxu0 %v903
        %2486 = vmatprep.subr.mxu0 %v936
        %2487 = vmatpush1.msra.mxu0 %v935
        %2488 = vmatprep.subr.mxu0 %v968
        %2489 = vmatpush1.msra.mxu0 %v967
        %2490 = vmatprep.subr.mxu0 %v1000
        %2491 = vmatpush1.msra.mxu0 %v999
        %2492 = vmatprep.subr.mxu0 %v1032
        %2493 = vmatpush1.msra.mxu0 %v1031
        %2494 = vmatprep.subr.mxu0 %v1064
        %2495 = vmatpush1.msra.mxu0 %v1063
        %2496 = vmatprep.subr.mxu0 %v1096
        %2497 = vmatpush1.msra.mxu0 %v1095
        %2498 = vmatprep.subr.mxu0 %v1128
        %2499 = vmatpush1.msra.mxu0 %v1127
        %2500 = vmatprep.subr.mxu0 %v1160
        %2501 = vmatpush1.msra.mxu0 %v1159
        %2502 = vmatprep.subr.mxu0 %v1192
        %2503 = vmatpush1.msra.mxu0 %v1191
        %2504 = vmatprep.subr.mxu0 %v1224
        %2505 = vmatpush1.msra.mxu0 %v1223
        %2506 = vmatprep.subr.mxu0 %v1256
        %2507 = vmatpush1.msra.mxu0 %v1255
        %2508 = vmatprep.subr.mxu0 %v1288
        %2509 = vmatpush1.msra.mxu0 %v1287
        %2510 = vmatprep.subr.mxu0 %v1320
        %2511 = vmatpush1.msra.mxu0 %v1319
        %2512 = vmatprep.subr.mxu0 %v1352
        %2513 = vmatpush1.msra.mxu0 %v1351
        %2514 = vmatprep.subr.mxu0 %v1384
        %2515 = vmatpush1.msra.mxu0 %v1383
        %2516 = vmatprep.mubr.f32.mxu0 %v1386
        %2517 = vmatmul.mubr.f32.gmra.mrb[0].mxu0 %v1385
        %v2518 = vpop.f32.mrb[0].mxu0
        %v2519 = vadd.f32 0.0, %v2518
        %v2520 = vpop.f32.mrb[0].mxu0
        %v2521 = vadd.f32 0.0, %v2520
        %2522 = vdwg.mxu0
        %v2527 = vlaneseq
        %v2528 = vshrl.u32 %v2527, 7
        %v2529 = vsub.s32 0, %v2528
        %v2530 = vrot.slane %v357, %v2529
        %v2531 = vlaneseq
        %v2532 = vshrl.u32 %v2531, 7
        %v2533 = vsub.s32 1, %v2532
        %v2534 = vrot.slane %v357, %v2533
        %v2535 = vlaneseq
        %v2536 = vshrl.u32 %v2535, 7
        %v2537 = vsub.s32 2, %v2536
        %v2538 = vrot.slane %v357, %v2537
        %v2539 = vlaneseq
        %v2540 = vshrl.u32 %v2539, 7
        %v2541 = vsub.s32 3, %v2540
        %v2542 = vrot.slane %v357, %v2541
        %v2543 = vlaneseq
        %v2544 = vshrl.u32 %v2543, 7
        %v2545 = vsub.s32 4, %v2544
        %v2546 = vrot.slane %v357, %v2545
        %v2547 = vlaneseq
        %v2548 = vshrl.u32 %v2547, 7
        %v2549 = vsub.s32 5, %v2548
        %v2550 = vrot.slane %v357, %v2549
        %v2551 = vlaneseq
        %v2552 = vshrl.u32 %v2551, 7
        %v2553 = vsub.s32 6, %v2552
        %v2554 = vrot.slane %v357, %v2553
        %v2555 = vlaneseq
        %v2556 = vshrl.u32 %v2555, 7
        %v2557 = vsub.s32 7, %v2556
        %v2558 = vrot.slane %v357, %v2557
        %v2559 = vlaneseq
        %v2560 = vshrl.u32 %v2559, 7
        %v2561 = vsub.s32 0, %v2560
        %v2562 = vrot.slane %v358, %v2561
        %v2563 = vlaneseq
        %v2564 = vshrl.u32 %v2563, 7
        %v2565 = vsub.s32 1, %v2564
        %v2566 = vrot.slane %v358, %v2565
        %v2567 = vlaneseq
        %v2568 = vshrl.u32 %v2567, 7
        %v2569 = vsub.s32 2, %v2568
        %v2570 = vrot.slane %v358, %v2569
        %v2571 = vlaneseq
        %v2572 = vshrl.u32 %v2571, 7
        %v2573 = vsub.s32 3, %v2572
        %v2574 = vrot.slane %v358, %v2573
        %v2575 = vlaneseq
        %v2576 = vshrl.u32 %v2575, 7
        %v2577 = vsub.s32 4, %v2576
        %v2578 = vrot.slane %v358, %v2577
        %v2579 = vlaneseq
        %v2580 = vshrl.u32 %v2579, 7
        %v2581 = vsub.s32 5, %v2580
        %v2582 = vrot.slane %v358, %v2581
        %v2583 = vlaneseq
        %v2584 = vshrl.u32 %v2583, 7
        %v2585 = vsub.s32 6, %v2584
        %v2586 = vrot.slane %v358, %v2585
        %v2587 = vlaneseq
        %v2588 = vshrl.u32 %v2587, 7
        %v2589 = vsub.s32 7, %v2588
        %v2590 = vrot.slane %v358, %v2589
        %v2591 = vlaneseq
        %v2592 = vshrl.u32 %v2591, 7
        %v2593 = vsub.s32 0, %v2592
        %v2594 = vrot.slane %v359, %v2593
        %v2595 = vlaneseq
        %v2596 = vshrl.u32 %v2595, 7
        %v2597 = vsub.s32 1, %v2596
        %v2598 = vrot.slane %v359, %v2597
        %v2599 = vlaneseq
        %v2600 = vshrl.u32 %v2599, 7
        %v2601 = vsub.s32 2, %v2600
        %v2602 = vrot.slane %v359, %v2601
        %v2603 = vlaneseq
        %v2604 = vshrl.u32 %v2603, 7
        %v2605 = vsub.s32 3, %v2604
        %v2606 = vrot.slane %v359, %v2605
        %v2607 = vlaneseq
        %v2608 = vshrl.u32 %v2607, 7
        %v2609 = vsub.s32 4, %v2608
        %v2610 = vrot.slane %v359, %v2609
        %v2611 = vlaneseq
        %v2612 = vshrl.u32 %v2611, 7
        %v2613 = vsub.s32 5, %v2612
        %v2614 = vrot.slane %v359, %v2613
        %v2615 = vlaneseq
        %v2616 = vshrl.u32 %v2615, 7
        %v2617 = vsub.s32 6, %v2616
        %v2618 = vrot.slane %v359, %v2617
        %v2619 = vlaneseq
        %v2620 = vshrl.u32 %v2619, 7
        %v2621 = vsub.s32 7, %v2620
        %v2622 = vrot.slane %v359, %v2621
        %v2623 = vlaneseq
        %v2624 = vshrl.u32 %v2623, 7
        %v2625 = vsub.s32 0, %v2624
        %v2626 = vrot.slane %v360, %v2625
        %v2627 = vlaneseq
        %v2628 = vshrl.u32 %v2627, 7
        %v2629 = vsub.s32 1, %v2628
        %v2630 = vrot.slane %v360, %v2629
        %v2631 = vlaneseq
        %v2632 = vshrl.u32 %v2631, 7
        %v2633 = vsub.s32 2, %v2632
        %v2634 = vrot.slane %v360, %v2633
        %v2635 = vlaneseq
        %v2636 = vshrl.u32 %v2635, 7
        %v2637 = vsub.s32 3, %v2636
        %v2638 = vrot.slane %v360, %v2637
        %v2639 = vlaneseq
        %v2640 = vshrl.u32 %v2639, 7
        %v2641 = vsub.s32 4, %v2640
        %v2642 = vrot.slane %v360, %v2641
        %v2643 = vlaneseq
        %v2644 = vshrl.u32 %v2643, 7
        %v2645 = vsub.s32 5, %v2644
        %v2646 = vrot.slane %v360, %v2645
        %v2647 = vlaneseq
        %v2648 = vshrl.u32 %v2647, 7
        %v2649 = vsub.s32 6, %v2648
        %v2650 = vrot.slane %v360, %v2649
        %v2651 = vlaneseq
        %v2652 = vshrl.u32 %v2651, 7
        %v2653 = vsub.s32 7, %v2652
        %v2654 = vrot.slane %v360, %v2653
        %v2687 = vmul.f32 %v1454, %v2530
        %v2688 = vmul.f32 %v1456, %v2534
        %v2689 = vmul.f32 %v1525, %v2538
        %v2690 = vmul.f32 %v1527, %v2542
        %v2691 = vmul.f32 %v1596, %v2546
        %v2692 = vmul.f32 %v1598, %v2550
        %v2693 = vmul.f32 %v1667, %v2554
        %v2694 = vmul.f32 %v1669, %v2558
        %v2695 = vmul.f32 %v1738, %v2562
        %v2696 = vmul.f32 %v1740, %v2566
        %v2697 = vmul.f32 %v1809, %v2570
        %v2698 = vmul.f32 %v1811, %v2574
        %v2699 = vmul.f32 %v1880, %v2578
        %v2700 = vmul.f32 %v1882, %v2582
        %v2701 = vmul.f32 %v1951, %v2586
        %v2702 = vmul.f32 %v1953, %v2590
        %v2703 = vmul.f32 %v2022, %v2594
        %v2704 = vmul.f32 %v2024, %v2598
        %v2705 = vmul.f32 %v2093, %v2602
        %v2706 = vmul.f32 %v2095, %v2606
        %v2707 = vmul.f32 %v2164, %v2610
        %v2708 = vmul.f32 %v2166, %v2614
        %v2709 = vmul.f32 %v2235, %v2618
        %v2710 = vmul.f32 %v2237, %v2622
        %v2711 = vmul.f32 %v2306, %v2626
        %v2712 = vmul.f32 %v2308, %v2630
        %v2713 = vmul.f32 %v2377, %v2634
        %v2714 = vmul.f32 %v2379, %v2638
        %v2715 = vmul.f32 %v2448, %v2642
        %v2716 = vmul.f32 %v2450, %v2646
        %v2717 = vmul.f32 %v2519, %v2650
        %v2718 = vmul.f32 %v2521, %v2654
        %v2723 = vlaneseq
        %v2724 = vshrl.u32 %v2723, 7
        %v2725 = vsub.s32 0, %v2724
        %v2726 = vrot.slane %v352, %v2725
        %v2727 = vlaneseq
        %v2728 = vshrl.u32 %v2727, 7
        %v2729 = vsub.s32 1, %v2728
        %v2730 = vrot.slane %v352, %v2729
        %v2731 = vlaneseq
        %v2732 = vshrl.u32 %v2731, 7
        %v2733 = vsub.s32 2, %v2732
        %v2734 = vrot.slane %v352, %v2733
        %v2735 = vlaneseq
        %v2736 = vshrl.u32 %v2735, 7
        %v2737 = vsub.s32 3, %v2736
        %v2738 = vrot.slane %v352, %v2737
        %v2739 = vlaneseq
        %v2740 = vshrl.u32 %v2739, 7
        %v2741 = vsub.s32 4, %v2740
        %v2742 = vrot.slane %v352, %v2741
        %v2743 = vlaneseq
        %v2744 = vshrl.u32 %v2743, 7
        %v2745 = vsub.s32 5, %v2744
        %v2746 = vrot.slane %v352, %v2745
        %v2747 = vlaneseq
        %v2748 = vshrl.u32 %v2747, 7
        %v2749 = vsub.s32 6, %v2748
        %v2750 = vrot.slane %v352, %v2749
        %v2751 = vlaneseq
        %v2752 = vshrl.u32 %v2751, 7
        %v2753 = vsub.s32 7, %v2752
        %v2754 = vrot.slane %v352, %v2753
        %v2755 = vlaneseq
        %v2756 = vshrl.u32 %v2755, 7
        %v2757 = vsub.s32 0, %v2756
        %v2758 = vrot.slane %v353, %v2757
        %v2759 = vlaneseq
        %v2760 = vshrl.u32 %v2759, 7
        %v2761 = vsub.s32 1, %v2760
        %v2762 = vrot.slane %v353, %v2761
        %v2763 = vlaneseq
        %v2764 = vshrl.u32 %v2763, 7
        %v2765 = vsub.s32 2, %v2764
        %v2766 = vrot.slane %v353, %v2765
        %v2767 = vlaneseq
        %v2768 = vshrl.u32 %v2767, 7
        %v2769 = vsub.s32 3, %v2768
        %v2770 = vrot.slane %v353, %v2769
        %v2771 = vlaneseq
        %v2772 = vshrl.u32 %v2771, 7
        %v2773 = vsub.s32 4, %v2772
        %v2774 = vrot.slane %v353, %v2773
        %v2775 = vlaneseq
        %v2776 = vshrl.u32 %v2775, 7
        %v2777 = vsub.s32 5, %v2776
        %v2778 = vrot.slane %v353, %v2777
        %v2779 = vlaneseq
        %v2780 = vshrl.u32 %v2779, 7
        %v2781 = vsub.s32 6, %v2780
        %v2782 = vrot.slane %v353, %v2781
        %v2783 = vlaneseq
        %v2784 = vshrl.u32 %v2783, 7
        %v2785 = vsub.s32 7, %v2784
        %v2786 = vrot.slane %v353, %v2785
        %v2787 = vlaneseq
        %v2788 = vshrl.u32 %v2787, 7
        %v2789 = vsub.s32 0, %v2788
        %v2790 = vrot.slane %v354, %v2789
        %v2791 = vlaneseq
        %v2792 = vshrl.u32 %v2791, 7
        %v2793 = vsub.s32 1, %v2792
        %v2794 = vrot.slane %v354, %v2793
        %v2795 = vlaneseq
        %v2796 = vshrl.u32 %v2795, 7
        %v2797 = vsub.s32 2, %v2796
        %v2798 = vrot.slane %v354, %v2797
        %v2799 = vlaneseq
        %v2800 = vshrl.u32 %v2799, 7
        %v2801 = vsub.s32 3, %v2800
        %v2802 = vrot.slane %v354, %v2801
        %v2803 = vlaneseq
        %v2804 = vshrl.u32 %v2803, 7
        %v2805 = vsub.s32 4, %v2804
        %v2806 = vrot.slane %v354, %v2805
        %v2807 = vlaneseq
        %v2808 = vshrl.u32 %v2807, 7
        %v2809 = vsub.s32 5, %v2808
        %v2810 = vrot.slane %v354, %v2809
        %v2811 = vlaneseq
        %v2812 = vshrl.u32 %v2811, 7
        %v2813 = vsub.s32 6, %v2812
        %v2814 = vrot.slane %v354, %v2813
        %v2815 = vlaneseq
        %v2816 = vshrl.u32 %v2815, 7
        %v2817 = vsub.s32 7, %v2816
        %v2818 = vrot.slane %v354, %v2817
        %v2819 = vlaneseq
        %v2820 = vshrl.u32 %v2819, 7
        %v2821 = vsub.s32 0, %v2820
        %v2822 = vrot.slane %v355, %v2821
        %v2823 = vlaneseq
        %v2824 = vshrl.u32 %v2823, 7
        %v2825 = vsub.s32 1, %v2824
        %v2826 = vrot.slane %v355, %v2825
        %v2827 = vlaneseq
        %v2828 = vshrl.u32 %v2827, 7
        %v2829 = vsub.s32 2, %v2828
        %v2830 = vrot.slane %v355, %v2829
        %v2831 = vlaneseq
        %v2832 = vshrl.u32 %v2831, 7
        %v2833 = vsub.s32 3, %v2832
        %v2834 = vrot.slane %v355, %v2833
        %v2835 = vlaneseq
        %v2836 = vshrl.u32 %v2835, 7
        %v2837 = vsub.s32 4, %v2836
        %v2838 = vrot.slane %v355, %v2837
        %v2839 = vlaneseq
        %v2840 = vshrl.u32 %v2839, 7
        %v2841 = vsub.s32 5, %v2840
        %v2842 = vrot.slane %v355, %v2841
        %v2843 = vlaneseq
        %v2844 = vshrl.u32 %v2843, 7
        %v2845 = vsub.s32 6, %v2844
        %v2846 = vrot.slane %v355, %v2845
        %v2847 = vlaneseq
        %v2848 = vshrl.u32 %v2847, 7
        %v2849 = vsub.s32 7, %v2848
        %v2850 = vrot.slane %v355, %v2849
        %v2883 = vadd.f32 %v2687, %v2726
        %v2884 = vadd.f32 %v2688, %v2730
        %v2885 = vadd.f32 %v2689, %v2734
        %v2886 = vadd.f32 %v2690, %v2738
        %v2887 = vadd.f32 %v2691, %v2742
        %v2888 = vadd.f32 %v2692, %v2746
        %v2889 = vadd.f32 %v2693, %v2750
        %v2890 = vadd.f32 %v2694, %v2754
        %v2891 = vadd.f32 %v2695, %v2758
        %v2892 = vadd.f32 %v2696, %v2762
        %v2893 = vadd.f32 %v2697, %v2766
        %v2894 = vadd.f32 %v2698, %v2770
        %v2895 = vadd.f32 %v2699, %v2774
        %v2896 = vadd.f32 %v2700, %v2778
        %v2897 = vadd.f32 %v2701, %v2782
        %v2898 = vadd.f32 %v2702, %v2786
        %v2899 = vadd.f32 %v2703, %v2790
        %v2900 = vadd.f32 %v2704, %v2794
        %v2901 = vadd.f32 %v2705, %v2798
        %v2902 = vadd.f32 %v2706, %v2802
        %v2903 = vadd.f32 %v2707, %v2806
        %v2904 = vadd.f32 %v2708, %v2810
        %v2905 = vadd.f32 %v2709, %v2814
        %v2906 = vadd.f32 %v2710, %v2818
        %v2907 = vadd.f32 %v2711, %v2822
        %v2908 = vadd.f32 %v2712, %v2826
        %v2909 = vadd.f32 %v2713, %v2830
        %v2910 = vadd.f32 %v2714, %v2834
        %v2911 = vadd.f32 %v2715, %v2838
        %v2912 = vadd.f32 %v2716, %v2842
        %v2913 = vadd.f32 %v2717, %v2846
        %v2914 = vadd.f32 %v2718, %v2850
        %v2915 = vmax.f32 %v2883, 0.0
        %v2916 = vmax.f32 %v2884, 0.0
        %v2917 = vmax.f32 %v2885, 0.0
        %v2918 = vmax.f32 %v2886, 0.0
        %v2919 = vmax.f32 %v2887, 0.0
        %v2920 = vmax.f32 %v2888, 0.0
        %v2921 = vmax.f32 %v2889, 0.0
        %v2922 = vmax.f32 %v2890, 0.0
        %v2923 = vmax.f32 %v2891, 0.0
        %v2924 = vmax.f32 %v2892, 0.0
        %v2925 = vmax.f32 %v2893, 0.0
        %v2926 = vmax.f32 %v2894, 0.0
        %v2927 = vmax.f32 %v2895, 0.0
        %v2928 = vmax.f32 %v2896, 0.0
        %v2929 = vmax.f32 %v2897, 0.0
        %v2930 = vmax.f32 %v2898, 0.0
        %v2931 = vmax.f32 %v2899, 0.0
        %v2932 = vmax.f32 %v2900, 0.0
        %v2933 = vmax.f32 %v2901, 0.0
        %v2934 = vmax.f32 %v2902, 0.0
        %v2935 = vmax.f32 %v2903, 0.0
        %v2936 = vmax.f32 %v2904, 0.0
        %v2937 = vmax.f32 %v2905, 0.0
        %v2938 = vmax.f32 %v2906, 0.0
        %v2939 = vmax.f32 %v2907, 0.0
        %v2940 = vmax.f32 %v2908, 0.0
        %v2941 = vmax.f32 %v2909, 0.0
        %v2942 = vmax.f32 %v2910, 0.0
        %v2943 = vmax.f32 %v2911, 0.0
        %v2944 = vmax.f32 %v2912, 0.0
        %v2945 = vmax.f32 %v2913, 0.0
        %v2946 = vmax.f32 %v2914, 0.0
        %v2947 = vld [vmem:[#allocation6] sm:$0xff]
        %v2948 = vld [vmem:[%s316] sm:$0xff]
        %v2949 = vld [vmem:[%s316 + $0x8] sm:$0xff]
        %v2950 = vld [vmem:[%s316 + $0x10] sm:$0xff]
        %v2951 = vld [vmem:[%s316 + $0x18] sm:$0xff]
        %v2952 = vld [vmem:[%s316 + $0x20] sm:$0xff]
        %v2953 = vld [vmem:[%s316 + $0x28] sm:$0xff]
        %v2954 = vld [vmem:[%s316 + $0x30] sm:$0xff]
        %v2955 = vld [vmem:[%s316 + $0x38] sm:$0xff]
        %v2956 = vld [vmem:[%s316 + $0x40] sm:$0xff]
        %v2957 = vld [vmem:[%s316 + $0x48] sm:$0xff]
        %v2958 = vld [vmem:[%s316 + $0x50] sm:$0xff]
        %v2959 = vld [vmem:[%s316 + $0x58] sm:$0xff]
        %v2960 = vld [vmem:[%s316 + $0x60] sm:$0xff]
        %v2961 = vld [vmem:[%s316 + $0x68] sm:$0xff]
        %v2962 = vld [vmem:[%s316 + $0x70] sm:$0xff]
        %v2963 = vld [vmem:[%s316 + $0x78] sm:$0xff]
        %v2964 = vld [vmem:[%s316 + $0x80] sm:$0xff]
        %v2965 = vld [vmem:[%s316 + $0x88] sm:$0xff]
        %v2966 = vld [vmem:[%s316 + $0x90] sm:$0xff]
        %v2967 = vld [vmem:[%s316 + $0x98] sm:$0xff]
        %v2968 = vld [vmem:[%s316 + $0xa0] sm:$0xff]
        %v2969 = vld [vmem:[%s316 + $0xa8] sm:$0xff]
        %v2970 = vld [vmem:[%s316 + $0xb0] sm:$0xff]
        %v2971 = vld [vmem:[%s316 + $0xb8] sm:$0xff]
        %v2972 = vld [vmem:[%s316 + $0xc0] sm:$0xff]
        %v2973 = vld [vmem:[%s316 + $0xc8] sm:$0xff]
        %v2974 = vld [vmem:[%s316 + $0xd0] sm:$0xff]
        %v2975 = vld [vmem:[%s316 + $0xd8] sm:$0xff]
        %v2976 = vld [vmem:[%s316 + $0xe0] sm:$0xff]
        %v2977 = vld [vmem:[%s316 + $0xe8] sm:$0xff]
        %v2978 = vld [vmem:[%s316 + $0xf0] sm:$0xff]
        %v2979 = vld [vmem:[%s316 + $0xf8] sm:$0xff]
        %v2980 = vld [vmem:[%s316 + $0x100] sm:$0xff]
        %v2981 = vld [vmem:[%s316 + $0x108] sm:$0xff]
        %v2982 = vld [vmem:[%s316 + $0x110] sm:$0xff]
        %v2983 = vld [vmem:[%s316 + $0x118] sm:$0xff]
        %v2984 = vld [vmem:[%s316 + $0x120] sm:$0xff]
        %v2985 = vld [vmem:[%s316 + $0x128] sm:$0xff]
        %v2986 = vld [vmem:[%s316 + $0x130] sm:$0xff]
        %v2987 = vld [vmem:[%s316 + $0x138] sm:$0xff]
        %v2988 = vld [vmem:[%s316 + $0x140] sm:$0xff]
        %v2989 = vld [vmem:[%s316 + $0x148] sm:$0xff]
        %v2990 = vld [vmem:[%s316 + $0x150] sm:$0xff]
        %v2991 = vld [vmem:[%s316 + $0x158] sm:$0xff]
        %v2992 = vld [vmem:[%s316 + $0x160] sm:$0xff]
        %v2993 = vld [vmem:[%s316 + $0x168] sm:$0xff]
        %v2994 = vld [vmem:[%s316 + $0x170] sm:$0xff]
        %v2995 = vld [vmem:[%s316 + $0x178] sm:$0xff]
        %v2996 = vld [vmem:[%s316 + $0x180] sm:$0xff]
        %v2997 = vld [vmem:[%s316 + $0x188] sm:$0xff]
        %v2998 = vld [vmem:[%s316 + $0x190] sm:$0xff]
        %v2999 = vld [vmem:[%s316 + $0x198] sm:$0xff]
        %v3000 = vld [vmem:[%s316 + $0x1a0] sm:$0xff]
        %v3001 = vld [vmem:[%s316 + $0x1a8] sm:$0xff]
        %v3002 = vld [vmem:[%s316 + $0x1b0] sm:$0xff]
        %v3003 = vld [vmem:[%s316 + $0x1b8] sm:$0xff]
        %v3004 = vld [vmem:[%s316 + $0x1c0] sm:$0xff]
        %v3005 = vld [vmem:[%s316 + $0x1c8] sm:$0xff]
        %v3006 = vld [vmem:[%s316 + $0x1d0] sm:$0xff]
        %v3007 = vld [vmem:[%s316 + $0x1d8] sm:$0xff]
        %v3008 = vld [vmem:[%s316 + $0x1e0] sm:$0xff]
        %v3009 = vld [vmem:[%s316 + $0x1e8] sm:$0xff]
        %v3010 = vld [vmem:[%s316 + $0x1f0] sm:$0xff]
        %v3011 = vld [vmem:[%s316 + $0x1f8] sm:$0xff]
        %v3012 = vld [vmem:[%s316 + $0x200] sm:$0xff]
        %v3013 = vld [vmem:[%s316 + $0x208] sm:$0xff]
        %v3014 = vld [vmem:[%s316 + $0x210] sm:$0xff]
        %v3015 = vld [vmem:[%s316 + $0x218] sm:$0xff]
        %v3016 = vld [vmem:[%s316 + $0x220] sm:$0xff]
        %v3017 = vld [vmem:[%s316 + $0x228] sm:$0xff]
        %v3018 = vld [vmem:[%s316 + $0x230] sm:$0xff]
        %v3019 = vld [vmem:[%s316 + $0x238] sm:$0xff]
        %v3020 = vld [vmem:[%s316 + $0x240] sm:$0xff]
        %v3021 = vld [vmem:[%s316 + $0x248] sm:$0xff]
        %v3022 = vld [vmem:[%s316 + $0x250] sm:$0xff]
        %v3023 = vld [vmem:[%s316 + $0x258] sm:$0xff]
        %v3024 = vld [vmem:[%s316 + $0x260] sm:$0xff]
        %v3025 = vld [vmem:[%s316 + $0x268] sm:$0xff]
        %v3026 = vld [vmem:[%s316 + $0x270] sm:$0xff]
        %v3027 = vld [vmem:[%s316 + $0x278] sm:$0xff]
        %v3028 = vld [vmem:[%s316 + $0x280] sm:$0xff]
        %v3029 = vld [vmem:[%s316 + $0x288] sm:$0xff]
        %v3030 = vld [vmem:[%s316 + $0x290] sm:$0xff]
        %v3031 = vld [vmem:[%s316 + $0x298] sm:$0xff]
        %v3032 = vld [vmem:[%s316 + $0x2a0] sm:$0xff]
        %v3033 = vld [vmem:[%s316 + $0x2a8] sm:$0xff]
        %v3034 = vld [vmem:[%s316 + $0x2b0] sm:$0xff]
        %v3035 = vld [vmem:[%s316 + $0x2b8] sm:$0xff]
        %v3036 = vld [vmem:[%s316 + $0x2c0] sm:$0xff]
        %v3037 = vld [vmem:[%s316 + $0x2c8] sm:$0xff]
        %v3038 = vld [vmem:[%s316 + $0x2d0] sm:$0xff]
        %v3039 = vld [vmem:[%s316 + $0x2d8] sm:$0xff]
        %v3040 = vld [vmem:[%s316 + $0x2e0] sm:$0xff]
        %v3041 = vld [vmem:[%s316 + $0x2e8] sm:$0xff]
        %v3042 = vld [vmem:[%s316 + $0x2f0] sm:$0xff]
        %v3043 = vld [vmem:[%s316 + $0x2f8] sm:$0xff]
        %v3044 = vld [vmem:[%s316 + $0x300] sm:$0xff]
        %v3045 = vld [vmem:[%s316 + $0x308] sm:$0xff]
        %v3046 = vld [vmem:[%s316 + $0x310] sm:$0xff]
        %v3047 = vld [vmem:[%s316 + $0x318] sm:$0xff]
        %v3048 = vld [vmem:[%s316 + $0x320] sm:$0xff]
        %v3049 = vld [vmem:[%s316 + $0x328] sm:$0xff]
        %v3050 = vld [vmem:[%s316 + $0x330] sm:$0xff]
        %v3051 = vld [vmem:[%s316 + $0x338] sm:$0xff]
        %v3052 = vld [vmem:[%s316 + $0x340] sm:$0xff]
        %v3053 = vld [vmem:[%s316 + $0x348] sm:$0xff]
        %v3054 = vld [vmem:[%s316 + $0x350] sm:$0xff]
        %v3055 = vld [vmem:[%s316 + $0x358] sm:$0xff]
        %v3056 = vld [vmem:[%s316 + $0x360] sm:$0xff]
        %v3057 = vld [vmem:[%s316 + $0x368] sm:$0xff]
        %v3058 = vld [vmem:[%s316 + $0x370] sm:$0xff]
        %v3059 = vld [vmem:[%s316 + $0x378] sm:$0xff]
        %v3060 = vld [vmem:[%s316 + $0x380] sm:$0xff]
        %v3061 = vld [vmem:[%s316 + $0x388] sm:$0xff]
        %v3062 = vld [vmem:[%s316 + $0x390] sm:$0xff]
        %v3063 = vld [vmem:[%s316 + $0x398] sm:$0xff]
        %v3064 = vld [vmem:[%s316 + $0x3a0] sm:$0xff]
        %v3065 = vld [vmem:[%s316 + $0x3a8] sm:$0xff]
        %v3066 = vld [vmem:[%s316 + $0x3b0] sm:$0xff]
        %v3067 = vld [vmem:[%s316 + $0x3b8] sm:$0xff]
        %v3068 = vld [vmem:[%s316 + $0x3c0] sm:$0xff]
        %v3069 = vld [vmem:[%s316 + $0x3c8] sm:$0xff]
        %v3070 = vld [vmem:[%s316 + $0x3d0] sm:$0xff]
        %v3071 = vld [vmem:[%s316 + $0x3d8] sm:$0xff]
        %v3072 = vld [vmem:[%s316 + $0x3e0] sm:$0xff]
        %v3073 = vld [vmem:[%s316 + $0x3e8] sm:$0xff]
        %v3074 = vld [vmem:[%s316 + $0x3f0] sm:$0xff]
        %v3075 = vld [vmem:[%s316 + $0x3f8] sm:$0xff]
        %v3076 = vld [vmem:[%s316 + $0x400] sm:$0xff]
        %v3077 = vld [vmem:[%s316 + $0x408] sm:$0xff]
        %v3078 = vld [vmem:[%s316 + $0x410] sm:$0xff]
        %v3079 = vld [vmem:[%s316 + $0x418] sm:$0xff]
        %v3080 = vld [vmem:[%s316 + $0x420] sm:$0xff]
        %v3081 = vld [vmem:[%s316 + $0x428] sm:$0xff]
        %v3082 = vld [vmem:[%s316 + $0x430] sm:$0xff]
        %v3083 = vld [vmem:[%s316 + $0x438] sm:$0xff]
        %v3084 = vld [vmem:[%s316 + $0x440] sm:$0xff]
        %v3085 = vld [vmem:[%s316 + $0x448] sm:$0xff]
        %v3086 = vld [vmem:[%s316 + $0x450] sm:$0xff]
        %v3087 = vld [vmem:[%s316 + $0x458] sm:$0xff]
        %v3088 = vld [vmem:[%s316 + $0x460] sm:$0xff]
        %v3089 = vld [vmem:[%s316 + $0x468] sm:$0xff]
        %v3090 = vld [vmem:[%s316 + $0x470] sm:$0xff]
        %v3091 = vld [vmem:[%s316 + $0x478] sm:$0xff]
        %v3092 = vld [vmem:[%s316 + $0x480] sm:$0xff]
        %v3093 = vld [vmem:[%s316 + $0x488] sm:$0xff]
        %v3094 = vld [vmem:[%s316 + $0x490] sm:$0xff]
        %v3095 = vld [vmem:[%s316 + $0x498] sm:$0xff]
        %v3096 = vld [vmem:[%s316 + $0x4a0] sm:$0xff]
        %v3097 = vld [vmem:[%s316 + $0x4a8] sm:$0xff]
        %v3098 = vld [vmem:[%s316 + $0x4b0] sm:$0xff]
        %v3099 = vld [vmem:[%s316 + $0x4b8] sm:$0xff]
        %v3100 = vld [vmem:[%s316 + $0x4c0] sm:$0xff]
        %v3101 = vld [vmem:[%s316 + $0x4c8] sm:$0xff]
        %v3102 = vld [vmem:[%s316 + $0x4d0] sm:$0xff]
        %v3103 = vld [vmem:[%s316 + $0x4d8] sm:$0xff]
        %v3104 = vld [vmem:[%s316 + $0x4e0] sm:$0xff]
        %v3105 = vld [vmem:[%s316 + $0x4e8] sm:$0xff]
        %v3106 = vld [vmem:[%s316 + $0x4f0] sm:$0xff]
        %v3107 = vld [vmem:[%s316 + $0x4f8] sm:$0xff]
        %v3108 = vld [vmem:[%s316 + $0x500] sm:$0xff]
        %v3109 = vld [vmem:[%s316 + $0x508] sm:$0xff]
        %v3110 = vld [vmem:[%s316 + $0x510] sm:$0xff]
        %v3111 = vld [vmem:[%s316 + $0x518] sm:$0xff]
        %v3112 = vld [vmem:[%s316 + $0x520] sm:$0xff]
        %v3113 = vld [vmem:[%s316 + $0x528] sm:$0xff]
        %v3114 = vld [vmem:[%s316 + $0x530] sm:$0xff]
        %v3115 = vld [vmem:[%s316 + $0x538] sm:$0xff]
        %v3116 = vld [vmem:[%s316 + $0x540] sm:$0xff]
        %v3117 = vld [vmem:[%s316 + $0x548] sm:$0xff]
        %v3118 = vld [vmem:[%s316 + $0x550] sm:$0xff]
        %v3119 = vld [vmem:[%s316 + $0x558] sm:$0xff]
        %v3120 = vld [vmem:[%s316 + $0x560] sm:$0xff]
        %v3121 = vld [vmem:[%s316 + $0x568] sm:$0xff]
        %v3122 = vld [vmem:[%s316 + $0x570] sm:$0xff]
        %v3123 = vld [vmem:[%s316 + $0x578] sm:$0xff]
        %v3124 = vld [vmem:[%s316 + $0x580] sm:$0xff]
        %v3125 = vld [vmem:[%s316 + $0x588] sm:$0xff]
        %v3126 = vld [vmem:[%s316 + $0x590] sm:$0xff]
        %v3127 = vld [vmem:[%s316 + $0x598] sm:$0xff]
        %v3128 = vld [vmem:[%s316 + $0x5a0] sm:$0xff]
        %v3129 = vld [vmem:[%s316 + $0x5a8] sm:$0xff]
        %v3130 = vld [vmem:[%s316 + $0x5b0] sm:$0xff]
        %v3131 = vld [vmem:[%s316 + $0x5b8] sm:$0xff]
        %v3132 = vld [vmem:[%s316 + $0x5c0] sm:$0xff]
        %v3133 = vld [vmem:[%s316 + $0x5c8] sm:$0xff]
        %v3134 = vld [vmem:[%s316 + $0x5d0] sm:$0xff]
        %v3135 = vld [vmem:[%s316 + $0x5d8] sm:$0xff]
        %v3136 = vld [vmem:[%s316 + $0x5e0] sm:$0xff]
        %v3137 = vld [vmem:[%s316 + $0x5e8] sm:$0xff]
        %v3138 = vld [vmem:[%s316 + $0x5f0] sm:$0xff]
        %v3139 = vld [vmem:[%s316 + $0x5f8] sm:$0xff]
        %v3140 = vld [vmem:[%s316 + $0x600] sm:$0xff]
        %v3141 = vld [vmem:[%s316 + $0x608] sm:$0xff]
        %v3142 = vld [vmem:[%s316 + $0x610] sm:$0xff]
        %v3143 = vld [vmem:[%s316 + $0x618] sm:$0xff]
        %v3144 = vld [vmem:[%s316 + $0x620] sm:$0xff]
        %v3145 = vld [vmem:[%s316 + $0x628] sm:$0xff]
        %v3146 = vld [vmem:[%s316 + $0x630] sm:$0xff]
        %v3147 = vld [vmem:[%s316 + $0x638] sm:$0xff]
        %v3148 = vld [vmem:[%s316 + $0x640] sm:$0xff]
        %v3149 = vld [vmem:[%s316 + $0x648] sm:$0xff]
        %v3150 = vld [vmem:[%s316 + $0x650] sm:$0xff]
        %v3151 = vld [vmem:[%s316 + $0x658] sm:$0xff]
        %v3152 = vld [vmem:[%s316 + $0x660] sm:$0xff]
        %v3153 = vld [vmem:[%s316 + $0x668] sm:$0xff]
        %v3154 = vld [vmem:[%s316 + $0x670] sm:$0xff]
        %v3155 = vld [vmem:[%s316 + $0x678] sm:$0xff]
        %v3156 = vld [vmem:[%s316 + $0x680] sm:$0xff]
        %v3157 = vld [vmem:[%s316 + $0x688] sm:$0xff]
        %v3158 = vld [vmem:[%s316 + $0x690] sm:$0xff]
        %v3159 = vld [vmem:[%s316 + $0x698] sm:$0xff]
        %v3160 = vld [vmem:[%s316 + $0x6a0] sm:$0xff]
        %v3161 = vld [vmem:[%s316 + $0x6a8] sm:$0xff]
        %v3162 = vld [vmem:[%s316 + $0x6b0] sm:$0xff]
        %v3163 = vld [vmem:[%s316 + $0x6b8] sm:$0xff]
        %v3164 = vld [vmem:[%s316 + $0x6c0] sm:$0xff]
        %v3165 = vld [vmem:[%s316 + $0x6c8] sm:$0xff]
        %v3166 = vld [vmem:[%s316 + $0x6d0] sm:$0xff]
        %v3167 = vld [vmem:[%s316 + $0x6d8] sm:$0xff]
        %v3168 = vld [vmem:[%s316 + $0x6e0] sm:$0xff]
        %v3169 = vld [vmem:[%s316 + $0x6e8] sm:$0xff]
        %v3170 = vld [vmem:[%s316 + $0x6f0] sm:$0xff]
        %v3171 = vld [vmem:[%s316 + $0x6f8] sm:$0xff]
        %v3172 = vld [vmem:[%s316 + $0x700] sm:$0xff]
        %v3173 = vld [vmem:[%s316 + $0x708] sm:$0xff]
        %v3174 = vld [vmem:[%s316 + $0x710] sm:$0xff]
        %v3175 = vld [vmem:[%s316 + $0x718] sm:$0xff]
        %v3176 = vld [vmem:[%s316 + $0x720] sm:$0xff]
        %v3177 = vld [vmem:[%s316 + $0x728] sm:$0xff]
        %v3178 = vld [vmem:[%s316 + $0x730] sm:$0xff]
        %v3179 = vld [vmem:[%s316 + $0x738] sm:$0xff]
        %v3180 = vld [vmem:[%s316 + $0x740] sm:$0xff]
        %v3181 = vld [vmem:[%s316 + $0x748] sm:$0xff]
        %v3182 = vld [vmem:[%s316 + $0x750] sm:$0xff]
        %v3183 = vld [vmem:[%s316 + $0x758] sm:$0xff]
        %v3184 = vld [vmem:[%s316 + $0x760] sm:$0xff]
        %v3185 = vld [vmem:[%s316 + $0x768] sm:$0xff]
        %v3186 = vld [vmem:[%s316 + $0x770] sm:$0xff]
        %v3187 = vld [vmem:[%s316 + $0x778] sm:$0xff]
        %v3188 = vld [vmem:[%s316 + $0x780] sm:$0xff]
        %v3189 = vld [vmem:[%s316 + $0x788] sm:$0xff]
        %v3190 = vld [vmem:[%s316 + $0x790] sm:$0xff]
        %v3191 = vld [vmem:[%s316 + $0x798] sm:$0xff]
        %v3192 = vld [vmem:[%s316 + $0x7a0] sm:$0xff]
        %v3193 = vld [vmem:[%s316 + $0x7a8] sm:$0xff]
        %v3194 = vld [vmem:[%s316 + $0x7b0] sm:$0xff]
        %v3195 = vld [vmem:[%s316 + $0x7b8] sm:$0xff]
        %v3196 = vld [vmem:[%s316 + $0x7c0] sm:$0xff]
        %v3197 = vld [vmem:[%s316 + $0x7c8] sm:$0xff]
        %v3198 = vld [vmem:[%s316 + $0x7d0] sm:$0xff]
        %v3199 = vld [vmem:[%s316 + $0x7d8] sm:$0xff]
        %v3200 = vld [vmem:[%s316 + $0x7e0] sm:$0xff]
        %v3201 = vld [vmem:[%s316 + $0x7e8] sm:$0xff]
        %v3202 = vld [vmem:[%s316 + $0x7f0] sm:$0xff]
        %v3203 = vld [vmem:[%s316 + $0x7f8] sm:$0xff]
        %v3204 = vld [vmem:[%s316 + $0x800] sm:$0xff]
        %v3205 = vld [vmem:[%s316 + $0x808] sm:$0xff]
        %v3206 = vld [vmem:[%s316 + $0x810] sm:$0xff]
        %v3207 = vld [vmem:[%s316 + $0x818] sm:$0xff]
        %v3208 = vld [vmem:[%s316 + $0x820] sm:$0xff]
        %v3209 = vld [vmem:[%s316 + $0x828] sm:$0xff]
        %v3210 = vld [vmem:[%s316 + $0x830] sm:$0xff]
        %v3211 = vld [vmem:[%s316 + $0x838] sm:$0xff]
        %v3212 = vld [vmem:[%s316 + $0x840] sm:$0xff]
        %v3213 = vld [vmem:[%s316 + $0x848] sm:$0xff]
        %v3214 = vld [vmem:[%s316 + $0x850] sm:$0xff]
        %v3215 = vld [vmem:[%s316 + $0x858] sm:$0xff]
        %v3216 = vld [vmem:[%s316 + $0x860] sm:$0xff]
        %v3217 = vld [vmem:[%s316 + $0x868] sm:$0xff]
        %v3218 = vld [vmem:[%s316 + $0x870] sm:$0xff]
        %v3219 = vld [vmem:[%s316 + $0x878] sm:$0xff]
        %v3220 = vld [vmem:[%s316 + $0x880] sm:$0xff]
        %v3221 = vld [vmem:[%s316 + $0x888] sm:$0xff]
        %v3222 = vld [vmem:[%s316 + $0x890] sm:$0xff]
        %v3223 = vld [vmem:[%s316 + $0x898] sm:$0xff]
        %v3224 = vld [vmem:[%s316 + $0x8a0] sm:$0xff]
        %v3225 = vld [vmem:[%s316 + $0x8a8] sm:$0xff]
        %v3226 = vld [vmem:[%s316 + $0x8b0] sm:$0xff]
        %v3227 = vld [vmem:[%s316 + $0x8b8] sm:$0xff]
        %v3228 = vld [vmem:[%s316 + $0x8c0] sm:$0xff]
        %v3229 = vld [vmem:[%s316 + $0x8c8] sm:$0xff]
        %v3230 = vld [vmem:[%s316 + $0x8d0] sm:$0xff]
        %v3231 = vld [vmem:[%s316 + $0x8d8] sm:$0xff]
        %v3232 = vld [vmem:[%s316 + $0x8e0] sm:$0xff]
        %v3233 = vld [vmem:[%s316 + $0x8e8] sm:$0xff]
        %v3234 = vld [vmem:[%s316 + $0x8f0] sm:$0xff]
        %v3235 = vld [vmem:[%s316 + $0x8f8] sm:$0xff]
        %v3236 = vld [vmem:[%s316 + $0x900] sm:$0xff]
        %v3237 = vld [vmem:[%s316 + $0x908] sm:$0xff]
        %v3238 = vld [vmem:[%s316 + $0x910] sm:$0xff]
        %v3239 = vld [vmem:[%s316 + $0x918] sm:$0xff]
        %v3240 = vld [vmem:[%s316 + $0x920] sm:$0xff]
        %v3241 = vld [vmem:[%s316 + $0x928] sm:$0xff]
        %v3242 = vld [vmem:[%s316 + $0x930] sm:$0xff]
        %v3243 = vld [vmem:[%s316 + $0x938] sm:$0xff]
        %v3244 = vld [vmem:[%s316 + $0x940] sm:$0xff]
        %v3245 = vld [vmem:[%s316 + $0x948] sm:$0xff]
        %v3246 = vld [vmem:[%s316 + $0x950] sm:$0xff]
        %v3247 = vld [vmem:[%s316 + $0x958] sm:$0xff]
        %v3248 = vld [vmem:[%s316 + $0x960] sm:$0xff]
        %v3249 = vld [vmem:[%s316 + $0x968] sm:$0xff]
        %v3250 = vld [vmem:[%s316 + $0x970] sm:$0xff]
        %v3251 = vld [vmem:[%s316 + $0x978] sm:$0xff]
        %v3252 = vld [vmem:[%s316 + $0x980] sm:$0xff]
        %v3253 = vld [vmem:[%s316 + $0x988] sm:$0xff]
        %v3254 = vld [vmem:[%s316 + $0x990] sm:$0xff]
        %v3255 = vld [vmem:[%s316 + $0x998] sm:$0xff]
        %v3256 = vld [vmem:[%s316 + $0x9a0] sm:$0xff]
        %v3257 = vld [vmem:[%s316 + $0x9a8] sm:$0xff]
        %v3258 = vld [vmem:[%s316 + $0x9b0] sm:$0xff]
        %v3259 = vld [vmem:[%s316 + $0x9b8] sm:$0xff]
        %v3260 = vld [vmem:[%s316 + $0x9c0] sm:$0xff]
        %v3261 = vld [vmem:[%s316 + $0x9c8] sm:$0xff]
        %v3262 = vld [vmem:[%s316 + $0x9d0] sm:$0xff]
        %v3263 = vld [vmem:[%s316 + $0x9d8] sm:$0xff]
        %v3264 = vld [vmem:[%s316 + $0x9e0] sm:$0xff]
        %v3265 = vld [vmem:[%s316 + $0x9e8] sm:$0xff]
        %v3266 = vld [vmem:[%s316 + $0x9f0] sm:$0xff]
        %v3267 = vld [vmem:[%s316 + $0x9f8] sm:$0xff]
        %v3268 = vld [vmem:[%s316 + $0xa00] sm:$0xff]
        %v3269 = vld [vmem:[%s316 + $0xa08] sm:$0xff]
        %v3270 = vld [vmem:[%s316 + $0xa10] sm:$0xff]
        %v3271 = vld [vmem:[%s316 + $0xa18] sm:$0xff]
        %v3272 = vld [vmem:[%s316 + $0xa20] sm:$0xff]
        %v3273 = vld [vmem:[%s316 + $0xa28] sm:$0xff]
        %v3274 = vld [vmem:[%s316 + $0xa30] sm:$0xff]
        %v3275 = vld [vmem:[%s316 + $0xa38] sm:$0xff]
        %v3276 = vld [vmem:[%s316 + $0xa40] sm:$0xff]
        %v3277 = vld [vmem:[%s316 + $0xa48] sm:$0xff]
        %v3278 = vld [vmem:[%s316 + $0xa50] sm:$0xff]
        %v3279 = vld [vmem:[%s316 + $0xa58] sm:$0xff]
        %v3280 = vld [vmem:[%s316 + $0xa60] sm:$0xff]
        %v3281 = vld [vmem:[%s316 + $0xa68] sm:$0xff]
        %v3282 = vld [vmem:[%s316 + $0xa70] sm:$0xff]
        %v3283 = vld [vmem:[%s316 + $0xa78] sm:$0xff]
        %v3284 = vld [vmem:[%s316 + $0xa80] sm:$0xff]
        %v3285 = vld [vmem:[%s316 + $0xa88] sm:$0xff]
        %v3286 = vld [vmem:[%s316 + $0xa90] sm:$0xff]
        %v3287 = vld [vmem:[%s316 + $0xa98] sm:$0xff]
        %v3288 = vld [vmem:[%s316 + $0xaa0] sm:$0xff]
        %v3289 = vld [vmem:[%s316 + $0xaa8] sm:$0xff]
        %v3290 = vld [vmem:[%s316 + $0xab0] sm:$0xff]
        %v3291 = vld [vmem:[%s316 + $0xab8] sm:$0xff]
        %v3292 = vld [vmem:[%s316 + $0xac0] sm:$0xff]
        %v3293 = vld [vmem:[%s316 + $0xac8] sm:$0xff]
        %v3294 = vld [vmem:[%s316 + $0xad0] sm:$0xff]
        %v3295 = vld [vmem:[%s316 + $0xad8] sm:$0xff]
        %v3296 = vld [vmem:[%s316 + $0xae0] sm:$0xff]
        %v3297 = vld [vmem:[%s316 + $0xae8] sm:$0xff]
        %v3298 = vld [vmem:[%s316 + $0xaf0] sm:$0xff]
        %v3299 = vld [vmem:[%s316 + $0xaf8] sm:$0xff]
        %v3300 = vld [vmem:[%s316 + $0xb00] sm:$0xff]
        %v3301 = vld [vmem:[%s316 + $0xb08] sm:$0xff]
        %v3302 = vld [vmem:[%s316 + $0xb10] sm:$0xff]
        %v3303 = vld [vmem:[%s316 + $0xb18] sm:$0xff]
        %v3304 = vld [vmem:[%s316 + $0xb20] sm:$0xff]
        %v3305 = vld [vmem:[%s316 + $0xb28] sm:$0xff]
        %v3306 = vld [vmem:[%s316 + $0xb30] sm:$0xff]
        %v3307 = vld [vmem:[%s316 + $0xb38] sm:$0xff]
        %v3308 = vld [vmem:[%s316 + $0xb40] sm:$0xff]
        %v3309 = vld [vmem:[%s316 + $0xb48] sm:$0xff]
        %v3310 = vld [vmem:[%s316 + $0xb50] sm:$0xff]
        %v3311 = vld [vmem:[%s316 + $0xb58] sm:$0xff]
        %v3312 = vld [vmem:[%s316 + $0xb60] sm:$0xff]
        %v3313 = vld [vmem:[%s316 + $0xb68] sm:$0xff]
        %v3314 = vld [vmem:[%s316 + $0xb70] sm:$0xff]
        %v3315 = vld [vmem:[%s316 + $0xb78] sm:$0xff]
        %v3316 = vld [vmem:[%s316 + $0xb80] sm:$0xff]
        %v3317 = vld [vmem:[%s316 + $0xb88] sm:$0xff]
        %v3318 = vld [vmem:[%s316 + $0xb90] sm:$0xff]
        %v3319 = vld [vmem:[%s316 + $0xb98] sm:$0xff]
        %v3320 = vld [vmem:[%s316 + $0xba0] sm:$0xff]
        %v3321 = vld [vmem:[%s316 + $0xba8] sm:$0xff]
        %v3322 = vld [vmem:[%s316 + $0xbb0] sm:$0xff]
        %v3323 = vld [vmem:[%s316 + $0xbb8] sm:$0xff]
        %v3324 = vld [vmem:[%s316 + $0xbc0] sm:$0xff]
        %v3325 = vld [vmem:[%s316 + $0xbc8] sm:$0xff]
        %v3326 = vld [vmem:[%s316 + $0xbd0] sm:$0xff]
        %v3327 = vld [vmem:[%s316 + $0xbd8] sm:$0xff]
        %v3328 = vld [vmem:[%s316 + $0xbe0] sm:$0xff]
        %v3329 = vld [vmem:[%s316 + $0xbe8] sm:$0xff]
        %v3330 = vld [vmem:[%s316 + $0xbf0] sm:$0xff]
        %v3331 = vld [vmem:[%s316 + $0xbf8] sm:$0xff]
        %v3332 = vld [vmem:[%s316 + $0xc00] sm:$0xff]
        %v3333 = vld [vmem:[%s316 + $0xc08] sm:$0xff]
        %v3334 = vld [vmem:[%s316 + $0xc10] sm:$0xff]
        %v3335 = vld [vmem:[%s316 + $0xc18] sm:$0xff]
        %v3336 = vld [vmem:[%s316 + $0xc20] sm:$0xff]
        %v3337 = vld [vmem:[%s316 + $0xc28] sm:$0xff]
        %v3338 = vld [vmem:[%s316 + $0xc30] sm:$0xff]
        %v3339 = vld [vmem:[%s316 + $0xc38] sm:$0xff]
        %v3340 = vld [vmem:[%s316 + $0xc40] sm:$0xff]
        %v3341 = vld [vmem:[%s316 + $0xc48] sm:$0xff]
        %v3342 = vld [vmem:[%s316 + $0xc50] sm:$0xff]
        %v3343 = vld [vmem:[%s316 + $0xc58] sm:$0xff]
        %v3344 = vld [vmem:[%s316 + $0xc60] sm:$0xff]
        %v3345 = vld [vmem:[%s316 + $0xc68] sm:$0xff]
        %v3346 = vld [vmem:[%s316 + $0xc70] sm:$0xff]
        %v3347 = vld [vmem:[%s316 + $0xc78] sm:$0xff]
        %v3348 = vld [vmem:[%s316 + $0xc80] sm:$0xff]
        %v3349 = vld [vmem:[%s316 + $0xc88] sm:$0xff]
        %v3350 = vld [vmem:[%s316 + $0xc90] sm:$0xff]
        %v3351 = vld [vmem:[%s316 + $0xc98] sm:$0xff]
        %v3352 = vld [vmem:[%s316 + $0xca0] sm:$0xff]
        %v3353 = vld [vmem:[%s316 + $0xca8] sm:$0xff]
        %v3354 = vld [vmem:[%s316 + $0xcb0] sm:$0xff]
        %v3355 = vld [vmem:[%s316 + $0xcb8] sm:$0xff]
        %v3356 = vld [vmem:[%s316 + $0xcc0] sm:$0xff]
        %v3357 = vld [vmem:[%s316 + $0xcc8] sm:$0xff]
        %v3358 = vld [vmem:[%s316 + $0xcd0] sm:$0xff]
        %v3359 = vld [vmem:[%s316 + $0xcd8] sm:$0xff]
        %v3360 = vld [vmem:[%s316 + $0xce0] sm:$0xff]
        %v3361 = vld [vmem:[%s316 + $0xce8] sm:$0xff]
        %v3362 = vld [vmem:[%s316 + $0xcf0] sm:$0xff]
        %v3363 = vld [vmem:[%s316 + $0xcf8] sm:$0xff]
        %v3364 = vld [vmem:[%s316 + $0xd00] sm:$0xff]
        %v3365 = vld [vmem:[%s316 + $0xd08] sm:$0xff]
        %v3366 = vld [vmem:[%s316 + $0xd10] sm:$0xff]
        %v3367 = vld [vmem:[%s316 + $0xd18] sm:$0xff]
        %v3368 = vld [vmem:[%s316 + $0xd20] sm:$0xff]
        %v3369 = vld [vmem:[%s316 + $0xd28] sm:$0xff]
        %v3370 = vld [vmem:[%s316 + $0xd30] sm:$0xff]
        %v3371 = vld [vmem:[%s316 + $0xd38] sm:$0xff]
        %v3372 = vld [vmem:[%s316 + $0xd40] sm:$0xff]
        %v3373 = vld [vmem:[%s316 + $0xd48] sm:$0xff]
        %v3374 = vld [vmem:[%s316 + $0xd50] sm:$0xff]
        %v3375 = vld [vmem:[%s316 + $0xd58] sm:$0xff]
        %v3376 = vld [vmem:[%s316 + $0xd60] sm:$0xff]
        %v3377 = vld [vmem:[%s316 + $0xd68] sm:$0xff]
        %v3378 = vld [vmem:[%s316 + $0xd70] sm:$0xff]
        %v3379 = vld [vmem:[%s316 + $0xd78] sm:$0xff]
        %v3380 = vld [vmem:[%s316 + $0xd80] sm:$0xff]
        %v3381 = vld [vmem:[%s316 + $0xd88] sm:$0xff]
        %v3382 = vld [vmem:[%s316 + $0xd90] sm:$0xff]
        %v3383 = vld [vmem:[%s316 + $0xd98] sm:$0xff]
        %v3384 = vld [vmem:[%s316 + $0xda0] sm:$0xff]
        %v3385 = vld [vmem:[%s316 + $0xda8] sm:$0xff]
        %v3386 = vld [vmem:[%s316 + $0xdb0] sm:$0xff]
        %v3387 = vld [vmem:[%s316 + $0xdb8] sm:$0xff]
        %v3388 = vld [vmem:[%s316 + $0xdc0] sm:$0xff]
        %v3389 = vld [vmem:[%s316 + $0xdc8] sm:$0xff]
        %v3390 = vld [vmem:[%s316 + $0xdd0] sm:$0xff]
        %v3391 = vld [vmem:[%s316 + $0xdd8] sm:$0xff]
        %v3392 = vld [vmem:[%s316 + $0xde0] sm:$0xff]
        %v3393 = vld [vmem:[%s316 + $0xde8] sm:$0xff]
        %v3394 = vld [vmem:[%s316 + $0xdf0] sm:$0xff]
        %v3395 = vld [vmem:[%s316 + $0xdf8] sm:$0xff]
        %v3396 = vld [vmem:[%s316 + $0xe00] sm:$0xff]
        %v3397 = vld [vmem:[%s316 + $0xe08] sm:$0xff]
        %v3398 = vld [vmem:[%s316 + $0xe10] sm:$0xff]
        %v3399 = vld [vmem:[%s316 + $0xe18] sm:$0xff]
        %v3400 = vld [vmem:[%s316 + $0xe20] sm:$0xff]
        %v3401 = vld [vmem:[%s316 + $0xe28] sm:$0xff]
        %v3402 = vld [vmem:[%s316 + $0xe30] sm:$0xff]
        %v3403 = vld [vmem:[%s316 + $0xe38] sm:$0xff]
        %v3404 = vld [vmem:[%s316 + $0xe40] sm:$0xff]
        %v3405 = vld [vmem:[%s316 + $0xe48] sm:$0xff]
        %v3406 = vld [vmem:[%s316 + $0xe50] sm:$0xff]
        %v3407 = vld [vmem:[%s316 + $0xe58] sm:$0xff]
        %v3408 = vld [vmem:[%s316 + $0xe60] sm:$0xff]
        %v3409 = vld [vmem:[%s316 + $0xe68] sm:$0xff]
        %v3410 = vld [vmem:[%s316 + $0xe70] sm:$0xff]
        %v3411 = vld [vmem:[%s316 + $0xe78] sm:$0xff]
        %v3412 = vld [vmem:[%s316 + $0xe80] sm:$0xff]
        %v3413 = vld [vmem:[%s316 + $0xe88] sm:$0xff]
        %v3414 = vld [vmem:[%s316 + $0xe90] sm:$0xff]
        %v3415 = vld [vmem:[%s316 + $0xe98] sm:$0xff]
        %v3416 = vld [vmem:[%s316 + $0xea0] sm:$0xff]
        %v3417 = vld [vmem:[%s316 + $0xea8] sm:$0xff]
        %v3418 = vld [vmem:[%s316 + $0xeb0] sm:$0xff]
        %v3419 = vld [vmem:[%s316 + $0xeb8] sm:$0xff]
        %v3420 = vld [vmem:[%s316 + $0xec0] sm:$0xff]
        %v3421 = vld [vmem:[%s316 + $0xec8] sm:$0xff]
        %v3422 = vld [vmem:[%s316 + $0xed0] sm:$0xff]
        %v3423 = vld [vmem:[%s316 + $0xed8] sm:$0xff]
        %v3424 = vld [vmem:[%s316 + $0xee0] sm:$0xff]
        %v3425 = vld [vmem:[%s316 + $0xee8] sm:$0xff]
        %v3426 = vld [vmem:[%s316 + $0xef0] sm:$0xff]
        %v3427 = vld [vmem:[%s316 + $0xef8] sm:$0xff]
        %v3428 = vld [vmem:[%s316 + $0xf00] sm:$0xff]
        %v3429 = vld [vmem:[%s316 + $0xf08] sm:$0xff]
        %v3430 = vld [vmem:[%s316 + $0xf10] sm:$0xff]
        %v3431 = vld [vmem:[%s316 + $0xf18] sm:$0xff]
        %v3432 = vld [vmem:[%s316 + $0xf20] sm:$0xff]
        %v3433 = vld [vmem:[%s316 + $0xf28] sm:$0xff]
        %v3434 = vld [vmem:[%s316 + $0xf30] sm:$0xff]
        %v3435 = vld [vmem:[%s316 + $0xf38] sm:$0xff]
        %v3436 = vld [vmem:[%s316 + $0xf40] sm:$0xff]
        %v3437 = vld [vmem:[%s316 + $0xf48] sm:$0xff]
        %v3438 = vld [vmem:[%s316 + $0xf50] sm:$0xff]
        %v3439 = vld [vmem:[%s316 + $0xf58] sm:$0xff]
        %v3440 = vld [vmem:[%s316 + $0xf60] sm:$0xff]
        %v3441 = vld [vmem:[%s316 + $0xf68] sm:$0xff]
        %v3442 = vld [vmem:[%s316 + $0xf70] sm:$0xff]
        %v3443 = vld [vmem:[%s316 + $0xf78] sm:$0xff]
        %v3444 = vld [vmem:[%s316 + $0xf80] sm:$0xff]
        %v3445 = vld [vmem:[%s316 + $0xf88] sm:$0xff]
        %v3446 = vld [vmem:[%s316 + $0xf90] sm:$0xff]
        %v3447 = vld [vmem:[%s316 + $0xf98] sm:$0xff]
        %v3448 = vld [vmem:[%s316 + $0xfa0] sm:$0xff]
        %v3449 = vld [vmem:[%s316 + $0xfa8] sm:$0xff]
        %v3450 = vld [vmem:[%s316 + $0xfb0] sm:$0xff]
        %v3451 = vld [vmem:[%s316 + $0xfb8] sm:$0xff]
        %v3452 = vld [vmem:[%s316 + $0xfc0] sm:$0xff]
        %v3453 = vld [vmem:[%s316 + $0xfc8] sm:$0xff]
        %v3454 = vld [vmem:[%s316 + $0xfd0] sm:$0xff]
        %v3455 = vld [vmem:[%s316 + $0xfd8] sm:$0xff]
        %v3456 = vld [vmem:[%s316 + $0xfe0] sm:$0xff]
        %v3457 = vld [vmem:[%s316 + $0xfe8] sm:$0xff]
        %v3458 = vld [vmem:[%s316 + $0xff0] sm:$0xff]
        %v3459 = vld [vmem:[%s316 + $0xff8] sm:$0xff]
        %3460 = vmatprep.subr.mxu0 0.0
        %3461 = vmatpush1.msra.mxu0 %v2948
        %3462 = vmatprep.subr.mxu0 0.0
        %3463 = vmatpush1.msra.mxu0 %v2949
        %3464 = vmatprep.subr.mxu0 0.0
        %3465 = vmatpush1.msra.mxu0 %v2950
        %3466 = vmatprep.subr.mxu0 0.0
        %3467 = vmatpush1.msra.mxu0 %v2951
        %3468 = vmatprep.subr.mxu0 0.0
        %3469 = vmatpush1.msra.mxu0 %v2952
        %3470 = vmatprep.subr.mxu0 0.0
        %3471 = vmatpush1.msra.mxu0 %v2953
        %3472 = vmatprep.subr.mxu0 0.0
        %3473 = vmatpush1.msra.mxu0 %v2954
        %3474 = vmatprep.subr.mxu0 0.0
        %3475 = vmatpush1.msra.mxu0 %v2955
        %3476 = vmatprep.subr.mxu0 0.0
        %3477 = vmatpush1.msra.mxu0 %v2956
        %3478 = vmatprep.subr.mxu0 0.0
        %3479 = vmatpush1.msra.mxu0 %v2957
        %3480 = vmatprep.subr.mxu0 0.0
        %3481 = vmatpush1.msra.mxu0 %v2958
        %3482 = vmatprep.subr.mxu0 0.0
        %3483 = vmatpush1.msra.mxu0 %v2959
        %3484 = vmatprep.subr.mxu0 0.0
        %3485 = vmatpush1.msra.mxu0 %v2960
        %3486 = vmatprep.subr.mxu0 0.0
        %3487 = vmatpush1.msra.mxu0 %v2961
        %3488 = vmatprep.subr.mxu0 0.0
        %3489 = vmatpush1.msra.mxu0 %v2962
        %3490 = vmatprep.subr.mxu0 0.0
        %3491 = vmatpush1.msra.mxu0 %v2963
        %3492 = vmatprep.subr.mxu0 0.0
        %3493 = vmatpush1.msra.mxu0 %v2964
        %3494 = vmatprep.subr.mxu0 0.0
        %3495 = vmatpush1.msra.mxu0 %v2965
        %3496 = vmatprep.subr.mxu0 0.0
        %3497 = vmatpush1.msra.mxu0 %v2966
        %3498 = vmatprep.subr.mxu0 0.0
        %3499 = vmatpush1.msra.mxu0 %v2967
        %3500 = vmatprep.subr.mxu0 0.0
        %3501 = vmatpush1.msra.mxu0 %v2968
        %3502 = vmatprep.subr.mxu0 0.0
        %3503 = vmatpush1.msra.mxu0 %v2969
        %3504 = vmatprep.subr.mxu0 0.0
        %3505 = vmatpush1.msra.mxu0 %v2970
        %3506 = vmatprep.subr.mxu0 0.0
        %3507 = vmatpush1.msra.mxu0 %v2971
        %3508 = vmatprep.subr.mxu0 0.0
        %3509 = vmatpush1.msra.mxu0 %v2972
        %3510 = vmatprep.subr.mxu0 0.0
        %3511 = vmatpush1.msra.mxu0 %v2973
        %3512 = vmatprep.subr.mxu0 0.0
        %3513 = vmatpush1.msra.mxu0 %v2974
        %3514 = vmatprep.subr.mxu0 0.0
        %3515 = vmatpush1.msra.mxu0 %v2975
        %3516 = vmatprep.subr.mxu0 0.0
        %3517 = vmatpush1.msra.mxu0 %v2976
        %3518 = vmatprep.subr.mxu0 0.0
        %3519 = vmatpush1.msra.mxu0 %v2977
        %3520 = vmatprep.subr.mxu0 0.0
        %3521 = vmatpush1.msra.mxu0 %v2978
        %3522 = vmatprep.subr.mxu0 0.0
        %3523 = vmatpush1.msra.mxu0 %v2979
        %3524 = vmatprep.mubr.f32.mxu0 %v2916
        %3525 = vmatmul.mubr.f32.gmra.mrb[0].mxu0 %v2915
        %v3526 = vpop.f32.mrb[0].mxu0
        %v3527 = vadd.f32 0.0, %v3526
        %v3528 = vpop.f32.mrb[0].mxu0
        %3529 = vdwg.mxu0
        %3530 = vmatprep.subr.mxu0 0.0
        %3531 = vmatpush1.msra.mxu0 %v2980
        %3532 = vmatprep.subr.mxu0 0.0
        %3533 = vmatpush1.msra.mxu0 %v2981
        %3534 = vmatprep.subr.mxu0 0.0
        %3535 = vmatpush1.msra.mxu0 %v2982
        %3536 = vmatprep.subr.mxu0 0.0
        %3537 = vmatpush1.msra.mxu0 %v2983
        %3538 = vmatprep.subr.mxu0 0.0
        %3539 = vmatpush1.msra.mxu0 %v2984
        %3540 = vmatprep.subr.mxu0 0.0
        %3541 = vmatpush1.msra.mxu0 %v2985
        %3542 = vmatprep.subr.mxu0 0.0
        %3543 = vmatpush1.msra.mxu0 %v2986
        %3544 = vmatprep.subr.mxu0 0.0
        %3545 = vmatpush1.msra.mxu0 %v2987
        %3546 = vmatprep.subr.mxu0 0.0
        %3547 = vmatpush1.msra.mxu0 %v2988
        %3548 = vmatprep.subr.mxu0 0.0
        %3549 = vmatpush1.msra.mxu0 %v2989
        %3550 = vmatprep.subr.mxu0 0.0
        %3551 = vmatpush1.msra.mxu0 %v2990
        %3552 = vmatprep.subr.mxu0 0.0
        %3553 = vmatpush1.msra.mxu0 %v2991
        %3554 = vmatprep.subr.mxu0 0.0
        %3555 = vmatpush1.msra.mxu0 %v2992
        %3556 = vmatprep.subr.mxu0 0.0
        %3557 = vmatpush1.msra.mxu0 %v2993
        %3558 = vmatprep.subr.mxu0 0.0
        %3559 = vmatpush1.msra.mxu0 %v2994
        %3560 = vmatprep.subr.mxu0 0.0
        %3561 = vmatpush1.msra.mxu0 %v2995
        %3562 = vmatprep.subr.mxu0 0.0
        %3563 = vmatpush1.msra.mxu0 %v2996
        %3564 = vmatprep.subr.mxu0 0.0
        %3565 = vmatpush1.msra.mxu0 %v2997
        %3566 = vmatprep.subr.mxu0 0.0
        %3567 = vmatpush1.msra.mxu0 %v2998
        %3568 = vmatprep.subr.mxu0 0.0
        %3569 = vmatpush1.msra.mxu0 %v2999
        %3570 = vmatprep.subr.mxu0 0.0
        %3571 = vmatpush1.msra.mxu0 %v3000
        %3572 = vmatprep.subr.mxu0 0.0
        %3573 = vmatpush1.msra.mxu0 %v3001
        %3574 = vmatprep.subr.mxu0 0.0
        %3575 = vmatpush1.msra.mxu0 %v3002
        %3576 = vmatprep.subr.mxu0 0.0
        %3577 = vmatpush1.msra.mxu0 %v3003
        %3578 = vmatprep.subr.mxu0 0.0
        %3579 = vmatpush1.msra.mxu0 %v3004
        %3580 = vmatprep.subr.mxu0 0.0
        %3581 = vmatpush1.msra.mxu0 %v3005
        %3582 = vmatprep.subr.mxu0 0.0
        %3583 = vmatpush1.msra.mxu0 %v3006
        %3584 = vmatprep.subr.mxu0 0.0
        %3585 = vmatpush1.msra.mxu0 %v3007
        %3586 = vmatprep.subr.mxu0 0.0
        %3587 = vmatpush1.msra.mxu0 %v3008
        %3588 = vmatprep.subr.mxu0 0.0
        %3589 = vmatpush1.msra.mxu0 %v3009
        %3590 = vmatprep.subr.mxu0 0.0
        %3591 = vmatpush1.msra.mxu0 %v3010
        %3592 = vmatprep.subr.mxu0 0.0
        %3593 = vmatpush1.msra.mxu0 %v3011
        %3594 = vmatprep.mubr.f32.mxu0 %v2918
        %3595 = vmatmul.mubr.f32.gmra.mrb[0].mxu0 %v2917
        %v3596 = vpop.f32.mrb[0].mxu0
        %v3597 = vadd.f32 %v3527, %v3596
        %v3598 = vpop.f32.mrb[0].mxu0
        %3599 = vdwg.mxu0
        %3600 = vmatprep.subr.mxu0 0.0
        %3601 = vmatpush1.msra.mxu0 %v3012
        %3602 = vmatprep.subr.mxu0 0.0
        %3603 = vmatpush1.msra.mxu0 %v3013
        %3604 = vmatprep.subr.mxu0 0.0
        %3605 = vmatpush1.msra.mxu0 %v3014
        %3606 = vmatprep.subr.mxu0 0.0
        %3607 = vmatpush1.msra.mxu0 %v3015
        %3608 = vmatprep.subr.mxu0 0.0
        %3609 = vmatpush1.msra.mxu0 %v3016
        %3610 = vmatprep.subr.mxu0 0.0
        %3611 = vmatpush1.msra.mxu0 %v3017
        %3612 = vmatprep.subr.mxu0 0.0
        %3613 = vmatpush1.msra.mxu0 %v3018
        %3614 = vmatprep.subr.mxu0 0.0
        %3615 = vmatpush1.msra.mxu0 %v3019
        %3616 = vmatprep.subr.mxu0 0.0
        %3617 = vmatpush1.msra.mxu0 %v3020
        %3618 = vmatprep.subr.mxu0 0.0
        %3619 = vmatpush1.msra.mxu0 %v3021
        %3620 = vmatprep.subr.mxu0 0.0
        %3621 = vmatpush1.msra.mxu0 %v3022
        %3622 = vmatprep.subr.mxu0 0.0
        %3623 = vmatpush1.msra.mxu0 %v3023
        %3624 = vmatprep.subr.mxu0 0.0
        %3625 = vmatpush1.msra.mxu0 %v3024
        %3626 = vmatprep.subr.mxu0 0.0
        %3627 = vmatpush1.msra.mxu0 %v3025
        %3628 = vmatprep.subr.mxu0 0.0
        %3629 = vmatpush1.msra.mxu0 %v3026
        %3630 = vmatprep.subr.mxu0 0.0
        %3631 = vmatpush1.msra.mxu0 %v3027
        %3632 = vmatprep.subr.mxu0 0.0
        %3633 = vmatpush1.msra.mxu0 %v3028
        %3634 = vmatprep.subr.mxu0 0.0
        %3635 = vmatpush1.msra.mxu0 %v3029
        %3636 = vmatprep.subr.mxu0 0.0
        %3637 = vmatpush1.msra.mxu0 %v3030
        %3638 = vmatprep.subr.mxu0 0.0
        %3639 = vmatpush1.msra.mxu0 %v3031
        %3640 = vmatprep.subr.mxu0 0.0
        %3641 = vmatpush1.msra.mxu0 %v3032
        %3642 = vmatprep.subr.mxu0 0.0
        %3643 = vmatpush1.msra.mxu0 %v3033
        %3644 = vmatprep.subr.mxu0 0.0
        %3645 = vmatpush1.msra.mxu0 %v3034
        %3646 = vmatprep.subr.mxu0 0.0
        %3647 = vmatpush1.msra.mxu0 %v3035
        %3648 = vmatprep.subr.mxu0 0.0
        %3649 = vmatpush1.msra.mxu0 %v3036
        %3650 = vmatprep.subr.mxu0 0.0
        %3651 = vmatpush1.msra.mxu0 %v3037
        %3652 = vmatprep.subr.mxu0 0.0
        %3653 = vmatpush1.msra.mxu0 %v3038
        %3654 = vmatprep.subr.mxu0 0.0
        %3655 = vmatpush1.msra.mxu0 %v3039
        %3656 = vmatprep.subr.mxu0 0.0
        %3657 = vmatpush1.msra.mxu0 %v3040
        %3658 = vmatprep.subr.mxu0 0.0
        %3659 = vmatpush1.msra.mxu0 %v3041
        %3660 = vmatprep.subr.mxu0 0.0
        %3661 = vmatpush1.msra.mxu0 %v3042
        %3662 = vmatprep.subr.mxu0 0.0
        %3663 = vmatpush1.msra.mxu0 %v3043
        %3664 = vmatprep.mubr.f32.mxu0 %v2920
        %3665 = vmatmul.mubr.f32.gmra.mrb[0].mxu0 %v2919
        %v3666 = vpop.f32.mrb[0].mxu0
        %v3667 = vadd.f32 %v3597, %v3666
        %v3668 = vpop.f32.mrb[0].mxu0
        %3669 = vdwg.mxu0
        %3670 = vmatprep.subr.mxu0 0.0
        %3671 = vmatpush1.msra.mxu0 %v3044
        %3672 = vmatprep.subr.mxu0 0.0
        %3673 = vmatpush1.msra.mxu0 %v3045
        %3674 = vmatprep.subr.mxu0 0.0
        %3675 = vmatpush1.msra.mxu0 %v3046
        %3676 = vmatprep.subr.mxu0 0.0
        %3677 = vmatpush1.msra.mxu0 %v3047
        %3678 = vmatprep.subr.mxu0 0.0
        %3679 = vmatpush1.msra.mxu0 %v3048
        %3680 = vmatprep.subr.mxu0 0.0
        %3681 = vmatpush1.msra.mxu0 %v3049
        %3682 = vmatprep.subr.mxu0 0.0
        %3683 = vmatpush1.msra.mxu0 %v3050
        %3684 = vmatprep.subr.mxu0 0.0
        %3685 = vmatpush1.msra.mxu0 %v3051
        %3686 = vmatprep.subr.mxu0 0.0
        %3687 = vmatpush1.msra.mxu0 %v3052
        %3688 = vmatprep.subr.mxu0 0.0
        %3689 = vmatpush1.msra.mxu0 %v3053
        %3690 = vmatprep.subr.mxu0 0.0
        %3691 = vmatpush1.msra.mxu0 %v3054
        %3692 = vmatprep.subr.mxu0 0.0
        %3693 = vmatpush1.msra.mxu0 %v3055
        %3694 = vmatprep.subr.mxu0 0.0
        %3695 = vmatpush1.msra.mxu0 %v3056
        %3696 = vmatprep.subr.mxu0 0.0
        %3697 = vmatpush1.msra.mxu0 %v3057
        %3698 = vmatprep.subr.mxu0 0.0
        %3699 = vmatpush1.msra.mxu0 %v3058
        %3700 = vmatprep.subr.mxu0 0.0
        %3701 = vmatpush1.msra.mxu0 %v3059
        %3702 = vmatprep.subr.mxu0 0.0
        %3703 = vmatpush1.msra.mxu0 %v3060
        %3704 = vmatprep.subr.mxu0 0.0
        %3705 = vmatpush1.msra.mxu0 %v3061
        %3706 = vmatprep.subr.mxu0 0.0
        %3707 = vmatpush1.msra.mxu0 %v3062
        %3708 = vmatprep.subr.mxu0 0.0
        %3709 = vmatpush1.msra.mxu0 %v3063
        %3710 = vmatprep.subr.mxu0 0.0
        %3711 = vmatpush1.msra.mxu0 %v3064
        %3712 = vmatprep.subr.mxu0 0.0
        %3713 = vmatpush1.msra.mxu0 %v3065
        %3714 = vmatprep.subr.mxu0 0.0
        %3715 = vmatpush1.msra.mxu0 %v3066
        %3716 = vmatprep.subr.mxu0 0.0
        %3717 = vmatpush1.msra.mxu0 %v3067
        %3718 = vmatprep.subr.mxu0 0.0
        %3719 = vmatpush1.msra.mxu0 %v3068
        %3720 = vmatprep.subr.mxu0 0.0
        %3721 = vmatpush1.msra.mxu0 %v3069
        %3722 = vmatprep.subr.mxu0 0.0
        %3723 = vmatpush1.msra.mxu0 %v3070
        %3724 = vmatprep.subr.mxu0 0.0
        %3725 = vmatpush1.msra.mxu0 %v3071
        %3726 = vmatprep.subr.mxu0 0.0
        %3727 = vmatpush1.msra.mxu0 %v3072
        %3728 = vmatprep.subr.mxu0 0.0
        %3729 = vmatpush1.msra.mxu0 %v3073
        %3730 = vmatprep.subr.mxu0 0.0
        %3731 = vmatpush1.msra.mxu0 %v3074
        %3732 = vmatprep.subr.mxu0 0.0
        %3733 = vmatpush1.msra.mxu0 %v3075
        %3734 = vmatprep.mubr.f32.mxu0 %v2922
        %3735 = vmatmul.mubr.f32.gmra.mrb[0].mxu0 %v2921
        %v3736 = vpop.f32.mrb[0].mxu0
        %v3737 = vadd.f32 %v3667, %v3736
        %v3738 = vpop.f32.mrb[0].mxu0
        %3739 = vdwg.mxu0
        %3740 = vmatprep.subr.mxu0 0.0
        %3741 = vmatpush1.msra.mxu0 %v3076
        %3742 = vmatprep.subr.mxu0 0.0
        %3743 = vmatpush1.msra.mxu0 %v3077
        %3744 = vmatprep.subr.mxu0 0.0
        %3745 = vmatpush1.msra.mxu0 %v3078
        %3746 = vmatprep.subr.mxu0 0.0
        %3747 = vmatpush1.msra.mxu0 %v3079
        %3748 = vmatprep.subr.mxu0 0.0
        %3749 = vmatpush1.msra.mxu0 %v3080
        %3750 = vmatprep.subr.mxu0 0.0
        %3751 = vmatpush1.msra.mxu0 %v3081
        %3752 = vmatprep.subr.mxu0 0.0
        %3753 = vmatpush1.msra.mxu0 %v3082
        %3754 = vmatprep.subr.mxu0 0.0
        %3755 = vmatpush1.msra.mxu0 %v3083
        %3756 = vmatprep.subr.mxu0 0.0
        %3757 = vmatpush1.msra.mxu0 %v3084
        %3758 = vmatprep.subr.mxu0 0.0
        %3759 = vmatpush1.msra.mxu0 %v3085
        %3760 = vmatprep.subr.mxu0 0.0
        %3761 = vmatpush1.msra.mxu0 %v3086
        %3762 = vmatprep.subr.mxu0 0.0
        %3763 = vmatpush1.msra.mxu0 %v3087
        %3764 = vmatprep.subr.mxu0 0.0
        %3765 = vmatpush1.msra.mxu0 %v3088
        %3766 = vmatprep.subr.mxu0 0.0
        %3767 = vmatpush1.msra.mxu0 %v3089
        %3768 = vmatprep.subr.mxu0 0.0
        %3769 = vmatpush1.msra.mxu0 %v3090
        %3770 = vmatprep.subr.mxu0 0.0
        %3771 = vmatpush1.msra.mxu0 %v3091
        %3772 = vmatprep.subr.mxu0 0.0
        %3773 = vmatpush1.msra.mxu0 %v3092
        %3774 = vmatprep.subr.mxu0 0.0
        %3775 = vmatpush1.msra.mxu0 %v3093
        %3776 = vmatprep.subr.mxu0 0.0
        %3777 = vmatpush1.msra.mxu0 %v3094
        %3778 = vmatprep.subr.mxu0 0.0
        %3779 = vmatpush1.msra.mxu0 %v3095
        %3780 = vmatprep.subr.mxu0 0.0
        %3781 = vmatpush1.msra.mxu0 %v3096
        %3782 = vmatprep.subr.mxu0 0.0
        %3783 = vmatpush1.msra.mxu0 %v3097
        %3784 = vmatprep.subr.mxu0 0.0
        %3785 = vmatpush1.msra.mxu0 %v3098
        %3786 = vmatprep.subr.mxu0 0.0
        %3787 = vmatpush1.msra.mxu0 %v3099
        %3788 = vmatprep.subr.mxu0 0.0
        %3789 = vmatpush1.msra.mxu0 %v3100
        %3790 = vmatprep.subr.mxu0 0.0
        %3791 = vmatpush1.msra.mxu0 %v3101
        %3792 = vmatprep.subr.mxu0 0.0
        %3793 = vmatpush1.msra.mxu0 %v3102
        %3794 = vmatprep.subr.mxu0 0.0
        %3795 = vmatpush1.msra.mxu0 %v3103
        %3796 = vmatprep.subr.mxu0 0.0
        %3797 = vmatpush1.msra.mxu0 %v3104
        %3798 = vmatprep.subr.mxu0 0.0
        %3799 = vmatpush1.msra.mxu0 %v3105
        %3800 = vmatprep.subr.mxu0 0.0
        %3801 = vmatpush1.msra.mxu0 %v3106
        %3802 = vmatprep.subr.mxu0 0.0
        %3803 = vmatpush1.msra.mxu0 %v3107
        %3804 = vmatprep.mubr.f32.mxu0 %v2924
        %3805 = vmatmul.mubr.f32.gmra.mrb[0].mxu0 %v2923
        %v3806 = vpop.f32.mrb[0].mxu0
        %v3807 = vadd.f32 %v3737, %v3806
        %v3808 = vpop.f32.mrb[0].mxu0
        %3809 = vdwg.mxu0
        %3810 = vmatprep.subr.mxu0 0.0
        %3811 = vmatpush1.msra.mxu0 %v3108
        %3812 = vmatprep.subr.mxu0 0.0
        %3813 = vmatpush1.msra.mxu0 %v3109
        %3814 = vmatprep.subr.mxu0 0.0
        %3815 = vmatpush1.msra.mxu0 %v3110
        %3816 = vmatprep.subr.mxu0 0.0
        %3817 = vmatpush1.msra.mxu0 %v3111
        %3818 = vmatprep.subr.mxu0 0.0
        %3819 = vmatpush1.msra.mxu0 %v3112
        %3820 = vmatprep.subr.mxu0 0.0
        %3821 = vmatpush1.msra.mxu0 %v3113
        %3822 = vmatprep.subr.mxu0 0.0
        %3823 = vmatpush1.msra.mxu0 %v3114
        %3824 = vmatprep.subr.mxu0 0.0
        %3825 = vmatpush1.msra.mxu0 %v3115
        %3826 = vmatprep.subr.mxu0 0.0
        %3827 = vmatpush1.msra.mxu0 %v3116
        %3828 = vmatprep.subr.mxu0 0.0
        %3829 = vmatpush1.msra.mxu0 %v3117
        %3830 = vmatprep.subr.mxu0 0.0
        %3831 = vmatpush1.msra.mxu0 %v3118
        %3832 = vmatprep.subr.mxu0 0.0
        %3833 = vmatpush1.msra.mxu0 %v3119
        %3834 = vmatprep.subr.mxu0 0.0
        %3835 = vmatpush1.msra.mxu0 %v3120
        %3836 = vmatprep.subr.mxu0 0.0
        %3837 = vmatpush1.msra.mxu0 %v3121
        %3838 = vmatprep.subr.mxu0 0.0
        %3839 = vmatpush1.msra.mxu0 %v3122
        %3840 = vmatprep.subr.mxu0 0.0
        %3841 = vmatpush1.msra.mxu0 %v3123
        %3842 = vmatprep.subr.mxu0 0.0
        %3843 = vmatpush1.msra.mxu0 %v3124
        %3844 = vmatprep.subr.mxu0 0.0
        %3845 = vmatpush1.msra.mxu0 %v3125
        %3846 = vmatprep.subr.mxu0 0.0
        %3847 = vmatpush1.msra.mxu0 %v3126
        %3848 = vmatprep.subr.mxu0 0.0
        %3849 = vmatpush1.msra.mxu0 %v3127
        %3850 = vmatprep.subr.mxu0 0.0
        %3851 = vmatpush1.msra.mxu0 %v3128
        %3852 = vmatprep.subr.mxu0 0.0
        %3853 = vmatpush1.msra.mxu0 %v3129
        %3854 = vmatprep.subr.mxu0 0.0
        %3855 = vmatpush1.msra.mxu0 %v3130
        %3856 = vmatprep.subr.mxu0 0.0
        %3857 = vmatpush1.msra.mxu0 %v3131
        %3858 = vmatprep.subr.mxu0 0.0
        %3859 = vmatpush1.msra.mxu0 %v3132
        %3860 = vmatprep.subr.mxu0 0.0
        %3861 = vmatpush1.msra.mxu0 %v3133
        %3862 = vmatprep.subr.mxu0 0.0
        %3863 = vmatpush1.msra.mxu0 %v3134
        %3864 = vmatprep.subr.mxu0 0.0
        %3865 = vmatpush1.msra.mxu0 %v3135
        %3866 = vmatprep.subr.mxu0 0.0
        %3867 = vmatpush1.msra.mxu0 %v3136
        %3868 = vmatprep.subr.mxu0 0.0
        %3869 = vmatpush1.msra.mxu0 %v3137
        %3870 = vmatprep.subr.mxu0 0.0
        %3871 = vmatpush1.msra.mxu0 %v3138
        %3872 = vmatprep.subr.mxu0 0.0
        %3873 = vmatpush1.msra.mxu0 %v3139
        %3874 = vmatprep.mubr.f32.mxu0 %v2926
        %3875 = vmatmul.mubr.f32.gmra.mrb[0].mxu0 %v2925
        %v3876 = vpop.f32.mrb[0].mxu0
        %v3877 = vadd.f32 %v3807, %v3876
        %v3878 = vpop.f32.mrb[0].mxu0
        %3879 = vdwg.mxu0
        %3880 = vmatprep.subr.mxu0 0.0
        %3881 = vmatpush1.msra.mxu0 %v3140
        %3882 = vmatprep.subr.mxu0 0.0
        %3883 = vmatpush1.msra.mxu0 %v3141
        %3884 = vmatprep.subr.mxu0 0.0
        %3885 = vmatpush1.msra.mxu0 %v3142
        %3886 = vmatprep.subr.mxu0 0.0
        %3887 = vmatpush1.msra.mxu0 %v3143
        %3888 = vmatprep.subr.mxu0 0.0
        %3889 = vmatpush1.msra.mxu0 %v3144
        %3890 = vmatprep.subr.mxu0 0.0
        %3891 = vmatpush1.msra.mxu0 %v3145
        %3892 = vmatprep.subr.mxu0 0.0
        %3893 = vmatpush1.msra.mxu0 %v3146
        %3894 = vmatprep.subr.mxu0 0.0
        %3895 = vmatpush1.msra.mxu0 %v3147
        %3896 = vmatprep.subr.mxu0 0.0
        %3897 = vmatpush1.msra.mxu0 %v3148
        %3898 = vmatprep.subr.mxu0 0.0
        %3899 = vmatpush1.msra.mxu0 %v3149
        %3900 = vmatprep.subr.mxu0 0.0
        %3901 = vmatpush1.msra.mxu0 %v3150
        %3902 = vmatprep.subr.mxu0 0.0
        %3903 = vmatpush1.msra.mxu0 %v3151
        %3904 = vmatprep.subr.mxu0 0.0
        %3905 = vmatpush1.msra.mxu0 %v3152
        %3906 = vmatprep.subr.mxu0 0.0
        %3907 = vmatpush1.msra.mxu0 %v3153
        %3908 = vmatprep.subr.mxu0 0.0
        %3909 = vmatpush1.msra.mxu0 %v3154
        %3910 = vmatprep.subr.mxu0 0.0
        %3911 = vmatpush1.msra.mxu0 %v3155
        %3912 = vmatprep.subr.mxu0 0.0
        %3913 = vmatpush1.msra.mxu0 %v3156
        %3914 = vmatprep.subr.mxu0 0.0
        %3915 = vmatpush1.msra.mxu0 %v3157
        %3916 = vmatprep.subr.mxu0 0.0
        %3917 = vmatpush1.msra.mxu0 %v3158
        %3918 = vmatprep.subr.mxu0 0.0
        %3919 = vmatpush1.msra.mxu0 %v3159
        %3920 = vmatprep.subr.mxu0 0.0
        %3921 = vmatpush1.msra.mxu0 %v3160
        %3922 = vmatprep.subr.mxu0 0.0
        %3923 = vmatpush1.msra.mxu0 %v3161
        %3924 = vmatprep.subr.mxu0 0.0
        %3925 = vmatpush1.msra.mxu0 %v3162
        %3926 = vmatprep.subr.mxu0 0.0
        %3927 = vmatpush1.msra.mxu0 %v3163
        %3928 = vmatprep.subr.mxu0 0.0
        %3929 = vmatpush1.msra.mxu0 %v3164
        %3930 = vmatprep.subr.mxu0 0.0
        %3931 = vmatpush1.msra.mxu0 %v3165
        %3932 = vmatprep.subr.mxu0 0.0
        %3933 = vmatpush1.msra.mxu0 %v3166
        %3934 = vmatprep.subr.mxu0 0.0
        %3935 = vmatpush1.msra.mxu0 %v3167
        %3936 = vmatprep.subr.mxu0 0.0
        %3937 = vmatpush1.msra.mxu0 %v3168
        %3938 = vmatprep.subr.mxu0 0.0
        %3939 = vmatpush1.msra.mxu0 %v3169
        %3940 = vmatprep.subr.mxu0 0.0
        %3941 = vmatpush1.msra.mxu0 %v3170
        %3942 = vmatprep.subr.mxu0 0.0
        %3943 = vmatpush1.msra.mxu0 %v3171
        %3944 = vmatprep.mubr.f32.mxu0 %v2928
        %3945 = vmatmul.mubr.f32.gmra.mrb[0].mxu0 %v2927
        %v3946 = vpop.f32.mrb[0].mxu0
        %v3947 = vadd.f32 %v3877, %v3946
        %v3948 = vpop.f32.mrb[0].mxu0
        %3949 = vdwg.mxu0
        %3950 = vmatprep.subr.mxu0 0.0
        %3951 = vmatpush1.msra.mxu0 %v3172
        %3952 = vmatprep.subr.mxu0 0.0
        %3953 = vmatpush1.msra.mxu0 %v3173
        %3954 = vmatprep.subr.mxu0 0.0
        %3955 = vmatpush1.msra.mxu0 %v3174
        %3956 = vmatprep.subr.mxu0 0.0
        %3957 = vmatpush1.msra.mxu0 %v3175
        %3958 = vmatprep.subr.mxu0 0.0
        %3959 = vmatpush1.msra.mxu0 %v3176
        %3960 = vmatprep.subr.mxu0 0.0
        %3961 = vmatpush1.msra.mxu0 %v3177
        %3962 = vmatprep.subr.mxu0 0.0
        %3963 = vmatpush1.msra.mxu0 %v3178
        %3964 = vmatprep.subr.mxu0 0.0
        %3965 = vmatpush1.msra.mxu0 %v3179
        %3966 = vmatprep.subr.mxu0 0.0
        %3967 = vmatpush1.msra.mxu0 %v3180
        %3968 = vmatprep.subr.mxu0 0.0
        %3969 = vmatpush1.msra.mxu0 %v3181
        %3970 = vmatprep.subr.mxu0 0.0
        %3971 = vmatpush1.msra.mxu0 %v3182
        %3972 = vmatprep.subr.mxu0 0.0
        %3973 = vmatpush1.msra.mxu0 %v3183
        %3974 = vmatprep.subr.mxu0 0.0
        %3975 = vmatpush1.msra.mxu0 %v3184
        %3976 = vmatprep.subr.mxu0 0.0
        %3977 = vmatpush1.msra.mxu0 %v3185
        %3978 = vmatprep.subr.mxu0 0.0
        %3979 = vmatpush1.msra.mxu0 %v3186
        %3980 = vmatprep.subr.mxu0 0.0
        %3981 = vmatpush1.msra.mxu0 %v3187
        %3982 = vmatprep.subr.mxu0 0.0
        %3983 = vmatpush1.msra.mxu0 %v3188
        %3984 = vmatprep.subr.mxu0 0.0
        %3985 = vmatpush1.msra.mxu0 %v3189
        %3986 = vmatprep.subr.mxu0 0.0
        %3987 = vmatpush1.msra.mxu0 %v3190
        %3988 = vmatprep.subr.mxu0 0.0
        %3989 = vmatpush1.msra.mxu0 %v3191
        %3990 = vmatprep.subr.mxu0 0.0
        %3991 = vmatpush1.msra.mxu0 %v3192
        %3992 = vmatprep.subr.mxu0 0.0
        %3993 = vmatpush1.msra.mxu0 %v3193
        %3994 = vmatprep.subr.mxu0 0.0
        %3995 = vmatpush1.msra.mxu0 %v3194
        %3996 = vmatprep.subr.mxu0 0.0
        %3997 = vmatpush1.msra.mxu0 %v3195
        %3998 = vmatprep.subr.mxu0 0.0
        %3999 = vmatpush1.msra.mxu0 %v3196
        %4000 = vmatprep.subr.mxu0 0.0
        %4001 = vmatpush1.msra.mxu0 %v3197
        %4002 = vmatprep.subr.mxu0 0.0
        %4003 = vmatpush1.msra.mxu0 %v3198
        %4004 = vmatprep.subr.mxu0 0.0
        %4005 = vmatpush1.msra.mxu0 %v3199
        %4006 = vmatprep.subr.mxu0 0.0
        %4007 = vmatpush1.msra.mxu0 %v3200
        %4008 = vmatprep.subr.mxu0 0.0
        %4009 = vmatpush1.msra.mxu0 %v3201
        %4010 = vmatprep.subr.mxu0 0.0
        %4011 = vmatpush1.msra.mxu0 %v3202
        %4012 = vmatprep.subr.mxu0 0.0
        %4013 = vmatpush1.msra.mxu0 %v3203
        %4014 = vmatprep.mubr.f32.mxu0 %v2930
        %4015 = vmatmul.mubr.f32.gmra.mrb[0].mxu0 %v2929
        %v4016 = vpop.f32.mrb[0].mxu0
        %v4017 = vadd.f32 %v3947, %v4016
        %v4018 = vpop.f32.mrb[0].mxu0
        %4019 = vdwg.mxu0
        %4020 = vmatprep.subr.mxu0 0.0
        %4021 = vmatpush1.msra.mxu0 %v3204
        %4022 = vmatprep.subr.mxu0 0.0
        %4023 = vmatpush1.msra.mxu0 %v3205
        %4024 = vmatprep.subr.mxu0 0.0
        %4025 = vmatpush1.msra.mxu0 %v3206
        %4026 = vmatprep.subr.mxu0 0.0
        %4027 = vmatpush1.msra.mxu0 %v3207
        %4028 = vmatprep.subr.mxu0 0.0
        %4029 = vmatpush1.msra.mxu0 %v3208
        %4030 = vmatprep.subr.mxu0 0.0
        %4031 = vmatpush1.msra.mxu0 %v3209
        %4032 = vmatprep.subr.mxu0 0.0
        %4033 = vmatpush1.msra.mxu0 %v3210
        %4034 = vmatprep.subr.mxu0 0.0
        %4035 = vmatpush1.msra.mxu0 %v3211
        %4036 = vmatprep.subr.mxu0 0.0
        %4037 = vmatpush1.msra.mxu0 %v3212
        %4038 = vmatprep.subr.mxu0 0.0
        %4039 = vmatpush1.msra.mxu0 %v3213
        %4040 = vmatprep.subr.mxu0 0.0
        %4041 = vmatpush1.msra.mxu0 %v3214
        %4042 = vmatprep.subr.mxu0 0.0
        %4043 = vmatpush1.msra.mxu0 %v3215
        %4044 = vmatprep.subr.mxu0 0.0
        %4045 = vmatpush1.msra.mxu0 %v3216
        %4046 = vmatprep.subr.mxu0 0.0
        %4047 = vmatpush1.msra.mxu0 %v3217
        %4048 = vmatprep.subr.mxu0 0.0
        %4049 = vmatpush1.msra.mxu0 %v3218
        %4050 = vmatprep.subr.mxu0 0.0
        %4051 = vmatpush1.msra.mxu0 %v3219
        %4052 = vmatprep.subr.mxu0 0.0
        %4053 = vmatpush1.msra.mxu0 %v3220
        %4054 = vmatprep.subr.mxu0 0.0
        %4055 = vmatpush1.msra.mxu0 %v3221
        %4056 = vmatprep.subr.mxu0 0.0
        %4057 = vmatpush1.msra.mxu0 %v3222
        %4058 = vmatprep.subr.mxu0 0.0
        %4059 = vmatpush1.msra.mxu0 %v3223
        %4060 = vmatprep.subr.mxu0 0.0
        %4061 = vmatpush1.msra.mxu0 %v3224
        %4062 = vmatprep.subr.mxu0 0.0
        %4063 = vmatpush1.msra.mxu0 %v3225
        %4064 = vmatprep.subr.mxu0 0.0
        %4065 = vmatpush1.msra.mxu0 %v3226
        %4066 = vmatprep.subr.mxu0 0.0
        %4067 = vmatpush1.msra.mxu0 %v3227
        %4068 = vmatprep.subr.mxu0 0.0
        %4069 = vmatpush1.msra.mxu0 %v3228
        %4070 = vmatprep.subr.mxu0 0.0
        %4071 = vmatpush1.msra.mxu0 %v3229
        %4072 = vmatprep.subr.mxu0 0.0
        %4073 = vmatpush1.msra.mxu0 %v3230
        %4074 = vmatprep.subr.mxu0 0.0
        %4075 = vmatpush1.msra.mxu0 %v3231
        %4076 = vmatprep.subr.mxu0 0.0
        %4077 = vmatpush1.msra.mxu0 %v3232
        %4078 = vmatprep.subr.mxu0 0.0
        %4079 = vmatpush1.msra.mxu0 %v3233
        %4080 = vmatprep.subr.mxu0 0.0
        %4081 = vmatpush1.msra.mxu0 %v3234
        %4082 = vmatprep.subr.mxu0 0.0
        %4083 = vmatpush1.msra.mxu0 %v3235
        %4084 = vmatprep.mubr.f32.mxu0 %v2932
        %4085 = vmatmul.mubr.f32.gmra.mrb[0].mxu0 %v2931
        %v4086 = vpop.f32.mrb[0].mxu0
        %v4087 = vadd.f32 %v4017, %v4086
        %v4088 = vpop.f32.mrb[0].mxu0
        %4089 = vdwg.mxu0
        %4090 = vmatprep.subr.mxu0 0.0
        %4091 = vmatpush1.msra.mxu0 %v3236
        %4092 = vmatprep.subr.mxu0 0.0
        %4093 = vmatpush1.msra.mxu0 %v3237
        %4094 = vmatprep.subr.mxu0 0.0
        %4095 = vmatpush1.msra.mxu0 %v3238
        %4096 = vmatprep.subr.mxu0 0.0
        %4097 = vmatpush1.msra.mxu0 %v3239
        %4098 = vmatprep.subr.mxu0 0.0
        %4099 = vmatpush1.msra.mxu0 %v3240
        %4100 = vmatprep.subr.mxu0 0.0
        %4101 = vmatpush1.msra.mxu0 %v3241
        %4102 = vmatprep.subr.mxu0 0.0
        %4103 = vmatpush1.msra.mxu0 %v3242
        %4104 = vmatprep.subr.mxu0 0.0
        %4105 = vmatpush1.msra.mxu0 %v3243
        %4106 = vmatprep.subr.mxu0 0.0
        %4107 = vmatpush1.msra.mxu0 %v3244
        %4108 = vmatprep.subr.mxu0 0.0
        %4109 = vmatpush1.msra.mxu0 %v3245
        %4110 = vmatprep.subr.mxu0 0.0
        %4111 = vmatpush1.msra.mxu0 %v3246
        %4112 = vmatprep.subr.mxu0 0.0
        %4113 = vmatpush1.msra.mxu0 %v3247
        %4114 = vmatprep.subr.mxu0 0.0
        %4115 = vmatpush1.msra.mxu0 %v3248
        %4116 = vmatprep.subr.mxu0 0.0
        %4117 = vmatpush1.msra.mxu0 %v3249
        %4118 = vmatprep.subr.mxu0 0.0
        %4119 = vmatpush1.msra.mxu0 %v3250
        %4120 = vmatprep.subr.mxu0 0.0
        %4121 = vmatpush1.msra.mxu0 %v3251
        %4122 = vmatprep.subr.mxu0 0.0
        %4123 = vmatpush1.msra.mxu0 %v3252
        %4124 = vmatprep.subr.mxu0 0.0
        %4125 = vmatpush1.msra.mxu0 %v3253
        %4126 = vmatprep.subr.mxu0 0.0
        %4127 = vmatpush1.msra.mxu0 %v3254
        %4128 = vmatprep.subr.mxu0 0.0
        %4129 = vmatpush1.msra.mxu0 %v3255
        %4130 = vmatprep.subr.mxu0 0.0
        %4131 = vmatpush1.msra.mxu0 %v3256
        %4132 = vmatprep.subr.mxu0 0.0
        %4133 = vmatpush1.msra.mxu0 %v3257
        %4134 = vmatprep.subr.mxu0 0.0
        %4135 = vmatpush1.msra.mxu0 %v3258
        %4136 = vmatprep.subr.mxu0 0.0
        %4137 = vmatpush1.msra.mxu0 %v3259
        %4138 = vmatprep.subr.mxu0 0.0
        %4139 = vmatpush1.msra.mxu0 %v3260
        %4140 = vmatprep.subr.mxu0 0.0
        %4141 = vmatpush1.msra.mxu0 %v3261
        %4142 = vmatprep.subr.mxu0 0.0
        %4143 = vmatpush1.msra.mxu0 %v3262
        %4144 = vmatprep.subr.mxu0 0.0
        %4145 = vmatpush1.msra.mxu0 %v3263
        %4146 = vmatprep.subr.mxu0 0.0
        %4147 = vmatpush1.msra.mxu0 %v3264
        %4148 = vmatprep.subr.mxu0 0.0
        %4149 = vmatpush1.msra.mxu0 %v3265
        %4150 = vmatprep.subr.mxu0 0.0
        %4151 = vmatpush1.msra.mxu0 %v3266
        %4152 = vmatprep.subr.mxu0 0.0
        %4153 = vmatpush1.msra.mxu0 %v3267
        %4154 = vmatprep.mubr.f32.mxu0 %v2934
        %4155 = vmatmul.mubr.f32.gmra.mrb[0].mxu0 %v2933
        %v4156 = vpop.f32.mrb[0].mxu0
        %v4157 = vadd.f32 %v4087, %v4156
        %v4158 = vpop.f32.mrb[0].mxu0
        %4159 = vdwg.mxu0
        %4160 = vmatprep.subr.mxu0 0.0
        %4161 = vmatpush1.msra.mxu0 %v3268
        %4162 = vmatprep.subr.mxu0 0.0
        %4163 = vmatpush1.msra.mxu0 %v3269
        %4164 = vmatprep.subr.mxu0 0.0
        %4165 = vmatpush1.msra.mxu0 %v3270
        %4166 = vmatprep.subr.mxu0 0.0
        %4167 = vmatpush1.msra.mxu0 %v3271
        %4168 = vmatprep.subr.mxu0 0.0
        %4169 = vmatpush1.msra.mxu0 %v3272
        %4170 = vmatprep.subr.mxu0 0.0
        %4171 = vmatpush1.msra.mxu0 %v3273
        %4172 = vmatprep.subr.mxu0 0.0
        %4173 = vmatpush1.msra.mxu0 %v3274
        %4174 = vmatprep.subr.mxu0 0.0
        %4175 = vmatpush1.msra.mxu0 %v3275
        %4176 = vmatprep.subr.mxu0 0.0
        %4177 = vmatpush1.msra.mxu0 %v3276
        %4178 = vmatprep.subr.mxu0 0.0
        %4179 = vmatpush1.msra.mxu0 %v3277
        %4180 = vmatprep.subr.mxu0 0.0
        %4181 = vmatpush1.msra.mxu0 %v3278
        %4182 = vmatprep.subr.mxu0 0.0
        %4183 = vmatpush1.msra.mxu0 %v3279
        %4184 = vmatprep.subr.mxu0 0.0
        %4185 = vmatpush1.msra.mxu0 %v3280
        %4186 = vmatprep.subr.mxu0 0.0
        %4187 = vmatpush1.msra.mxu0 %v3281
        %4188 = vmatprep.subr.mxu0 0.0
        %4189 = vmatpush1.msra.mxu0 %v3282
        %4190 = vmatprep.subr.mxu0 0.0
        %4191 = vmatpush1.msra.mxu0 %v3283
        %4192 = vmatprep.subr.mxu0 0.0
        %4193 = vmatpush1.msra.mxu0 %v3284
        %4194 = vmatprep.subr.mxu0 0.0
        %4195 = vmatpush1.msra.mxu0 %v3285
        %4196 = vmatprep.subr.mxu0 0.0
        %4197 = vmatpush1.msra.mxu0 %v3286
        %4198 = vmatprep.subr.mxu0 0.0
        %4199 = vmatpush1.msra.mxu0 %v3287
        %4200 = vmatprep.subr.mxu0 0.0
        %4201 = vmatpush1.msra.mxu0 %v3288
        %4202 = vmatprep.subr.mxu0 0.0
        %4203 = vmatpush1.msra.mxu0 %v3289
        %4204 = vmatprep.subr.mxu0 0.0
        %4205 = vmatpush1.msra.mxu0 %v3290
        %4206 = vmatprep.subr.mxu0 0.0
        %4207 = vmatpush1.msra.mxu0 %v3291
        %4208 = vmatprep.subr.mxu0 0.0
        %4209 = vmatpush1.msra.mxu0 %v3292
        %4210 = vmatprep.subr.mxu0 0.0
        %4211 = vmatpush1.msra.mxu0 %v3293
        %4212 = vmatprep.subr.mxu0 0.0
        %4213 = vmatpush1.msra.mxu0 %v3294
        %4214 = vmatprep.subr.mxu0 0.0
        %4215 = vmatpush1.msra.mxu0 %v3295
        %4216 = vmatprep.subr.mxu0 0.0
        %4217 = vmatpush1.msra.mxu0 %v3296
        %4218 = vmatprep.subr.mxu0 0.0
        %4219 = vmatpush1.msra.mxu0 %v3297
        %4220 = vmatprep.subr.mxu0 0.0
        %4221 = vmatpush1.msra.mxu0 %v3298
        %4222 = vmatprep.subr.mxu0 0.0
        %4223 = vmatpush1.msra.mxu0 %v3299
        %4224 = vmatprep.mubr.f32.mxu0 %v2936
        %4225 = vmatmul.mubr.f32.gmra.mrb[0].mxu0 %v2935
        %v4226 = vpop.f32.mrb[0].mxu0
        %v4227 = vadd.f32 %v4157, %v4226
        %v4228 = vpop.f32.mrb[0].mxu0
        %4229 = vdwg.mxu0
        %4230 = vmatprep.subr.mxu0 0.0
        %4231 = vmatpush1.msra.mxu0 %v3300
        %4232 = vmatprep.subr.mxu0 0.0
        %4233 = vmatpush1.msra.mxu0 %v3301
        %4234 = vmatprep.subr.mxu0 0.0
        %4235 = vmatpush1.msra.mxu0 %v3302
        %4236 = vmatprep.subr.mxu0 0.0
        %4237 = vmatpush1.msra.mxu0 %v3303
        %4238 = vmatprep.subr.mxu0 0.0
        %4239 = vmatpush1.msra.mxu0 %v3304
        %4240 = vmatprep.subr.mxu0 0.0
        %4241 = vmatpush1.msra.mxu0 %v3305
        %4242 = vmatprep.subr.mxu0 0.0
        %4243 = vmatpush1.msra.mxu0 %v3306
        %4244 = vmatprep.subr.mxu0 0.0
        %4245 = vmatpush1.msra.mxu0 %v3307
        %4246 = vmatprep.subr.mxu0 0.0
        %4247 = vmatpush1.msra.mxu0 %v3308
        %4248 = vmatprep.subr.mxu0 0.0
        %4249 = vmatpush1.msra.mxu0 %v3309
        %4250 = vmatprep.subr.mxu0 0.0
        %4251 = vmatpush1.msra.mxu0 %v3310
        %4252 = vmatprep.subr.mxu0 0.0
        %4253 = vmatpush1.msra.mxu0 %v3311
        %4254 = vmatprep.subr.mxu0 0.0
        %4255 = vmatpush1.msra.mxu0 %v3312
        %4256 = vmatprep.subr.mxu0 0.0
        %4257 = vmatpush1.msra.mxu0 %v3313
        %4258 = vmatprep.subr.mxu0 0.0
        %4259 = vmatpush1.msra.mxu0 %v3314
        %4260 = vmatprep.subr.mxu0 0.0
        %4261 = vmatpush1.msra.mxu0 %v3315
        %4262 = vmatprep.subr.mxu0 0.0
        %4263 = vmatpush1.msra.mxu0 %v3316
        %4264 = vmatprep.subr.mxu0 0.0
        %4265 = vmatpush1.msra.mxu0 %v3317
        %4266 = vmatprep.subr.mxu0 0.0
        %4267 = vmatpush1.msra.mxu0 %v3318
        %4268 = vmatprep.subr.mxu0 0.0
        %4269 = vmatpush1.msra.mxu0 %v3319
        %4270 = vmatprep.subr.mxu0 0.0
        %4271 = vmatpush1.msra.mxu0 %v3320
        %4272 = vmatprep.subr.mxu0 0.0
        %4273 = vmatpush1.msra.mxu0 %v3321
        %4274 = vmatprep.subr.mxu0 0.0
        %4275 = vmatpush1.msra.mxu0 %v3322
        %4276 = vmatprep.subr.mxu0 0.0
        %4277 = vmatpush1.msra.mxu0 %v3323
        %4278 = vmatprep.subr.mxu0 0.0
        %4279 = vmatpush1.msra.mxu0 %v3324
        %4280 = vmatprep.subr.mxu0 0.0
        %4281 = vmatpush1.msra.mxu0 %v3325
        %4282 = vmatprep.subr.mxu0 0.0
        %4283 = vmatpush1.msra.mxu0 %v3326
        %4284 = vmatprep.subr.mxu0 0.0
        %4285 = vmatpush1.msra.mxu0 %v3327
        %4286 = vmatprep.subr.mxu0 0.0
        %4287 = vmatpush1.msra.mxu0 %v3328
        %4288 = vmatprep.subr.mxu0 0.0
        %4289 = vmatpush1.msra.mxu0 %v3329
        %4290 = vmatprep.subr.mxu0 0.0
        %4291 = vmatpush1.msra.mxu0 %v3330
        %4292 = vmatprep.subr.mxu0 0.0
        %4293 = vmatpush1.msra.mxu0 %v3331
        %4294 = vmatprep.mubr.f32.mxu0 %v2938
        %4295 = vmatmul.mubr.f32.gmra.mrb[0].mxu0 %v2937
        %v4296 = vpop.f32.mrb[0].mxu0
        %v4297 = vadd.f32 %v4227, %v4296
        %v4298 = vpop.f32.mrb[0].mxu0
        %4299 = vdwg.mxu0
        %4300 = vmatprep.subr.mxu0 0.0
        %4301 = vmatpush1.msra.mxu0 %v3332
        %4302 = vmatprep.subr.mxu0 0.0
        %4303 = vmatpush1.msra.mxu0 %v3333
        %4304 = vmatprep.subr.mxu0 0.0
        %4305 = vmatpush1.msra.mxu0 %v3334
        %4306 = vmatprep.subr.mxu0 0.0
        %4307 = vmatpush1.msra.mxu0 %v3335
        %4308 = vmatprep.subr.mxu0 0.0
        %4309 = vmatpush1.msra.mxu0 %v3336
        %4310 = vmatprep.subr.mxu0 0.0
        %4311 = vmatpush1.msra.mxu0 %v3337
        %4312 = vmatprep.subr.mxu0 0.0
        %4313 = vmatpush1.msra.mxu0 %v3338
        %4314 = vmatprep.subr.mxu0 0.0
        %4315 = vmatpush1.msra.mxu0 %v3339
        %4316 = vmatprep.subr.mxu0 0.0
        %4317 = vmatpush1.msra.mxu0 %v3340
        %4318 = vmatprep.subr.mxu0 0.0
        %4319 = vmatpush1.msra.mxu0 %v3341
        %4320 = vmatprep.subr.mxu0 0.0
        %4321 = vmatpush1.msra.mxu0 %v3342
        %4322 = vmatprep.subr.mxu0 0.0
        %4323 = vmatpush1.msra.mxu0 %v3343
        %4324 = vmatprep.subr.mxu0 0.0
        %4325 = vmatpush1.msra.mxu0 %v3344
        %4326 = vmatprep.subr.mxu0 0.0
        %4327 = vmatpush1.msra.mxu0 %v3345
        %4328 = vmatprep.subr.mxu0 0.0
        %4329 = vmatpush1.msra.mxu0 %v3346
        %4330 = vmatprep.subr.mxu0 0.0
        %4331 = vmatpush1.msra.mxu0 %v3347
        %4332 = vmatprep.subr.mxu0 0.0
        %4333 = vmatpush1.msra.mxu0 %v3348
        %4334 = vmatprep.subr.mxu0 0.0
        %4335 = vmatpush1.msra.mxu0 %v3349
        %4336 = vmatprep.subr.mxu0 0.0
        %4337 = vmatpush1.msra.mxu0 %v3350
        %4338 = vmatprep.subr.mxu0 0.0
        %4339 = vmatpush1.msra.mxu0 %v3351
        %4340 = vmatprep.subr.mxu0 0.0
        %4341 = vmatpush1.msra.mxu0 %v3352
        %4342 = vmatprep.subr.mxu0 0.0
        %4343 = vmatpush1.msra.mxu0 %v3353
        %4344 = vmatprep.subr.mxu0 0.0
        %4345 = vmatpush1.msra.mxu0 %v3354
        %4346 = vmatprep.subr.mxu0 0.0
        %4347 = vmatpush1.msra.mxu0 %v3355
        %4348 = vmatprep.subr.mxu0 0.0
        %4349 = vmatpush1.msra.mxu0 %v3356
        %4350 = vmatprep.subr.mxu0 0.0
        %4351 = vmatpush1.msra.mxu0 %v3357
        %4352 = vmatprep.subr.mxu0 0.0
        %4353 = vmatpush1.msra.mxu0 %v3358
        %4354 = vmatprep.subr.mxu0 0.0
        %4355 = vmatpush1.msra.mxu0 %v3359
        %4356 = vmatprep.subr.mxu0 0.0
        %4357 = vmatpush1.msra.mxu0 %v3360
        %4358 = vmatprep.subr.mxu0 0.0
        %4359 = vmatpush1.msra.mxu0 %v3361
        %4360 = vmatprep.subr.mxu0 0.0
        %4361 = vmatpush1.msra.mxu0 %v3362
        %4362 = vmatprep.subr.mxu0 0.0
        %4363 = vmatpush1.msra.mxu0 %v3363
        %4364 = vmatprep.mubr.f32.mxu0 %v2940
        %4365 = vmatmul.mubr.f32.gmra.mrb[0].mxu0 %v2939
        %v4366 = vpop.f32.mrb[0].mxu0
        %v4367 = vadd.f32 %v4297, %v4366
        %v4368 = vpop.f32.mrb[0].mxu0
        %4369 = vdwg.mxu0
        %4370 = vmatprep.subr.mxu0 0.0
        %4371 = vmatpush1.msra.mxu0 %v3364
        %4372 = vmatprep.subr.mxu0 0.0
        %4373 = vmatpush1.msra.mxu0 %v3365
        %4374 = vmatprep.subr.mxu0 0.0
        %4375 = vmatpush1.msra.mxu0 %v3366
        %4376 = vmatprep.subr.mxu0 0.0
        %4377 = vmatpush1.msra.mxu0 %v3367
        %4378 = vmatprep.subr.mxu0 0.0
        %4379 = vmatpush1.msra.mxu0 %v3368
        %4380 = vmatprep.subr.mxu0 0.0
        %4381 = vmatpush1.msra.mxu0 %v3369
        %4382 = vmatprep.subr.mxu0 0.0
        %4383 = vmatpush1.msra.mxu0 %v3370
        %4384 = vmatprep.subr.mxu0 0.0
        %4385 = vmatpush1.msra.mxu0 %v3371
        %4386 = vmatprep.subr.mxu0 0.0
        %4387 = vmatpush1.msra.mxu0 %v3372
        %4388 = vmatprep.subr.mxu0 0.0
        %4389 = vmatpush1.msra.mxu0 %v3373
        %4390 = vmatprep.subr.mxu0 0.0
        %4391 = vmatpush1.msra.mxu0 %v3374
        %4392 = vmatprep.subr.mxu0 0.0
        %4393 = vmatpush1.msra.mxu0 %v3375
        %4394 = vmatprep.subr.mxu0 0.0
        %4395 = vmatpush1.msra.mxu0 %v3376
        %4396 = vmatprep.subr.mxu0 0.0
        %4397 = vmatpush1.msra.mxu0 %v3377
        %4398 = vmatprep.subr.mxu0 0.0
        %4399 = vmatpush1.msra.mxu0 %v3378
        %4400 = vmatprep.subr.mxu0 0.0
        %4401 = vmatpush1.msra.mxu0 %v3379
        %4402 = vmatprep.subr.mxu0 0.0
        %4403 = vmatpush1.msra.mxu0 %v3380
        %4404 = vmatprep.subr.mxu0 0.0
        %4405 = vmatpush1.msra.mxu0 %v3381
        %4406 = vmatprep.subr.mxu0 0.0
        %4407 = vmatpush1.msra.mxu0 %v3382
        %4408 = vmatprep.subr.mxu0 0.0
        %4409 = vmatpush1.msra.mxu0 %v3383
        %4410 = vmatprep.subr.mxu0 0.0
        %4411 = vmatpush1.msra.mxu0 %v3384
        %4412 = vmatprep.subr.mxu0 0.0
        %4413 = vmatpush1.msra.mxu0 %v3385
        %4414 = vmatprep.subr.mxu0 0.0
        %4415 = vmatpush1.msra.mxu0 %v3386
        %4416 = vmatprep.subr.mxu0 0.0
        %4417 = vmatpush1.msra.mxu0 %v3387
        %4418 = vmatprep.subr.mxu0 0.0
        %4419 = vmatpush1.msra.mxu0 %v3388
        %4420 = vmatprep.subr.mxu0 0.0
        %4421 = vmatpush1.msra.mxu0 %v3389
        %4422 = vmatprep.subr.mxu0 0.0
        %4423 = vmatpush1.msra.mxu0 %v3390
        %4424 = vmatprep.subr.mxu0 0.0
        %4425 = vmatpush1.msra.mxu0 %v3391
        %4426 = vmatprep.subr.mxu0 0.0
        %4427 = vmatpush1.msra.mxu0 %v3392
        %4428 = vmatprep.subr.mxu0 0.0
        %4429 = vmatpush1.msra.mxu0 %v3393
        %4430 = vmatprep.subr.mxu0 0.0
        %4431 = vmatpush1.msra.mxu0 %v3394
        %4432 = vmatprep.subr.mxu0 0.0
        %4433 = vmatpush1.msra.mxu0 %v3395
        %4434 = vmatprep.mubr.f32.mxu0 %v2942
        %4435 = vmatmul.mubr.f32.gmra.mrb[0].mxu0 %v2941
        %v4436 = vpop.f32.mrb[0].mxu0
        %v4437 = vadd.f32 %v4367, %v4436
        %v4438 = vpop.f32.mrb[0].mxu0
        %4439 = vdwg.mxu0
        %4440 = vmatprep.subr.mxu0 0.0
        %4441 = vmatpush1.msra.mxu0 %v3396
        %4442 = vmatprep.subr.mxu0 0.0
        %4443 = vmatpush1.msra.mxu0 %v3397
        %4444 = vmatprep.subr.mxu0 0.0
        %4445 = vmatpush1.msra.mxu0 %v3398
        %4446 = vmatprep.subr.mxu0 0.0
        %4447 = vmatpush1.msra.mxu0 %v3399
        %4448 = vmatprep.subr.mxu0 0.0
        %4449 = vmatpush1.msra.mxu0 %v3400
        %4450 = vmatprep.subr.mxu0 0.0
        %4451 = vmatpush1.msra.mxu0 %v3401
        %4452 = vmatprep.subr.mxu0 0.0
        %4453 = vmatpush1.msra.mxu0 %v3402
        %4454 = vmatprep.subr.mxu0 0.0
        %4455 = vmatpush1.msra.mxu0 %v3403
        %4456 = vmatprep.subr.mxu0 0.0
        %4457 = vmatpush1.msra.mxu0 %v3404
        %4458 = vmatprep.subr.mxu0 0.0
        %4459 = vmatpush1.msra.mxu0 %v3405
        %4460 = vmatprep.subr.mxu0 0.0
        %4461 = vmatpush1.msra.mxu0 %v3406
        %4462 = vmatprep.subr.mxu0 0.0
        %4463 = vmatpush1.msra.mxu0 %v3407
        %4464 = vmatprep.subr.mxu0 0.0
        %4465 = vmatpush1.msra.mxu0 %v3408
        %4466 = vmatprep.subr.mxu0 0.0
        %4467 = vmatpush1.msra.mxu0 %v3409
        %4468 = vmatprep.subr.mxu0 0.0
        %4469 = vmatpush1.msra.mxu0 %v3410
        %4470 = vmatprep.subr.mxu0 0.0
        %4471 = vmatpush1.msra.mxu0 %v3411
        %4472 = vmatprep.subr.mxu0 0.0
        %4473 = vmatpush1.msra.mxu0 %v3412
        %4474 = vmatprep.subr.mxu0 0.0
        %4475 = vmatpush1.msra.mxu0 %v3413
        %4476 = vmatprep.subr.mxu0 0.0
        %4477 = vmatpush1.msra.mxu0 %v3414
        %4478 = vmatprep.subr.mxu0 0.0
        %4479 = vmatpush1.msra.mxu0 %v3415
        %4480 = vmatprep.subr.mxu0 0.0
        %4481 = vmatpush1.msra.mxu0 %v3416
        %4482 = vmatprep.subr.mxu0 0.0
        %4483 = vmatpush1.msra.mxu0 %v3417
        %4484 = vmatprep.subr.mxu0 0.0
        %4485 = vmatpush1.msra.mxu0 %v3418
        %4486 = vmatprep.subr.mxu0 0.0
        %4487 = vmatpush1.msra.mxu0 %v3419
        %4488 = vmatprep.subr.mxu0 0.0
        %4489 = vmatpush1.msra.mxu0 %v3420
        %4490 = vmatprep.subr.mxu0 0.0
        %4491 = vmatpush1.msra.mxu0 %v3421
        %4492 = vmatprep.subr.mxu0 0.0
        %4493 = vmatpush1.msra.mxu0 %v3422
        %4494 = vmatprep.subr.mxu0 0.0
        %4495 = vmatpush1.msra.mxu0 %v3423
        %4496 = vmatprep.subr.mxu0 0.0
        %4497 = vmatpush1.msra.mxu0 %v3424
        %4498 = vmatprep.subr.mxu0 0.0
        %4499 = vmatpush1.msra.mxu0 %v3425
        %4500 = vmatprep.subr.mxu0 0.0
        %4501 = vmatpush1.msra.mxu0 %v3426
        %4502 = vmatprep.subr.mxu0 0.0
        %4503 = vmatpush1.msra.mxu0 %v3427
        %4504 = vmatprep.mubr.f32.mxu0 %v2944
        %4505 = vmatmul.mubr.f32.gmra.mrb[0].mxu0 %v2943
        %v4506 = vpop.f32.mrb[0].mxu0
        %v4507 = vadd.f32 %v4437, %v4506
        %v4508 = vpop.f32.mrb[0].mxu0
        %4509 = vdwg.mxu0
        %4510 = vmatprep.subr.mxu0 0.0
        %4511 = vmatpush1.msra.mxu0 %v3428
        %4512 = vmatprep.subr.mxu0 0.0
        %4513 = vmatpush1.msra.mxu0 %v3429
        %4514 = vmatprep.subr.mxu0 0.0
        %4515 = vmatpush1.msra.mxu0 %v3430
        %4516 = vmatprep.subr.mxu0 0.0
        %4517 = vmatpush1.msra.mxu0 %v3431
        %4518 = vmatprep.subr.mxu0 0.0
        %4519 = vmatpush1.msra.mxu0 %v3432
        %4520 = vmatprep.subr.mxu0 0.0
        %4521 = vmatpush1.msra.mxu0 %v3433
        %4522 = vmatprep.subr.mxu0 0.0
        %4523 = vmatpush1.msra.mxu0 %v3434
        %4524 = vmatprep.subr.mxu0 0.0
        %4525 = vmatpush1.msra.mxu0 %v3435
        %4526 = vmatprep.subr.mxu0 0.0
        %4527 = vmatpush1.msra.mxu0 %v3436
        %4528 = vmatprep.subr.mxu0 0.0
        %4529 = vmatpush1.msra.mxu0 %v3437
        %4530 = vmatprep.subr.mxu0 0.0
        %4531 = vmatpush1.msra.mxu0 %v3438
        %4532 = vmatprep.subr.mxu0 0.0
        %4533 = vmatpush1.msra.mxu0 %v3439
        %4534 = vmatprep.subr.mxu0 0.0
        %4535 = vmatpush1.msra.mxu0 %v3440
        %4536 = vmatprep.subr.mxu0 0.0
        %4537 = vmatpush1.msra.mxu0 %v3441
        %4538 = vmatprep.subr.mxu0 0.0
        %4539 = vmatpush1.msra.mxu0 %v3442
        %4540 = vmatprep.subr.mxu0 0.0
        %4541 = vmatpush1.msra.mxu0 %v3443
        %4542 = vmatprep.subr.mxu0 0.0
        %4543 = vmatpush1.msra.mxu0 %v3444
        %4544 = vmatprep.subr.mxu0 0.0
        %4545 = vmatpush1.msra.mxu0 %v3445
        %4546 = vmatprep.subr.mxu0 0.0
        %4547 = vmatpush1.msra.mxu0 %v3446
        %4548 = vmatprep.subr.mxu0 0.0
        %4549 = vmatpush1.msra.mxu0 %v3447
        %4550 = vmatprep.subr.mxu0 0.0
        %4551 = vmatpush1.msra.mxu0 %v3448
        %4552 = vmatprep.subr.mxu0 0.0
        %4553 = vmatpush1.msra.mxu0 %v3449
        %4554 = vmatprep.subr.mxu0 0.0
        %4555 = vmatpush1.msra.mxu0 %v3450
        %4556 = vmatprep.subr.mxu0 0.0
        %4557 = vmatpush1.msra.mxu0 %v3451
        %4558 = vmatprep.subr.mxu0 0.0
        %4559 = vmatpush1.msra.mxu0 %v3452
        %4560 = vmatprep.subr.mxu0 0.0
        %4561 = vmatpush1.msra.mxu0 %v3453
        %4562 = vmatprep.subr.mxu0 0.0
        %4563 = vmatpush1.msra.mxu0 %v3454
        %4564 = vmatprep.subr.mxu0 0.0
        %4565 = vmatpush1.msra.mxu0 %v3455
        %4566 = vmatprep.subr.mxu0 0.0
        %4567 = vmatpush1.msra.mxu0 %v3456
        %4568 = vmatprep.subr.mxu0 0.0
        %4569 = vmatpush1.msra.mxu0 %v3457
        %4570 = vmatprep.subr.mxu0 0.0
        %4571 = vmatpush1.msra.mxu0 %v3458
        %4572 = vmatprep.subr.mxu0 0.0
        %4573 = vmatpush1.msra.mxu0 %v3459
        %4574 = vmatprep.mubr.f32.mxu0 %v2946
        %4575 = vmatmul.mubr.f32.gmra.mrb[0].mxu0 %v2945
        %v4576 = vpop.f32.mrb[0].mxu0
        %v4577 = vadd.f32 %v4507, %v4576
        %v4578 = vpop.f32.mrb[0].mxu0
        %4579 = vdwg.mxu0
        %v4580 = vadd.f32 %v2947, %v4577
        %vm4581 = vcmask 523264
        %4582 = vst.msk [vmem:[#allocation6] sm:$0xff] %vm4581, %v4580
        %p4583 = scmp.eq.s32.totalorder %s26, 1
        // Predicated region
        $region53: #{tpu_custom_call.1} parent=43 // pred_check
          %p4584 = pneg %p4583
        $region54: #{tpu_custom_call.1} parent=43 // pred_check_branch
          %4586 = sbr.rel (%p4584) target = $region56
        $region55: #{tpu_custom_call.1} parent=43 // pred_region
          %v4587 = vld [vmem:[#allocation6] sm:$0xff]
          %v4588 = vld [vmem:[%s5] sm:$0x1]
          %v4590 = vlaneseq
          %v4591 = vshrl.u32 %v4590, 7
          %v4592 = vsub.s32 0, %v4591
          %v4593 = vrot.slane %v4588, %v4592
          %v4595 = vadd.f32 %v4587, %v4593
          %v4596 = vtanh.pop %v4595
          %v4597 = vmul.f32 %v4596, %v4596
          %v4598 = vsel %vm4581, %v4597, 0.0
          %4599 = vadd.xlane.f32.xlu0 %v4598
          %v4600 = vpop.xlane.xlu0 %4599
          %v4601 = vrsqrt.pop %v4600
          %v4602 = vmul.f32 %v4600, %v4601
          %vm4603 = vcmp.eq.f32.partialorder %v4600, inf
          %v4604 = vsel %vm4603, %v4600, %v4602
          %vm4605 = vcmp.eq.f32.partialorder %v4600, 0.0
          %v4606 = vand.u32 %v4600, 2147483648
          %v4607 = vsel %vm4605, %v4606, %v4604
          %v4608 = vmax.f32 %v4607, 1e-12
          %v4609 = vrcp.pop %v4608
          %v4610 = vmul.f32 %v4596, %v4609
          %4611 = vst.msk [vmem:[#allocation6] sm:$0xff] %vm4581, %v4610
        $region56: #{tpu_custom_call.1} parent=43 // pred_fallthru
          _
        // Predicated region
        $region57: #{tpu_custom_call.1} parent=43 // pred_check
          %p4612 = pneg %p195
        $region58: #{tpu_custom_call.1} parent=43 // pred_check_branch
          %4614 = sbr.rel (%p4612) target = $region60
        $region59: #{tpu_custom_call.1} parent=43 // pred_region
          %s4616 = ssub.s32 128, 128
          %4617 = vsyncadd [#allocation5], %s4616
          %s4618 = smul.addr %s25, 128
          %s4619 = scalar_lea.hbm %s6, %s4618
          %s4621 = sshll.u32 [#allocation6], 4
          %s4622 = int_to_ptr.vmem [resolvable:$true] %s4621
          %4624 = dma.vmem_to_hbm [thread:$0]  %s4622, 128, %s4619, [#allocation5]
        $region60: #{tpu_custom_call.1} parent=43 // pred_fallthru
          _
        // Predicated region
        $region61: #{tpu_custom_call.1} parent=43 // pred_check
          %p4625 = pneg %p195
        $region62: #{tpu_custom_call.1} parent=43 // pred_check_branch
          %4627 = sbr.rel (%p4625) target = $region64
        $region63: #{tpu_custom_call.1} parent=43 // pred_region
          %4628 = dma.done [#allocation5], 128
        $region64: #{tpu_custom_call.1} parent=43 // pred_fallthru
          _
      $region44: #{tpu_custom_call.1} parent=5 // pred_fallthru
        _
      %p4629 = scmp.le.s32.totalorder 2, %s16
      // Predicated region
      $region65: #{tpu_custom_call.1} parent=5 // pred_check
        %p4630 = pneg %p4629
      $region66: #{tpu_custom_call.1} parent=5 // pred_check_branch
        %4632 = sbr.rel (%p4630) target = $region68
      $region67: #{tpu_custom_call.1} parent=5 // pred_region
        %s4633 = ssub.s32 %s16, 2
      $region68: #{tpu_custom_call.1} parent=5 // pred_fallthru
        _
    $region6: #{tpu_custom_call.1} parent=1 // loop_footer
      %s20 = sadd.s32 1, %s16
    $region7: #{tpu_custom_call.1} parent=1 // loop_footer_branch
      %15 = sbr.rel target = $region3
    $region8: #{tpu_custom_call.1} parent=1 // loop_exit
      _
    %4634 = vsyncpa [#allocation4], 1
    %s4635 = scalar_lea.sflag [#allocation4], 1
    %4636 = vsyncpa %s4635, 1
    %4637 = vsyncpa [#allocation5], 1
    %s4638 = scalar_lea.sflag [#allocation5], 1
    %4639 = vsyncpa %s4638, 1

</llo_original>
